<compile_context>
chip_gen: v7x
topology: tpu7x:2x2x1
jax: 0.10.0
libtpu: 0.0.40
codegen_flags: <defaults>
</compile_context>

<pallas_src>
import math
import functools

import jax
import jax.numpy as jnp
from jax.experimental import pallas as pl
from jax.experimental.pallas import tpu as pltpu

EPS = 1e-12


# ---------------------------------------------------------------------------
# Small utilities
# ---------------------------------------------------------------------------
def _round_up(x, m):
    return ((x + m - 1) // m) * m


def _zero_map(ndim):
    zeros = (0,) * ndim
    return lambda *_: zeros


@functools.lru_cache(maxsize=None)
def _vmem_limit_bytes():
    """Generation-aware VMEM cap: ~48 MiB on v7x (64 MiB phys), ~112 MiB on
    v5e/v6e (128 MiB phys).  Leaves headroom for compiler-internal scratch."""
    cap = 128 * 1024 * 1024
    try:
        cap = int(pltpu.get_tpu_info().vmem_capacity_bytes)
    except Exception:
        pass
    return int(max(32 * 1024 * 1024,
                   min(cap - 16 * 1024 * 1024, 112 * 1024 * 1024)))


def _probe_kernel(x_ref, o_ref):
    o_ref[...] = x_ref[...] + 1.0


@functools.lru_cache(maxsize=None)
def _single_buffer_supported():
    """Probe pl.Buffered(1) (single-buffered, grid-invariant operands).
    Falls back to default double-buffering if the installed Pallas rejects it."""
    try:
        out = pl.pallas_call(
            _probe_kernel,
            out_shape=jax.ShapeDtypeStruct((8, 128), jnp.float32),
            grid=(2, 2),
            in_specs=[pl.BlockSpec((8, 128), lambda i, j: (0, 0),
                                   pipeline_mode=pl.Buffered(1))],
            out_specs=pl.BlockSpec((8, 128), lambda i, j: (0, 0)),
        )(jnp.zeros((8, 128), jnp.float32))
        return bool(jnp.all(jax.block_until_ready(out) == 1.0))
    except Exception:
        return False


def _const_spec(shape):
    """BlockSpec for a grid-invariant operand (weights/biases): whole array,
    constant index map, single-buffered when supported."""
    if _single_buffer_supported():
        return pl.BlockSpec(shape, _zero_map(len(shape)),
                            pipeline_mode=pl.Buffered(1))
    return pl.BlockSpec(shape, _zero_map(len(shape)))


# ---------------------------------------------------------------------------
# In-kernel math helpers
# ---------------------------------------------------------------------------
def _layernorm(x, g, b):
    mu = jnp.mean(x, axis=-1, keepdims=True)
    var = jnp.mean((x - mu) ** 2, axis=-1, keepdims=True)
    return (x - mu) * jax.lax.rsqrt(var + EPS) * g + b


def _erf(x):
    # Abramowitz & Stegun 7.1.26 (max abs error ~1.5e-7, far below bf16 noise);
    # built only from ops guaranteed to lower in Mosaic (exp, mul/add, where).
    a1, a2, a3, a4, a5 = (0.254829592, -0.284496736, 1.421413741,
                          -1.453152027, 1.061405429)
    p = 0.3275911
    ax = jnp.abs(x)
    t = 1.0 / (1.0 + p * ax)
    poly = ((((a5 * t + a4) * t + a3) * t + a2) * t + a1) * t
    y = 1.0 - poly * jnp.exp(-ax * ax)
    return jnp.where(x >= 0, y, -y)


def _gelu_exact(x):
    # exact GELU (PyTorch nn.GELU default, erf-based)
    return 0.5 * x * (1.0 + _erf(x * (1.0 / math.sqrt(2.0))))


# ---------------------------------------------------------------------------
# Kernel 1: word_emb + pos_emb followed by the (shared) embedding LayerNorm.
# Output stored bf16 (halves inter-layer HBM traffic).
# ---------------------------------------------------------------------------
def embed_ln_kernel(we_ref, pe_ref, g_ref, b_ref, out_ref):
    x = we_ref[0] + pe_ref[...]                       # (S, H) f32
    out_ref[0] = _layernorm(x, g_ref[...], b_ref[...]).astype(jnp.bfloat16)


def embed_layernorm(word_emb, pos_emb, gamma, beta):
    B, S, H = word_emb.shape
    return pl.pallas_call(
        embed_ln_kernel,
        out_shape=jax.ShapeDtypeStruct((B, S, H), jnp.bfloat16),
        grid=(B,),
        in_specs=[pl.BlockSpec((1, S, H), lambda b: (b, 0, 0)),
                  _const_spec(pos_emb.shape),
                  _const_spec(gamma.shape),
                  _const_spec(beta.shape)],
        out_specs=pl.BlockSpec((1, S, H), lambda b: (b, 0, 0)),
        compiler_params=pltpu.CompilerParams(
            dimension_semantics=("parallel",),
            vmem_limit_bytes=_vmem_limit_bytes()),
    )(word_emb, pos_emb, gamma, beta)


# ---------------------------------------------------------------------------
# Kernel 2: one transformer encoder layer, grid = (B, S // TS)
#   - fused QKV projection once per batch item (si == 0) into head-major
#     VMEM scratch, reused by every query tile
#   - per query tile: head-batched attention + out-proj + LN + FFN + LN
# ---------------------------------------------------------------------------
def transformer_layer_kernel(x_ref, wqkv_ref, bqkv_ref, wo3_ref,
                             w1_ref, b1_ref, w2_ref, hvec_ref,
                             out_ref, q_scr, k_scr, v_scr,
                             *, num_heads, seq_tile):
    si = pl.program_id(1)
    S = x_ref.shape[1]
    H = x_ref.shape[2]
    dh = H // num_heads
    TS = seq_tile

    hv = hvec_ref[...]                                # (8, H) f32 packed vectors
    bo, b2 = hv[0:1], hv[1:2]
    ln1_g, ln1_b = hv[2:3], hv[3:4]
    ln2_g, ln2_b = hv[4:5], hv[5:6]

    # ---- once per batch item: fused QKV projection over the full sequence ----
    @pl.when(si == 0)
    def _():
        qkv = (jnp.dot(x_ref[0], wqkv_ref[...],
                       preferred_element_type=jnp.float32)
               + bqkv_ref[...]).astype(jnp.bfloat16)  # (S, 3H)
        for h in range(num_heads):                    # head-major scratch fill
            q_scr[h] = qkv[:, h * dh:(h + 1) * dh]
            k_scr[h] = qkv[:, H + h * dh:H + (h + 1) * dh]
            v_scr[h] = qkv[:, 2 * H + h * dh:2 * H + (h + 1) * dh]

    # ---- current query tile --------------------------------------------------
    row0 = pl.multiple_of(si * TS, TS)
    x_tile = x_ref[0, pl.ds(row0, TS), :].astype(jnp.float32)   # (TS, H)
    qh = q_scr[:, pl.ds(row0, TS), :]                           # (nh, TS, dh) bf16

    # scores (1/sqrt(dh) already folded into the Q projection by the wrapper)
    s = jnp.einsum('hqd,hkd->hqk', qh, k_scr[...],
                   preferred_element_type=jnp.float32)          # (nh, TS, S)
    s_max = jnp.max(s, axis=-1, keepdims=True)
    pexp = jnp.exp(s - s_max)
    denom = jnp.sum(pexp, axis=-1, keepdims=True)               # (nh, TS, 1)

    # un-normalized context, then rescale ctx (TS*dh mults instead of TS*S)
    ctx = jnp.einsum('hqk,hkd->hqd', pexp.astype(jnp.bfloat16), v_scr[...],
                     preferred_element_type=jnp.float32)        # (nh, TS, dh)
    ctx = ctx * pl.reciprocal(denom, approx=True)

    # output projection without a (nh,TS,dh)->(TS,H) relayout:
    # batched per-head matmul against wo reshaped (nh, dh, H), then sum heads
    attn = jnp.einsum('hqd,hdo->hqo', ctx.astype(jnp.bfloat16), wo3_ref[...],
                      preferred_element_type=jnp.float32)       # (nh, TS, H)
    attn = jnp.sum(attn, axis=0) + bo                           # (TS, H)

    x1 = _layernorm(x_tile + attn, ln1_g, ln1_b)

    hmid = _gelu_exact(
        jnp.dot(x1.astype(jnp.bfloat16), w1_ref[...],
                preferred_element_type=jnp.float32) + b1_ref[...])
    ffn = jnp.dot(hmid.astype(jnp.bfloat16), w2_ref[...],
                  preferred_element_type=jnp.float32) + b2
    out_ref[0] = _layernorm(x1 + ffn, ln2_g, ln2_b).astype(jnp.bfloat16)


def transformer_layer(x, p, *, num_heads, seq_tile=None):
    B, S, H = x.shape
    assert H % num_heads == 0
    dh = H // num_heads
    scale = 1.0 / math.sqrt(dh)

    if seq_tile is None:
        TS = S
        for cand in (256, 128, 64, 32, 16, 8):   # prefer 256 on v6e/v7x; 128 on v5e
            if S % cand == 0:
                TS = cand
                break
    else:
        TS = seq_tile
    assert S % TS == 0 and (TS % 8 == 0 or TS == S)

    # fold 1/sqrt(dh) into the Q projection; fuse Q/K/V weights into one matmul
    wq = (p["wq"].astype(jnp.float32) * scale).astype(jnp.bfloat16)
    wqkv = jnp.concatenate([wq, p["wk"], p["wv"]], axis=1)            # (H, 3H) bf16
    bqkv = jnp.concatenate([p["bq"] * scale, p["bk"], p["bv"]], axis=1)  # (1, 3H)
    wo3 = p["wo"].reshape(num_heads, dh, H)                           # (nh, dh, H)
    # pack the small (1,H) vectors into one operand (fewer tiny DMAs)
    hvec = jnp.concatenate([p["bo"], p["b2"], p["ln1_g"], p["ln1_b"],
                            p["ln2_g"], p["ln2_b"],
                            jnp.zeros((2, H), jnp.float32)], axis=0)  # (8, H)

    weights = [wqkv, bqkv, wo3, p["w1"], p["b1"], p["w2"], hvec]

    kernel = functools.partial(transformer_layer_kernel,
                               num_heads=num_heads, seq_tile=TS)

    return pl.pallas_call(
        kernel,
        out_shape=jax.ShapeDtypeStruct((B, S, H), jnp.bfloat16),
        grid=(B, S // TS),
        in_specs=[pl.BlockSpec((1, S, H), lambda b, s: (b, 0, 0))]
                 + [_const_spec(w.shape) for w in weights],
        out_specs=pl.BlockSpec((1, TS, H), lambda b, s: (b, s, 0)),   # FIXED
        scratch_shapes=[pltpu.VMEM((num_heads, S, dh), jnp.bfloat16),
                        pltpu.VMEM((num_heads, S, dh), jnp.bfloat16),
                        pltpu.VMEM((num_heads, S, dh), jnp.bfloat16)],
        compiler_params=pltpu.CompilerParams(
            dimension_semantics=("parallel", "arbitrary"),
            vmem_limit_bytes=_vmem_limit_bytes()),
    )(x, *weights)


# ---------------------------------------------------------------------------
# Kernel 3a: z = GELU(LN(h))  (hoisted out of the vocab matmul grid)
# Kernel 3b: logits = z @ Wm + bm, flattened rows, grid = (vocab, rows) so each
#            wm tile is DMA'd once total; both axes megacore-parallel.
# ---------------------------------------------------------------------------
def mlm_gelu_ln_kernel(x_ref, g_ref, b_ref, out_ref):
    x = x_ref[0].astype(jnp.float32)
    out_ref[0] = _gelu_exact(
        _layernorm(x, g_ref[...], b_ref[...])).astype(jnp.bfloat16)


def mlm_matmul_kernel(z_ref, wm_ref, bm_ref, out_ref, *, row_tile):
    mi = pl.program_id(1)
    r0 = pl.multiple_of(mi * row_tile, row_tile)
    z = z_ref[pl.ds(r0, row_tile), :]                            # (TM, H) bf16
    out_ref[...] = (jnp.dot(z, wm_ref[...],
                            preferred_element_type=jnp.float32) + bm_ref[...])


def mlm_head(x, gamma, beta, wm, bm, *, vocab_tile=2048, row_tile=512):
    B, S, H = x.shape
    V = wm.shape[1]
    M = B * S

    # z = GELU(LN(h)) once per token, stored bf16
    z = pl.pallas_call(
        mlm_gelu_ln_kernel,
        out_shape=jax.ShapeDtypeStruct((B, S, H), jnp.bfloat16),
        grid=(B,),
        in_specs=[pl.BlockSpec((1, S, H), lambda b: (b, 0, 0)),
                  _const_spec(gamma.shape),
                  _const_spec(beta.shape)],
        out_specs=pl.BlockSpec((1, S, H), lambda b: (b, 0, 0)),
        compiler_params=pltpu.CompilerParams(
            dimension_semantics=("parallel",),
            vmem_limit_bytes=_vmem_limit_bytes()),
    )(x, gamma, beta)

    z2 = z.reshape(M, H)
    TM = min(row_tile, _round_up(M, 8))
    Mp = _round_up(M, TM)
    if Mp != M:
        z2 = jnp.pad(z2, ((0, Mp - M), (0, 0)))

    TV = _round_up(min(vocab_tile, _round_up(V, 128)), 128)
    Vp = _round_up(V, TV)
    if Vp != V:
        # pad to lane-dense tiles; padded logits are sliced off below
        wm = jnp.pad(wm, ((0, 0), (0, Vp - V)))
        bm = jnp.pad(bm, ((0, 0), (0, Vp - V)))

    kernel = functools.partial(mlm_matmul_kernel, row_tile=TM)
    out = pl.pallas_call(
        kernel,
        out_shape=jax.ShapeDtypeStruct((Mp, Vp), jnp.float32),
        grid=(Vp // TV, Mp // TM),              # vocab OUTER -> wm tile DMA'd once
        in_specs=[_const_spec((Mp, H)),         # all rows resident in VMEM
                  pl.BlockSpec((H, TV), lambda v, m: (0, v)),
                  pl.BlockSpec((1, TV), lambda v, m: (0, v))],
        out_specs=pl.BlockSpec((TM, TV), lambda v, m: (m, v)),
        compiler_params=pltpu.CompilerParams(
            dimension_semantics=("parallel", "parallel"),
            vmem_limit_bytes=_vmem_limit_bytes()),
    )(z2, wm, bm)

    out = out[:M].reshape(B, S, Vp)
    if Vp != V:
        out = out[..., :V]
    return out
    # TODO(synk): for very large B*S, tile the z operand by rows instead of
    # keeping the whole (B*S, H) slab resident in VMEM.


# ---------------------------------------------------------------------------
# Model: parameter init + full forward
# ---------------------------------------------------------------------------
def init_params(key, *, vocab_size, hidden_size, num_layers, num_heads,
                intermediate_size, max_position_embeddings):
    H, I, V = hidden_size, intermediate_size, vocab_size

    def normal(k, shape, dtype=jnp.float32):
        return (0.02 * jax.random.normal(k, shape)).astype(dtype)

    keys = jax.random.split(key, 3 + 6 * num_layers)
    ki = iter(keys)

    params = {
        "word_emb": normal(next(ki), (V, H)),
        "pos_emb": normal(next(ki), (max_position_embeddings, H)),
        # shared LayerNorm (embedding LN and MLM-head LN are the SAME module)
        "ln_g": jnp.ones((1, H), jnp.float32),
        "ln_b": jnp.zeros((1, H), jnp.float32),
        "mlm_w": normal(next(ki), (H, V), jnp.bfloat16),
        "mlm_b": jnp.zeros((1, V), jnp.float32),
        "layers": [],
    }
    for _ in range(num_layers):
        lp = {
            "wq": normal(next(ki), (H, H), jnp.bfloat16),
            "bq": jnp.zeros((1, H), jnp.float32),
            "wk": normal(next(ki), (H, H), jnp.bfloat16),
            "bk": jnp.zeros((1, H), jnp.float32),
            "wv": normal(next(ki), (H, H), jnp.bfloat16),
            "bv": jnp.zeros((1, H), jnp.float32),
            "wo": normal(next(ki), (H, H), jnp.bfloat16),
            "bo": jnp.zeros((1, H), jnp.float32),
            "ln1_g": jnp.ones((1, H), jnp.float32),
            "ln1_b": jnp.zeros((1, H), jnp.float32),
            "w1": normal(next(ki), (H, I), jnp.bfloat16),
            "b1": jnp.zeros((1, I), jnp.float32),
            "w2": normal(next(ki), (I, H), jnp.bfloat16),
            "b2": jnp.zeros((1, H), jnp.float32),
            "ln2_g": jnp.ones((1, H), jnp.float32),
            "ln2_b": jnp.zeros((1, H), jnp.float32),
        }
        params["layers"].append(lp)
    return params


def distilbert_mlm_forward(params, input_ids, *, num_heads,
                           seq_tile=None, vocab_tile=2048, row_tile=512):
    B, S = input_ids.shape
    # Embedding gathers are glue (plain JAX); everything else is in Pallas.
    word_emb = jnp.take(params["word_emb"], input_ids, axis=0)   # (B, S, H) f32
    pos_emb = params["pos_emb"][:S]                              # (S, H) f32

    h = embed_layernorm(word_emb, pos_emb, params["ln_g"], params["ln_b"])
    # dropout -> identity (deterministic forward)

    for lp in params["layers"]:
        h = transformer_layer(h, lp, num_heads=num_heads, seq_tile=seq_tile)

    return mlm_head(h, params["ln_g"], params["ln_b"],
                    params["mlm_w"], params["mlm_b"],
                    vocab_tile=vocab_tile, row_tile=row_tile)


# ---------------------------------------------------------------------------
if __name__ == "__main__":
    # small, forward-consistent shapes (chosen to exercise seq / row / vocab tiling)
    VOCAB, HIDDEN, LAYERS, HEADS, INTER, MAXPOS = 512, 128, 2, 4, 256, 64
    BATCH, SEQ = 2, 32

    key = jax.random.PRNGKey(0)
    k_params, k_ids = jax.random.split(key)

    params = init_params(k_params,
                         vocab_size=VOCAB, hidden_size=HIDDEN,
                         num_layers=LAYERS, num_heads=HEADS,
                         intermediate_size=INTER,
                         max_position_embeddings=MAXPOS)

    input_ids = jax.random.randint(k_ids, (BATCH, SEQ), 0, VOCAB, dtype=jnp.int32)

    fwd = jax.jit(functools.partial(distilbert_mlm_forward,
                                    num_heads=HEADS,
                                    seq_tile=16,       # 2 seq tiles per batch item
                                    vocab_tile=256,    # 2 vocab tiles
                                    row_tile=32))      # 2 row tiles in the MLM head
    logits = fwd(params, input_ids)
    logits = jax.block_until_ready(logits)

    assert logits.shape == (BATCH, SEQ, VOCAB), logits.shape
    assert bool(jnp.all(jnp.isfinite(logits)))
    print("KERNEL_OK")
</pallas_src>

<mosaic_0001>
module attributes {stable_mosaic.version = 11 : i64} {
  func.func @embed_ln_kernel(%arg0: i32, %arg1: memref<1x32x128xf32, #tpu.memory_space<vmem>>, %arg2: memref<32x128xf32, #tpu.memory_space<vmem>>, %arg3: memref<1x128xf32, #tpu.memory_space<vmem>>, %arg4: memref<1x128xf32, #tpu.memory_space<vmem>>, %arg5: memref<1x32x128xbf16, #tpu.memory_space<vmem>>) attributes {dimension_semantics = [#tpu.dimension_semantics<parallel>], iteration_bounds = array<i64: 2>, scalar_prefetch = 0 : i64, scratch_operands = 0 : i64, tpu.core_type = #tpu.core_type<tc>, window_params = [{transform_indices = @transform_0, window_bounds = array<i64: 1, 32, 128>}, {pipeline_mode = #tpu.pipeline_mode<synchronous>, transform_indices = @transform_1, window_bounds = array<i64: 32, 128>}, {pipeline_mode = #tpu.pipeline_mode<synchronous>, transform_indices = @transform_2, window_bounds = array<i64: 1, 128>}, {pipeline_mode = #tpu.pipeline_mode<synchronous>, transform_indices = @transform_3, window_bounds = array<i64: 1, 128>}, {transform_indices = @transform_4, window_bounds = array<i64: 1, 32, 128>}]} {
    %c0 = arith.constant 0 : index
    %c0_0 = arith.constant 0 : index
    %c0_1 = arith.constant 0 : index
    %0 = vector.load %arg1[%c0, %c0_0, %c0_1] : memref<1x32x128xf32, #tpu.memory_space<vmem>>, vector<1x32x128xf32>
    %1 = vector.shape_cast %0 : vector<1x32x128xf32> to vector<32x128xf32>
    %c0_2 = arith.constant 0 : index
    %c0_3 = arith.constant 0 : index
    %2 = vector.load %arg2[%c0_2, %c0_3] : memref<32x128xf32, #tpu.memory_space<vmem>>, vector<32x128xf32>
    %3 = arith.addf %1, %2 : vector<32x128xf32>
    %c0_4 = arith.constant 0 : index
    %c0_5 = arith.constant 0 : index
    %4 = vector.load %arg3[%c0_4, %c0_5] : memref<1x128xf32, #tpu.memory_space<vmem>>, vector<1x128xf32>
    %c0_6 = arith.constant 0 : index
    %c0_7 = arith.constant 0 : index
    %5 = vector.load %arg4[%c0_6, %c0_7] : memref<1x128xf32, #tpu.memory_space<vmem>>, vector<1x128xf32>
    %cst = arith.constant dense<0.000000e+00> : vector<32xf32>
    %6 = vector.multi_reduction <add>, %3, %cst [1] : vector<32x128xf32> to vector<32xf32>
    %7 = vector.shape_cast %6 : vector<32xf32> to vector<32x1xf32>
    %cst_8 = arith.constant 1.280000e+02 : f32
    %8 = vector.broadcast %cst_8 : f32 to vector<32x1xf32>
    %9 = arith.divf %7, %8 : vector<32x1xf32>
    %10 = vector.broadcast %9 : vector<32x1xf32> to vector<32x128xf32>
    %11 = arith.subf %3, %10 : vector<32x128xf32>
    %12 = arith.mulf %11, %11 : vector<32x128xf32>
    %cst_9 = arith.constant dense<0.000000e+00> : vector<32xf32>
    %13 = vector.multi_reduction <add>, %12, %cst_9 [1] : vector<32x128xf32> to vector<32xf32>
    %14 = vector.shape_cast %13 : vector<32xf32> to vector<32x1xf32>
    %cst_10 = arith.constant 1.280000e+02 : f32
    %15 = vector.broadcast %cst_10 : f32 to vector<32x1xf32>
    %16 = arith.divf %14, %15 : vector<32x1xf32>
    %17 = vector.broadcast %9 : vector<32x1xf32> to vector<32x128xf32>
    %18 = arith.subf %3, %17 : vector<32x128xf32>
    %cst_11 = arith.constant 9.99999996E-13 : f32
    %19 = vector.broadcast %cst_11 : f32 to vector<32x1xf32>
    %20 = arith.addf %16, %19 : vector<32x1xf32>
    %21 = math.rsqrt %20 : vector<32x1xf32>
    %22 = vector.broadcast %21 : vector<32x1xf32> to vector<32x128xf32>
    %23 = arith.mulf %18, %22 : vector<32x128xf32>
    %24 = vector.broadcast %4 : vector<1x128xf32> to vector<32x128xf32>
    %25 = arith.mulf %23, %24 : vector<32x128xf32>
    %26 = vector.broadcast %5 : vector<1x128xf32> to vector<32x128xf32>
    %27 = arith.addf %25, %26 : vector<32x128xf32>
    %28 = arith.truncf %27 : vector<32x128xf32> to vector<32x128xbf16>
    %c0_12 = arith.constant 0 : index
    %c0_13 = arith.constant 0 : index
    %c0_14 = arith.constant 0 : index
    %29 = vector.load %arg5[%c0_12, %c0_13, %c0_14] : memref<1x32x128xbf16, #tpu.memory_space<vmem>>, vector<1x32x128xbf16>
    %30 = vector.shape_cast %29 : vector<1x32x128xbf16> to vector<32x128xbf16>
    %31 = vector.shape_cast %28 : vector<32x128xbf16> to vector<1x32x128xbf16>
    tpu.vector_store %arg5[%c0_12, %c0_13, %c0_14], %31 {strides = array<i32>} : memref<1x32x128xbf16, #tpu.memory_space<vmem>>, vector<1x32x128xbf16>,
    return
  }
  func.func @transform_0(%arg0: i32) -> (i32, i32, i32) {
    %c0_i32 = arith.constant 0 : i32
    %c0_i32_0 = arith.constant 0 : i32
    %c0_i32_1 = arith.constant 0 : i32
    return %arg0, %c0_i32, %c0_i32_0 : i32, i32, i32
  }
  func.func @transform_1(%arg0: i32) -> (i32, i32) {
    %c0_i32 = arith.constant 0 : i32
    %c0_i32_0 = arith.constant 0 : i32
    %c0_i32_1 = arith.constant 0 : i32
    return %c0_i32, %c0_i32_0 : i32, i32
  }
  func.func @transform_2(%arg0: i32) -> (i32, i32) {
    %c0_i32 = arith.constant 0 : i32
    %c0_i32_0 = arith.constant 0 : i32
    %c0_i32_1 = arith.constant 0 : i32
    return %c0_i32, %c0_i32_0 : i32, i32
  }
  func.func @transform_3(%arg0: i32) -> (i32, i32) {
    %c0_i32 = arith.constant 0 : i32
    %c0_i32_0 = arith.constant 0 : i32
    %c0_i32_1 = arith.constant 0 : i32
    return %c0_i32, %c0_i32_0 : i32, i32
  }
  func.func @transform_4(%arg0: i32) -> (i32, i32, i32) {
    %c0_i32 = arith.constant 0 : i32
    %c0_i32_0 = arith.constant 0 : i32
    %c0_i32_1 = arith.constant 0 : i32
    return %arg0, %c0_i32, %c0_i32_0 : i32, i32, i32
  }
}

module attributes {stable_mosaic.version = 11 : i64} {
  func.func @mlm_gelu_ln_kernel(%arg0: i32, %arg1: memref<1x32x128xbf16, #tpu.memory_space<vmem>>, %arg2: memref<1x128xf32, #tpu.memory_space<vmem>>, %arg3: memref<1x128xf32, #tpu.memory_space<vmem>>, %arg4: memref<1x32x128xbf16, #tpu.memory_space<vmem>>) attributes {dimension_semantics = [#tpu.dimension_semantics<parallel>], iteration_bounds = array<i64: 2>, scalar_prefetch = 0 : i64, scratch_operands = 0 : i64, tpu.core_type = #tpu.core_type<tc>, window_params = [{transform_indices = @transform_0, window_bounds = array<i64: 1, 32, 128>}, {pipeline_mode = #tpu.pipeline_mode<synchronous>, transform_indices = @transform_1, window_bounds = array<i64: 1, 128>}, {pipeline_mode = #tpu.pipeline_mode<synchronous>, transform_indices = @transform_2, window_bounds = array<i64: 1, 128>}, {transform_indices = @transform_3, window_bounds = array<i64: 1, 32, 128>}]} {
    %c0 = arith.constant 0 : index
    %c0_0 = arith.constant 0 : index
    %c0_1 = arith.constant 0 : index
    %0 = vector.load %arg1[%c0, %c0_0, %c0_1] : memref<1x32x128xbf16, #tpu.memory_space<vmem>>, vector<1x32x128xbf16>
    %1 = vector.shape_cast %0 : vector<1x32x128xbf16> to vector<32x128xbf16>
    %2 = arith.extf %1 : vector<32x128xbf16> to vector<32x128xf32>
    %c0_2 = arith.constant 0 : index
    %c0_3 = arith.constant 0 : index
    %3 = vector.load %arg2[%c0_2, %c0_3] : memref<1x128xf32, #tpu.memory_space<vmem>>, vector<1x128xf32>
    %c0_4 = arith.constant 0 : index
    %c0_5 = arith.constant 0 : index
    %4 = vector.load %arg3[%c0_4, %c0_5] : memref<1x128xf32, #tpu.memory_space<vmem>>, vector<1x128xf32>
    %cst = arith.constant dense<0.000000e+00> : vector<32xf32>
    %5 = vector.multi_reduction <add>, %2, %cst [1] : vector<32x128xf32> to vector<32xf32>
    %6 = vector.shape_cast %5 : vector<32xf32> to vector<32x1xf32>
    %cst_6 = arith.constant 1.280000e+02 : f32
    %7 = vector.broadcast %cst_6 : f32 to vector<32x1xf32>
    %8 = arith.divf %6, %7 : vector<32x1xf32>
    %9 = vector.broadcast %8 : vector<32x1xf32> to vector<32x128xf32>
    %10 = arith.subf %2, %9 : vector<32x128xf32>
    %11 = arith.mulf %10, %10 : vector<32x128xf32>
    %cst_7 = arith.constant dense<0.000000e+00> : vector<32xf32>
    %12 = vector.multi_reduction <add>, %11, %cst_7 [1] : vector<32x128xf32> to vector<32xf32>
    %13 = vector.shape_cast %12 : vector<32xf32> to vector<32x1xf32>
    %cst_8 = arith.constant 1.280000e+02 : f32
    %14 = vector.broadcast %cst_8 : f32 to vector<32x1xf32>
    %15 = arith.divf %13, %14 : vector<32x1xf32>
    %16 = vector.broadcast %8 : vector<32x1xf32> to vector<32x128xf32>
    %17 = arith.subf %2, %16 : vector<32x128xf32>
    %cst_9 = arith.constant 9.99999996E-13 : f32
    %18 = vector.broadcast %cst_9 : f32 to vector<32x1xf32>
    %19 = arith.addf %15, %18 : vector<32x1xf32>
    %20 = math.rsqrt %19 : vector<32x1xf32>
    %21 = vector.broadcast %20 : vector<32x1xf32> to vector<32x128xf32>
    %22 = arith.mulf %17, %21 : vector<32x128xf32>
    %23 = vector.broadcast %3 : vector<1x128xf32> to vector<32x128xf32>
    %24 = arith.mulf %22, %23 : vector<32x128xf32>
    %25 = vector.broadcast %4 : vector<1x128xf32> to vector<32x128xf32>
    %26 = arith.addf %24, %25 : vector<32x128xf32>
    %cst_10 = arith.constant 5.000000e-01 : f32
    %27 = vector.broadcast %cst_10 : f32 to vector<32x128xf32>
    %28 = arith.mulf %27, %26 : vector<32x128xf32>
    %cst_11 = arith.constant 0.707106769 : f32
    %29 = vector.broadcast %cst_11 : f32 to vector<32x128xf32>
    %30 = arith.mulf %26, %29 : vector<32x128xf32>
    %31 = math.absf %30 : vector<32x128xf32>
    %cst_12 = arith.constant 0.327591091 : f32
    %32 = vector.broadcast %cst_12 : f32 to vector<32x128xf32>
    %33 = arith.mulf %32, %31 : vector<32x128xf32>
    %cst_13 = arith.constant 1.000000e+00 : f32
    %34 = vector.broadcast %cst_13 : f32 to vector<32x128xf32>
    %35 = arith.addf %34, %33 : vector<32x128xf32>
    %cst_14 = arith.constant 1.000000e+00 : f32
    %36 = vector.broadcast %cst_14 : f32 to vector<32x128xf32>
    %37 = arith.divf %36, %35 : vector<32x128xf32>
    %cst_15 = arith.constant 1.06140542 : f32
    %38 = vector.broadcast %cst_15 : f32 to vector<32x128xf32>
    %39 = arith.mulf %38, %37 : vector<32x128xf32>
    %cst_16 = arith.constant -1.45315206 : f32
    %40 = vector.broadcast %cst_16 : f32 to vector<32x128xf32>
    %41 = arith.addf %39, %40 : vector<32x128xf32>
    %42 = arith.mulf %41, %37 : vector<32x128xf32>
    %cst_17 = arith.constant 1.42141378 : f32
    %43 = vector.broadcast %cst_17 : f32 to vector<32x128xf32>
    %44 = arith.addf %42, %43 : vector<32x128xf32>
    %45 = arith.mulf %44, %37 : vector<32x128xf32>
    %cst_18 = arith.constant -0.284496725 : f32
    %46 = vector.broadcast %cst_18 : f32 to vector<32x128xf32>
    %47 = arith.addf %45, %46 : vector<32x128xf32>
    %48 = arith.mulf %47, %37 : vector<32x128xf32>
    %cst_19 = arith.constant 0.254829586 : f32
    %49 = vector.broadcast %cst_19 : f32 to vector<32x128xf32>
    %50 = arith.addf %48, %49 : vector<32x128xf32>
    %51 = arith.mulf %50, %37 : vector<32x128xf32>
    %cst_20 = arith.constant 0.000000e+00 : f32
    %52 = vector.broadcast %cst_20 : f32 to vector<32x128xf32>
    %53 = arith.subf %52, %31 : vector<32x128xf32>
    %54 = arith.mulf %53, %31 : vector<32x128xf32>
    %55 = math.exp %54 : vector<32x128xf32>
    %56 = arith.mulf %51, %55 : vector<32x128xf32>
    %cst_21 = arith.constant 1.000000e+00 : f32
    %57 = vector.broadcast %cst_21 : f32 to vector<32x128xf32>
    %58 = arith.subf %57, %56 : vector<32x128xf32>
    %cst_22 = arith.constant 0.000000e+00 : f32
    %59 = vector.broadcast %cst_22 : f32 to vector<32x128xf32>
    %60 = arith.cmpf oge, %30, %59 : vector<32x128xf32>
    %cst_23 = arith.constant 0.000000e+00 : f32
    %61 = vector.broadcast %cst_23 : f32 to vector<32x128xf32>
    %62 = arith.subf %61, %58 : vector<32x128xf32>
    %63 = arith.select %60, %58, %62 : vector<32x128xi1>, vector<32x128xf32>
    %cst_24 = arith.constant 1.000000e+00 : f32
    %64 = vector.broadcast %cst_24 : f32 to vector<32x128xf32>
    %65 = arith.addf %64, %63 : vector<32x128xf32>
    %66 = arith.mulf %28, %65 : vector<32x128xf32>
    %67 = arith.truncf %66 : vector<32x128xf32> to vector<32x128xbf16>
    %c0_25 = arith.constant 0 : index
    %c0_26 = arith.constant 0 : index
    %c0_27 = arith.constant 0 : index
    %68 = vector.load %arg4[%c0_25, %c0_26, %c0_27] : memref<1x32x128xbf16, #tpu.memory_space<vmem>>, vector<1x32x128xbf16>
    %69 = vector.shape_cast %68 : vector<1x32x128xbf16> to vector<32x128xbf16>
    %70 = vector.shape_cast %67 : vector<32x128xbf16> to vector<1x32x128xbf16>
    tpu.vector_store %arg4[%c0_25, %c0_26, %c0_27], %70 {strides = array<i32>} : memref<1x32x128xbf16, #tpu.memory_space<vmem>>, vector<1x32x128xbf16>,
    return
  }
  func.func @transform_0(%arg0: i32) -> (i32, i32, i32) {
    %c0_i32 = arith.constant 0 : i32
    %c0_i32_0 = arith.constant 0 : i32
    %c0_i32_1 = arith.constant 0 : i32
    return %arg0, %c0_i32, %c0_i32_0 : i32, i32, i32
  }
  func.func @transform_1(%arg0: i32) -> (i32, i32) {
    %c0_i32 = arith.constant 0 : i32
    %c0_i32_0 = arith.constant 0 : i32
    %c0_i32_1 = arith.constant 0 : i32
    return %c0_i32, %c0_i32_0 : i32, i32
  }
  func.func @transform_2(%arg0: i32) -> (i32, i32) {
    %c0_i32 = arith.constant 0 : i32
    %c0_i32_0 = arith.constant 0 : i32
    %c0_i32_1 = arith.constant 0 : i32
    return %c0_i32, %c0_i32_0 : i32, i32
  }
  func.func @transform_3(%arg0: i32) -> (i32, i32, i32) {
    %c0_i32 = arith.constant 0 : i32
    %c0_i32_0 = arith.constant 0 : i32
    %c0_i32_1 = arith.constant 0 : i32
    return %arg0, %c0_i32, %c0_i32_0 : i32, i32, i32
  }
}

module attributes {stable_mosaic.version = 11 : i64} {
  func.func @mlm_matmul_kernel(%arg0: i32, %arg1: i32, %arg2: memref<64x128xbf16, #tpu.memory_space<vmem>>, %arg3: memref<128x256xbf16, #tpu.memory_space<vmem>>, %arg4: memref<1x256xf32, #tpu.memory_space<vmem>>, %arg5: memref<32x256xf32, #tpu.memory_space<vmem>>) attributes {dimension_semantics = [#tpu.dimension_semantics<parallel>, #tpu.dimension_semantics<parallel>], iteration_bounds = array<i64: 2, 2>, scalar_prefetch = 0 : i64, scratch_operands = 0 : i64, tpu.core_type = #tpu.core_type<tc>, window_params = [{pipeline_mode = #tpu.pipeline_mode<synchronous>, transform_indices = @transform_0, window_bounds = array<i64: 64, 128>}, {transform_indices = @transform_1, window_bounds = array<i64: 128, 256>}, {transform_indices = @transform_2, window_bounds = array<i64: 1, 256>}, {transform_indices = @transform_3, window_bounds = array<i64: 32, 256>}]} {
    %c32_i32 = arith.constant 32 : i32
    %0 = arith.muli %arg1, %c32_i32 : i32
    %1 = tpu.assume_multiple %0, 32 : i32
    %2 = arith.index_cast %1 : i32 to index
    %c0 = arith.constant 0 : index
    %3 = vector.load %arg2[%2, %c0] : memref<64x128xbf16, #tpu.memory_space<vmem>>, vector<32x128xbf16>
    %c0_0 = arith.constant 0 : index
    %c0_1 = arith.constant 0 : index
    %4 = vector.load %arg3[%c0_0, %c0_1] : memref<128x256xbf16, #tpu.memory_space<vmem>>, vector<128x256xbf16>
    %cst = arith.constant dense<0.000000e+00> : vector<32x256xf32>
    %5 = tpu.matmul %3, %4, %cst {dimension_numbers = #tpu.dot_dimension_numbers<[1], [0], [0], [1], [0, 0, 1, 1], [], []>} : vector<32x128xbf16>, vector<128x256xbf16>, vector<32x256xf32> -> vector<32x256xf32>
    %c0_2 = arith.constant 0 : index
    %c0_3 = arith.constant 0 : index
    %6 = vector.load %arg4[%c0_2, %c0_3] : memref<1x256xf32, #tpu.memory_space<vmem>>, vector<1x256xf32>
    %7 = vector.broadcast %6 : vector<1x256xf32> to vector<32x256xf32>
    %8 = arith.addf %5, %7 : vector<32x256xf32>
    %c0_4 = arith.constant 0 : index
    %c0_5 = arith.constant 0 : index
    %9 = vector.load %arg5[%c0_4, %c0_5] : memref<32x256xf32, #tpu.memory_space<vmem>>, vector<32x256xf32>
    tpu.vector_store %arg5[%c0_4, %c0_5], %8 {strides = array<i32>} : memref<32x256xf32, #tpu.memory_space<vmem>>, vector<32x256xf32>,
    return
  }
  func.func @transform_0(%arg0: i32, %arg1: i32) -> (i32, i32) {
    %c0_i32 = arith.constant 0 : i32
    %c0_i32_0 = arith.constant 0 : i32
    %c0_i32_1 = arith.constant 0 : i32
    return %c0_i32, %c0_i32_0 : i32, i32
  }
  func.func @transform_1(%arg0: i32, %arg1: i32) -> (i32, i32) {
    %c0_i32 = arith.constant 0 : i32
    %c0_i32_0 = arith.constant 0 : i32
    return %c0_i32, %arg0 : i32, i32
  }
  func.func @transform_2(%arg0: i32, %arg1: i32) -> (i32, i32) {
    %c0_i32 = arith.constant 0 : i32
    %c0_i32_0 = arith.constant 0 : i32
    return %c0_i32, %arg0 : i32, i32
  }
  func.func @transform_3(%arg0: i32, %arg1: i32) -> (i32, i32) {
    %c0_i32 = arith.constant 0 : i32
    return %arg1, %arg0 : i32, i32
  }
}

module attributes {stable_mosaic.version = 11 : i64} {
  func.func @transformer_layer_kernel(%arg0: i32, %arg1: i32, %arg2: memref<1x32x128xbf16, #tpu.memory_space<vmem>>, %arg3: memref<128x384xbf16, #tpu.memory_space<vmem>>, %arg4: memref<1x384xf32, #tpu.memory_space<vmem>>, %arg5: memref<4x32x128xbf16, #tpu.memory_space<vmem>>, %arg6: memref<128x256xbf16, #tpu.memory_space<vmem>>, %arg7: memref<1x256xf32, #tpu.memory_space<vmem>>, %arg8: memref<256x128xbf16, #tpu.memory_space<vmem>>, %arg9: memref<8x128xf32, #tpu.memory_space<vmem>>, %arg10: memref<1x16x128xbf16, #tpu.memory_space<vmem>>, %arg11: memref<4x32x32xbf16, #tpu.memory_space<vmem>>, %arg12: memref<4x32x32xbf16, #tpu.memory_space<vmem>>, %arg13: memref<4x32x32xbf16, #tpu.memory_space<vmem>>) attributes {dimension_semantics = [#tpu.dimension_semantics<parallel>, #tpu.dimension_semantics<arbitrary>], iteration_bounds = array<i64: 2, 2>, scalar_prefetch = 0 : i64, scratch_operands = 3 : i64, tpu.core_type = #tpu.core_type<tc>, window_params = [{transform_indices = @transform_0, window_bounds = array<i64: 1, 32, 128>}, {pipeline_mode = #tpu.pipeline_mode<synchronous>, transform_indices = @transform_1, window_bounds = array<i64: 128, 384>}, {pipeline_mode = #tpu.pipeline_mode<synchronous>, transform_indices = @transform_2, window_bounds = array<i64: 1, 384>}, {pipeline_mode = #tpu.pipeline_mode<synchronous>, transform_indices = @transform_3, window_bounds = array<i64: 4, 32, 128>}, {pipeline_mode = #tpu.pipeline_mode<synchronous>, transform_indices = @transform_4, window_bounds = array<i64: 128, 256>}, {pipeline_mode = #tpu.pipeline_mode<synchronous>, transform_indices = @transform_5, window_bounds = array<i64: 1, 256>}, {pipeline_mode = #tpu.pipeline_mode<synchronous>, transform_indices = @transform_6, window_bounds = array<i64: 256, 128>}, {pipeline_mode = #tpu.pipeline_mode<synchronous>, transform_indices = @transform_7, window_bounds = array<i64: 8, 128>}, {transform_indices = @transform_8, window_bounds = array<i64: 1, 16, 128>}]} {
    %c0 = arith.constant 0 : index
    %c0_0 = arith.constant 0 : index
    %0 = vector.load %arg9[%c0, %c0_0] : memref<8x128xf32, #tpu.memory_space<vmem>>, vector<8x128xf32>
    %1 = vector.extract_strided_slice %0 {offsets = [0, 0], sizes = [1, 128], strides = [1, 1]} : vector<8x128xf32> to vector<1x128xf32>
    %2 = vector.extract_strided_slice %0 {offsets = [1, 0], sizes = [1, 128], strides = [1, 1]} : vector<8x128xf32> to vector<1x128xf32>
    %3 = vector.extract_strided_slice %0 {offsets = [2, 0], sizes = [1, 128], strides = [1, 1]} : vector<8x128xf32> to vector<1x128xf32>
    %4 = vector.extract_strided_slice %0 {offsets = [3, 0], sizes = [1, 128], strides = [1, 1]} : vector<8x128xf32> to vector<1x128xf32>
    %5 = vector.extract_strided_slice %0 {offsets = [4, 0], sizes = [1, 128], strides = [1, 1]} : vector<8x128xf32> to vector<1x128xf32>
    %6 = vector.extract_strided_slice %0 {offsets = [5, 0], sizes = [1, 128], strides = [1, 1]} : vector<8x128xf32> to vector<1x128xf32>
    %c0_i32 = arith.constant 0 : i32
    %7 = arith.cmpi eq, %arg1, %c0_i32 : i32
    %8 = arith.extui %7 : i1 to i32
    %c0_i32_1 = arith.constant 0 : i32
    %9 = arith.cmpi ne, %8, %c0_i32_1 : i32
    scf.if %9 {
      %c0_56 = arith.constant 0 : index
      %c0_57 = arith.constant 0 : index
      %c0_58 = arith.constant 0 : index
      %140 = vector.load %arg2[%c0_56, %c0_57, %c0_58] : memref<1x32x128xbf16, #tpu.memory_space<vmem>>, vector<1x32x128xbf16>
      %141 = vector.shape_cast %140 : vector<1x32x128xbf16> to vector<32x128xbf16>
      %c0_59 = arith.constant 0 : index
      %c0_60 = arith.constant 0 : index
      %142 = vector.load %arg3[%c0_59, %c0_60] : memref<128x384xbf16, #tpu.memory_space<vmem>>, vector<128x384xbf16>
      %cst_61 = arith.constant dense<0.000000e+00> : vector<32x384xf32>
      %143 = tpu.matmul %141, %142, %cst_61 {dimension_numbers = #tpu.dot_dimension_numbers<[1], [0], [0], [1], [0, 0, 1, 1], [], []>} : vector<32x128xbf16>, vector<128x384xbf16>, vector<32x384xf32> -> vector<32x384xf32>
      %c0_62 = arith.constant 0 : index
      %c0_63 = arith.constant 0 : index
      %144 = vector.load %arg4[%c0_62, %c0_63] : memref<1x384xf32, #tpu.memory_space<vmem>>, vector<1x384xf32>
      %145 = vector.broadcast %144 : vector<1x384xf32> to vector<32x384xf32>
      %146 = arith.addf %143, %145 : vector<32x384xf32>
      %147 = arith.truncf %146 : vector<32x384xf32> to vector<32x384xbf16>
      %148 = vector.extract_strided_slice %147 {offsets = [0, 0], sizes = [32, 32], strides = [1, 1]} : vector<32x384xbf16> to vector<32x32xbf16>
      %c0_64 = arith.constant 0 : index
      %c0_65 = arith.constant 0 : index
      %c0_66 = arith.constant 0 : index
      %149 = vector.load %arg11[%c0_64, %c0_65, %c0_66] : memref<4x32x32xbf16, #tpu.memory_space<vmem>>, vector<1x32x32xbf16>
      %150 = vector.shape_cast %149 : vector<1x32x32xbf16> to vector<32x32xbf16>
      %151 = vector.shape_cast %148 : vector<32x32xbf16> to vector<1x32x32xbf16>
      tpu.vector_store %arg11[%c0_64, %c0_65, %c0_66], %151 {strides = array<i32>} : memref<4x32x32xbf16, #tpu.memory_space<vmem>>, vector<1x32x32xbf16>,
      %152 = vector.extract_strided_slice %147 {offsets = [0, 128], sizes = [32, 32], strides = [1, 1]} : vector<32x384xbf16> to vector<32x32xbf16>
      %c0_67 = arith.constant 0 : index
      %c0_68 = arith.constant 0 : index
      %c0_69 = arith.constant 0 : index
      %153 = vector.load %arg12[%c0_67, %c0_68, %c0_69] : memref<4x32x32xbf16, #tpu.memory_space<vmem>>, vector<1x32x32xbf16>
      %154 = vector.shape_cast %153 : vector<1x32x32xbf16> to vector<32x32xbf16>
      %155 = vector.shape_cast %152 : vector<32x32xbf16> to vector<1x32x32xbf16>
      tpu.vector_store %arg12[%c0_67, %c0_68, %c0_69], %155 {strides = array<i32>} : memref<4x32x32xbf16, #tpu.memory_space<vmem>>, vector<1x32x32xbf16>,
      %156 = vector.extract_strided_slice %147 {offsets = [0, 256], sizes = [32, 32], strides = [1, 1]} : vector<32x384xbf16> to vector<32x32xbf16>
      %c0_70 = arith.constant 0 : index
      %c0_71 = arith.constant 0 : index
      %c0_72 = arith.constant 0 : index
      %157 = vector.load %arg13[%c0_70, %c0_71, %c0_72] : memref<4x32x32xbf16, #tpu.memory_space<vmem>>, vector<1x32x32xbf16>
      %158 = vector.shape_cast %157 : vector<1x32x32xbf16> to vector<32x32xbf16>
      %159 = vector.shape_cast %156 : vector<32x32xbf16> to vector<1x32x32xbf16>
      tpu.vector_store %arg13[%c0_70, %c0_71, %c0_72], %159 {strides = array<i32>} : memref<4x32x32xbf16, #tpu.memory_space<vmem>>, vector<1x32x32xbf16>,
      %160 = vector.extract_strided_slice %147 {offsets = [0, 32], sizes = [32, 32], strides = [1, 1]} : vector<32x384xbf16> to vector<32x32xbf16>
      %c1 = arith.constant 1 : index
      %c0_73 = arith.constant 0 : index
      %c0_74 = arith.constant 0 : index
      %161 = vector.load %arg11[%c1, %c0_73, %c0_74] : memref<4x32x32xbf16, #tpu.memory_space<vmem>>, vector<1x32x32xbf16>
      %162 = vector.shape_cast %161 : vector<1x32x32xbf16> to vector<32x32xbf16>
      %163 = vector.shape_cast %160 : vector<32x32xbf16> to vector<1x32x32xbf16>
      tpu.vector_store %arg11[%c1, %c0_73, %c0_74], %163 {strides = array<i32>} : memref<4x32x32xbf16, #tpu.memory_space<vmem>>, vector<1x32x32xbf16>,
      %164 = vector.extract_strided_slice %147 {offsets = [0, 160], sizes = [32, 32], strides = [1, 1]} : vector<32x384xbf16> to vector<32x32xbf16>
      %c1_75 = arith.constant 1 : index
      %c0_76 = arith.constant 0 : index
      %c0_77 = arith.constant 0 : index
      %165 = vector.load %arg12[%c1_75, %c0_76, %c0_77] : memref<4x32x32xbf16, #tpu.memory_space<vmem>>, vector<1x32x32xbf16>
      %166 = vector.shape_cast %165 : vector<1x32x32xbf16> to vector<32x32xbf16>
      %167 = vector.shape_cast %164 : vector<32x32xbf16> to vector<1x32x32xbf16>
      tpu.vector_store %arg12[%c1_75, %c0_76, %c0_77], %167 {strides = array<i32>} : memref<4x32x32xbf16, #tpu.memory_space<vmem>>, vector<1x32x32xbf16>,
      %168 = vector.extract_strided_slice %147 {offsets = [0, 288], sizes = [32, 32], strides = [1, 1]} : vector<32x384xbf16> to vector<32x32xbf16>
      %c1_78 = arith.constant 1 : index
      %c0_79 = arith.constant 0 : index
      %c0_80 = arith.constant 0 : index
      %169 = vector.load %arg13[%c1_78, %c0_79, %c0_80] : memref<4x32x32xbf16, #tpu.memory_space<vmem>>, vector<1x32x32xbf16>
      %170 = vector.shape_cast %169 : vector<1x32x32xbf16> to vector<32x32xbf16>
      %171 = vector.shape_cast %168 : vector<32x32xbf16> to vector<1x32x32xbf16>
      tpu.vector_store %arg13[%c1_78, %c0_79, %c0_80], %171 {strides = array<i32>} : memref<4x32x32xbf16, #tpu.memory_space<vmem>>, vector<1x32x32xbf16>,
      %172 = vector.extract_strided_slice %147 {offsets = [0, 64], sizes = [32, 32], strides = [1, 1]} : vector<32x384xbf16> to vector<32x32xbf16>
      %c2 = arith.constant 2 : index
      %c0_81 = arith.constant 0 : index
      %c0_82 = arith.constant 0 : index
      %173 = vector.load %arg11[%c2, %c0_81, %c0_82] : memref<4x32x32xbf16, #tpu.memory_space<vmem>>, vector<1x32x32xbf16>
      %174 = vector.shape_cast %173 : vector<1x32x32xbf16> to vector<32x32xbf16>
      %175 = vector.shape_cast %172 : vector<32x32xbf16> to vector<1x32x32xbf16>
      tpu.vector_store %arg11[%c2, %c0_81, %c0_82], %175 {strides = array<i32>} : memref<4x32x32xbf16, #tpu.memory_space<vmem>>, vector<1x32x32xbf16>,
      %176 = vector.extract_strided_slice %147 {offsets = [0, 192], sizes = [32, 32], strides = [1, 1]} : vector<32x384xbf16> to vector<32x32xbf16>
      %c2_83 = arith.constant 2 : index
      %c0_84 = arith.constant 0 : index
      %c0_85 = arith.constant 0 : index
      %177 = vector.load %arg12[%c2_83, %c0_84, %c0_85] : memref<4x32x32xbf16, #tpu.memory_space<vmem>>, vector<1x32x32xbf16>
      %178 = vector.shape_cast %177 : vector<1x32x32xbf16> to vector<32x32xbf16>
      %179 = vector.shape_cast %176 : vector<32x32xbf16> to vector<1x32x32xbf16>
      tpu.vector_store %arg12[%c2_83, %c0_84, %c0_85], %179 {strides = array<i32>} : memref<4x32x32xbf16, #tpu.memory_space<vmem>>, vector<1x32x32xbf16>,
      %180 = vector.extract_strided_slice %147 {offsets = [0, 320], sizes = [32, 32], strides = [1, 1]} : vector<32x384xbf16> to vector<32x32xbf16>
      %c2_86 = arith.constant 2 : index
      %c0_87 = arith.constant 0 : index
      %c0_88 = arith.constant 0 : index
      %181 = vector.load %arg13[%c2_86, %c0_87, %c0_88] : memref<4x32x32xbf16, #tpu.memory_space<vmem>>, vector<1x32x32xbf16>
      %182 = vector.shape_cast %181 : vector<1x32x32xbf16> to vector<32x32xbf16>
      %183 = vector.shape_cast %180 : vector<32x32xbf16> to vector<1x32x32xbf16>
      tpu.vector_store %arg13[%c2_86, %c0_87, %c0_88], %183 {strides = array<i32>} : memref<4x32x32xbf16, #tpu.memory_space<vmem>>, vector<1x32x32xbf16>,
      %184 = vector.extract_strided_slice %147 {offsets = [0, 96], sizes = [32, 32], strides = [1, 1]} : vector<32x384xbf16> to vector<32x32xbf16>
      %c3 = arith.constant 3 : index
      %c0_89 = arith.constant 0 : index
      %c0_90 = arith.constant 0 : index
      %185 = vector.load %arg11[%c3, %c0_89, %c0_90] : memref<4x32x32xbf16, #tpu.memory_space<vmem>>, vector<1x32x32xbf16>
      %186 = vector.shape_cast %185 : vector<1x32x32xbf16> to vector<32x32xbf16>
      %187 = vector.shape_cast %184 : vector<32x32xbf16> to vector<1x32x32xbf16>
      tpu.vector_store %arg11[%c3, %c0_89, %c0_90], %187 {strides = array<i32>} : memref<4x32x32xbf16, #tpu.memory_space<vmem>>, vector<1x32x32xbf16>,
      %188 = vector.extract_strided_slice %147 {offsets = [0, 224], sizes = [32, 32], strides = [1, 1]} : vector<32x384xbf16> to vector<32x32xbf16>
      %c3_91 = arith.constant 3 : index
      %c0_92 = arith.constant 0 : index
      %c0_93 = arith.constant 0 : index
      %189 = vector.load %arg12[%c3_91, %c0_92, %c0_93] : memref<4x32x32xbf16, #tpu.memory_space<vmem>>, vector<1x32x32xbf16>
      %190 = vector.shape_cast %189 : vector<1x32x32xbf16> to vector<32x32xbf16>
      %191 = vector.shape_cast %188 : vector<32x32xbf16> to vector<1x32x32xbf16>
      tpu.vector_store %arg12[%c3_91, %c0_92, %c0_93], %191 {strides = array<i32>} : memref<4x32x32xbf16, #tpu.memory_space<vmem>>, vector<1x32x32xbf16>,
      %192 = vector.extract_strided_slice %147 {offsets = [0, 352], sizes = [32, 32], strides = [1, 1]} : vector<32x384xbf16> to vector<32x32xbf16>
      %c3_94 = arith.constant 3 : index
      %c0_95 = arith.constant 0 : index
      %c0_96 = arith.constant 0 : index
      %193 = vector.load %arg13[%c3_94, %c0_95, %c0_96] : memref<4x32x32xbf16, #tpu.memory_space<vmem>>, vector<1x32x32xbf16>
      %194 = vector.shape_cast %193 : vector<1x32x32xbf16> to vector<32x32xbf16>
      %195 = vector.shape_cast %192 : vector<32x32xbf16> to vector<1x32x32xbf16>
      tpu.vector_store %arg13[%c3_94, %c0_95, %c0_96], %195 {strides = array<i32>} : memref<4x32x32xbf16, #tpu.memory_space<vmem>>, vector<1x32x32xbf16>,
    } else {
    }
    %c16_i32 = arith.constant 16 : i32
    %10 = arith.muli %arg1, %c16_i32 : i32
    %11 = tpu.assume_multiple %10, 16 : i32
    %c0_2 = arith.constant 0 : index
    %12 = arith.index_cast %11 : i32 to index
    %c0_3 = arith.constant 0 : index
    %13 = vector.load %arg2[%c0_2, %12, %c0_3] : memref<1x32x128xbf16, #tpu.memory_space<vmem>>, vector<1x16x128xbf16>
    %14 = vector.shape_cast %13 : vector<1x16x128xbf16> to vector<16x128xbf16>
    %15 = arith.extf %14 : vector<16x128xbf16> to vector<16x128xf32>
    %c0_4 = arith.constant 0 : index
    %16 = arith.index_cast %11 : i32 to index
    %c0_5 = arith.constant 0 : index
    %17 = vector.load %arg11[%c0_4, %16, %c0_5] : memref<4x32x32xbf16, #tpu.memory_space<vmem>>, vector<4x16x32xbf16>
    %c0_6 = arith.constant 0 : index
    %c0_7 = arith.constant 0 : index
    %c0_8 = arith.constant 0 : index
    %18 = vector.load %arg12[%c0_6, %c0_7, %c0_8] : memref<4x32x32xbf16, #tpu.memory_space<vmem>>, vector<4x32x32xbf16>
    "tpu.trace_start"() <{level = 10 : i32, message = "hqd,hkd->hqk"}> : () -> ()
    %cst = arith.constant dense<0.000000e+00> : vector<4x16x32xf32>
    %19 = tpu.matmul %17, %18, %cst {dimension_numbers = #tpu.dot_dimension_numbers<[2], [2], [1], [1], [0, 0, 0, 1, 1, 1], [0], [0]>} : vector<4x16x32xbf16>, vector<4x32x32xbf16>, vector<4x16x32xf32> -> vector<4x16x32xf32>
    "tpu.trace_stop"() : () -> ()
    %cst_9 = arith.constant dense<0xFF800000> : vector<4x16xf32>
    %20 = vector.multi_reduction <maximumf>, %19, %cst_9 [2] : vector<4x16x32xf32> to vector<4x16xf32>
    %21 = vector.shape_cast %20 : vector<4x16xf32> to vector<4x16x1xf32>
    %22 = vector.broadcast %21 : vector<4x16x1xf32> to vector<4x16x32xf32>
    %23 = arith.subf %19, %22 : vector<4x16x32xf32>
    %24 = math.exp %23 : vector<4x16x32xf32>
    %cst_10 = arith.constant dense<0.000000e+00> : vector<4x16xf32>
    %25 = vector.multi_reduction <add>, %24, %cst_10 [2] : vector<4x16x32xf32> to vector<4x16xf32>
    %26 = vector.shape_cast %25 : vector<4x16xf32> to vector<4x16x1xf32>
    %27 = arith.truncf %24 : vector<4x16x32xf32> to vector<4x16x32xbf16>
    %c0_11 = arith.constant 0 : index
    %c0_12 = arith.constant 0 : index
    %c0_13 = arith.constant 0 : index
    %28 = vector.load %arg13[%c0_11, %c0_12, %c0_13] : memref<4x32x32xbf16, #tpu.memory_space<vmem>>, vector<4x32x32xbf16>
    "tpu.trace_start"() <{level = 10 : i32, message = "hqk,hkd->hqd"}> : () -> ()
    %cst_14 = arith.constant dense<0.000000e+00> : vector<4x16x32xf32>
    %29 = tpu.matmul %27, %28, %cst_14 {dimension_numbers = #tpu.dot_dimension_numbers<[2], [1], [1], [2], [0, 0, 0, 1, 1, 2], [0], [0]>} : vector<4x16x32xbf16>, vector<4x32x32xbf16>, vector<4x16x32xf32> -> vector<4x16x32xf32>
    "tpu.trace_stop"() : () -> ()
    %30 = tpu.reciprocal %26 {approx = true} : vector<4x16x1xf32> -> vector<4x16x1xf32>
    %31 = vector.broadcast %30 : vector<4x16x1xf32> to vector<4x16x32xf32>
    %32 = arith.mulf %29, %31 : vector<4x16x32xf32>
    %33 = arith.truncf %32 : vector<4x16x32xf32> to vector<4x16x32xbf16>
    %c0_15 = arith.constant 0 : index
    %c0_16 = arith.constant 0 : index
    %c0_17 = arith.constant 0 : index
    %34 = vector.load %arg5[%c0_15, %c0_16, %c0_17] : memref<4x32x128xbf16, #tpu.memory_space<vmem>>, vector<4x32x128xbf16>
    "tpu.trace_start"() <{level = 10 : i32, message = "hqd,hdo->hqo"}> : () -> ()
    %cst_18 = arith.constant dense<0.000000e+00> : vector<4x16x128xf32>
    %35 = tpu.matmul %33, %34, %cst_18 {dimension_numbers = #tpu.dot_dimension_numbers<[2], [1], [1], [2], [0, 0, 0, 1, 1, 2], [0], [0]>} : vector<4x16x32xbf16>, vector<4x32x128xbf16>, vector<4x16x128xf32> -> vector<4x16x128xf32>
    "tpu.trace_stop"() : () -> ()
    %cst_19 = arith.constant dense<0.000000e+00> : vector<16x128xf32>
    %36 = vector.multi_reduction <add>, %35, %cst_19 [0] : vector<4x16x128xf32> to vector<16x128xf32>
    %37 = vector.broadcast %1 : vector<1x128xf32> to vector<16x128xf32>
    %38 = arith.addf %36, %37 : vector<16x128xf32>
    %39 = arith.addf %15, %38 : vector<16x128xf32>
    %cst_20 = arith.constant dense<0.000000e+00> : vector<16xf32>
    %40 = vector.multi_reduction <add>, %39, %cst_20 [1] : vector<16x128xf32> to vector<16xf32>
    %41 = vector.shape_cast %40 : vector<16xf32> to vector<16x1xf32>
    %cst_21 = arith.constant 1.280000e+02 : f32
    %42 = vector.broadcast %cst_21 : f32 to vector<16x1xf32>
    %43 = arith.divf %41, %42 : vector<16x1xf32>
    %44 = vector.broadcast %43 : vector<16x1xf32> to vector<16x128xf32>
    %45 = arith.subf %39, %44 : vector<16x128xf32>
    %46 = arith.mulf %45, %45 : vector<16x128xf32>
    %cst_22 = arith.constant dense<0.000000e+00> : vector<16xf32>
    %47 = vector.multi_reduction <add>, %46, %cst_22 [1] : vector<16x128xf32> to vector<16xf32>
    %48 = vector.shape_cast %47 : vector<16xf32> to vector<16x1xf32>
    %cst_23 = arith.constant 1.280000e+02 : f32
    %49 = vector.broadcast %cst_23 : f32 to vector<16x1xf32>
    %50 = arith.divf %48, %49 : vector<16x1xf32>
    %51 = vector.broadcast %43 : vector<16x1xf32> to vector<16x128xf32>
    %52 = arith.subf %39, %51 : vector<16x128xf32>
    %cst_24 = arith.constant 9.99999996E-13 : f32
    %53 = vector.broadcast %cst_24 : f32 to vector<16x1xf32>
    %54 = arith.addf %50, %53 : vector<16x1xf32>
    %55 = math.rsqrt %54 : vector<16x1xf32>
    %56 = vector.broadcast %55 : vector<16x1xf32> to vector<16x128xf32>
    %57 = arith.mulf %52, %56 : vector<16x128xf32>
    %58 = vector.broadcast %3 : vector<1x128xf32> to vector<16x128xf32>
    %59 = arith.mulf %57, %58 : vector<16x128xf32>
    %60 = vector.broadcast %4 : vector<1x128xf32> to vector<16x128xf32>
    %61 = arith.addf %59, %60 : vector<16x128xf32>
    %62 = arith.truncf %61 : vector<16x128xf32> to vector<16x128xbf16>
    %c0_25 = arith.constant 0 : index
    %c0_26 = arith.constant 0 : index
    %63 = vector.load %arg6[%c0_25, %c0_26] : memref<128x256xbf16, #tpu.memory_space<vmem>>, vector<128x256xbf16>
    %cst_27 = arith.constant dense<0.000000e+00> : vector<16x256xf32>
    %64 = tpu.matmul %62, %63, %cst_27 {dimension_numbers = #tpu.dot_dimension_numbers<[1], [0], [0], [1], [0, 0, 1, 1], [], []>} : vector<16x128xbf16>, vector<128x256xbf16>, vector<16x256xf32> -> vector<16x256xf32>
    %c0_28 = arith.constant 0 : index
    %c0_29 = arith.constant 0 : index
    %65 = vector.load %arg7[%c0_28, %c0_29] : memref<1x256xf32, #tpu.memory_space<vmem>>, vector<1x256xf32>
    %66 = vector.broadcast %65 : vector<1x256xf32> to vector<16x256xf32>
    %67 = arith.addf %64, %66 : vector<16x256xf32>
    %cst_30 = arith.constant 5.000000e-01 : f32
    %68 = vector.broadcast %cst_30 : f32 to vector<16x256xf32>
    %69 = arith.mulf %68, %67 : vector<16x256xf32>
    %cst_31 = arith.constant 0.707106769 : f32
    %70 = vector.broadcast %cst_31 : f32 to vector<16x256xf32>
    %71 = arith.mulf %67, %70 : vector<16x256xf32>
    %72 = math.absf %71 : vector<16x256xf32>
    %cst_32 = arith.constant 0.327591091 : f32
    %73 = vector.broadcast %cst_32 : f32 to vector<16x256xf32>
    %74 = arith.mulf %73, %72 : vector<16x256xf32>
    %cst_33 = arith.constant 1.000000e+00 : f32
    %75 = vector.broadcast %cst_33 : f32 to vector<16x256xf32>
    %76 = arith.addf %75, %74 : vector<16x256xf32>
    %cst_34 = arith.constant 1.000000e+00 : f32
    %77 = vector.broadcast %cst_34 : f32 to vector<16x256xf32>
    %78 = arith.divf %77, %76 : vector<16x256xf32>
    %cst_35 = arith.constant 1.06140542 : f32
    %79 = vector.broadcast %cst_35 : f32 to vector<16x256xf32>
    %80 = arith.mulf %79, %78 : vector<16x256xf32>
    %cst_36 = arith.constant -1.45315206 : f32
    %81 = vector.broadcast %cst_36 : f32 to vector<16x256xf32>
    %82 = arith.addf %80, %81 : vector<16x256xf32>
    %83 = arith.mulf %82, %78 : vector<16x256xf32>
    %cst_37 = arith.constant 1.42141378 : f32
    %84 = vector.broadcast %cst_37 : f32 to vector<16x256xf32>
    %85 = arith.addf %83, %84 : vector<16x256xf32>
    %86 = arith.mulf %85, %78 : vector<16x256xf32>
    %cst_38 = arith.constant -0.284496725 : f32
    %87 = vector.broadcast %cst_38 : f32 to vector<16x256xf32>
    %88 = arith.addf %86, %87 : vector<16x256xf32>
    %89 = arith.mulf %88, %78 : vector<16x256xf32>
    %cst_39 = arith.constant 0.254829586 : f32
    %90 = vector.broadcast %cst_39 : f32 to vector<16x256xf32>
    %91 = arith.addf %89, %90 : vector<16x256xf32>
    %92 = arith.mulf %91, %78 : vector<16x256xf32>
    %cst_40 = arith.constant 0.000000e+00 : f32
    %93 = vector.broadcast %cst_40 : f32 to vector<16x256xf32>
    %94 = arith.subf %93, %72 : vector<16x256xf32>
    %95 = arith.mulf %94, %72 : vector<16x256xf32>
    %96 = math.exp %95 : vector<16x256xf32>
    %97 = arith.mulf %92, %96 : vector<16x256xf32>
    %cst_41 = arith.constant 1.000000e+00 : f32
    %98 = vector.broadcast %cst_41 : f32 to vector<16x256xf32>
    %99 = arith.subf %98, %97 : vector<16x256xf32>
    %cst_42 = arith.constant 0.000000e+00 : f32
    %100 = vector.broadcast %cst_42 : f32 to vector<16x256xf32>
    %101 = arith.cmpf oge, %71, %100 : vector<16x256xf32>
    %cst_43 = arith.constant 0.000000e+00 : f32
    %102 = vector.broadcast %cst_43 : f32 to vector<16x256xf32>
    %103 = arith.subf %102, %99 : vector<16x256xf32>
    %104 = arith.select %101, %99, %103 : vector<16x256xi1>, vector<16x256xf32>
    %cst_44 = arith.constant 1.000000e+00 : f32
    %105 = vector.broadcast %cst_44 : f32 to vector<16x256xf32>
    %106 = arith.addf %105, %104 : vector<16x256xf32>
    %107 = arith.mulf %69, %106 : vector<16x256xf32>
    %108 = arith.truncf %107 : vector<16x256xf32> to vector<16x256xbf16>
    %c0_45 = arith.constant 0 : index
    %c0_46 = arith.constant 0 : index
    %109 = vector.load %arg8[%c0_45, %c0_46] : memref<256x128xbf16, #tpu.memory_space<vmem>>, vector<256x128xbf16>
    %cst_47 = arith.constant dense<0.000000e+00> : vector<16x128xf32>
    %110 = tpu.matmul %108, %109, %cst_47 {dimension_numbers = #tpu.dot_dimension_numbers<[1], [0], [0], [1], [0, 0, 1, 1], [], []>} : vector<16x256xbf16>, vector<256x128xbf16>, vector<16x128xf32> -> vector<16x128xf32>
    %111 = vector.broadcast %2 : vector<1x128xf32> to vector<16x128xf32>
    %112 = arith.addf %110, %111 : vector<16x128xf32>
    %113 = arith.addf %61, %112 : vector<16x128xf32>
    %cst_48 = arith.constant dense<0.000000e+00> : vector<16xf32>
    %114 = vector.multi_reduction <add>, %113, %cst_48 [1] : vector<16x128xf32> to vector<16xf32>
    %115 = vector.shape_cast %114 : vector<16xf32> to vector<16x1xf32>
    %cst_49 = arith.constant 1.280000e+02 : f32
    %116 = vector.broadcast %cst_49 : f32 to vector<16x1xf32>
    %117 = arith.divf %115, %116 : vector<16x1xf32>
    %118 = vector.broadcast %117 : vector<16x1xf32> to vector<16x128xf32>
    %119 = arith.subf %113, %118 : vector<16x128xf32>
    %120 = arith.mulf %119, %119 : vector<16x128xf32>
    %cst_50 = arith.constant dense<0.000000e+00> : vector<16xf32>
    %121 = vector.multi_reduction <add>, %120, %cst_50 [1] : vector<16x128xf32> to vector<16xf32>
    %122 = vector.shape_cast %121 : vector<16xf32> to vector<16x1xf32>
    %cst_51 = arith.constant 1.280000e+02 : f32
    %123 = vector.broadcast %cst_51 : f32 to vector<16x1xf32>
    %124 = arith.divf %122, %123 : vector<16x1xf32>
    %125 = vector.broadcast %117 : vector<16x1xf32> to vector<16x128xf32>
    %126 = arith.subf %113, %125 : vector<16x128xf32>
    %cst_52 = arith.constant 9.99999996E-13 : f32
    %127 = vector.broadcast %cst_52 : f32 to vector<16x1xf32>
    %128 = arith.addf %124, %127 : vector<16x1xf32>
    %129 = math.rsqrt %128 : vector<16x1xf32>
    %130 = vector.broadcast %129 : vector<16x1xf32> to vector<16x128xf32>
    %131 = arith.mulf %126, %130 : vector<16x128xf32>
    %132 = vector.broadcast %5 : vector<1x128xf32> to vector<16x128xf32>
    %133 = arith.mulf %131, %132 : vector<16x128xf32>
    %134 = vector.broadcast %6 : vector<1x128xf32> to vector<16x128xf32>
    %135 = arith.addf %133, %134 : vector<16x128xf32>
    %136 = arith.truncf %135 : vector<16x128xf32> to vector<16x128xbf16>
    %c0_53 = arith.constant 0 : index
    %c0_54 = arith.constant 0 : index
    %c0_55 = arith.constant 0 : index
    %137 = vector.load %arg10[%c0_53, %c0_54, %c0_55] : memref<1x16x128xbf16, #tpu.memory_space<vmem>>, vector<1x16x128xbf16>
    %138 = vector.shape_cast %137 : vector<1x16x128xbf16> to vector<16x128xbf16>
    %139 = vector.shape_cast %136 : vector<16x128xbf16> to vector<1x16x128xbf16>
    tpu.vector_store %arg10[%c0_53, %c0_54, %c0_55], %139 {strides = array<i32>} : memref<1x16x128xbf16, #tpu.memory_space<vmem>>, vector<1x16x128xbf16>,
    return
  }
  func.func @transform_0(%arg0: i32, %arg1: i32) -> (i32, i32, i32) {
    %c0_i32 = arith.constant 0 : i32
    %c0_i32_0 = arith.constant 0 : i32
    %c0_i32_1 = arith.constant 0 : i32
    return %arg0, %c0_i32, %c0_i32_0 : i32, i32, i32
  }
  func.func @transform_1(%arg0: i32, %arg1: i32) -> (i32, i32) {
    %c0_i32 = arith.constant 0 : i32
    %c0_i32_0 = arith.constant 0 : i32
    %c0_i32_1 = arith.constant 0 : i32
    return %c0_i32, %c0_i32_0 : i32, i32
  }
  func.func @transform_2(%arg0: i32, %arg1: i32) -> (i32, i32) {
    %c0_i32 = arith.constant 0 : i32
    %c0_i32_0 = arith.constant 0 : i32
    %c0_i32_1 = arith.constant 0 : i32
    return %c0_i32, %c0_i32_0 : i32, i32
  }
  func.func @transform_3(%arg0: i32, %arg1: i32) -> (i32, i32, i32) {
    %c0_i32 = arith.constant 0 : i32
    %c0_i32_0 = arith.constant 0 : i32
    %c0_i32_1 = arith.constant 0 : i32
    %c0_i32_2 = arith.constant 0 : i32
    return %c0_i32, %c0_i32_0, %c0_i32_1 : i32, i32, i32
  }
  func.func @transform_4(%arg0: i32, %arg1: i32) -> (i32, i32) {
    %c0_i32 = arith.constant 0 : i32
    %c0_i32_0 = arith.constant 0 : i32
    %c0_i32_1 = arith.constant 0 : i32
    return %c0_i32, %c0_i32_0 : i32, i32
  }
  func.func @transform_5(%arg0: i32, %arg1: i32) -> (i32, i32) {
    %c0_i32 = arith.constant 0 : i32
    %c0_i32_0 = arith.constant 0 : i32
    %c0_i32_1 = arith.constant 0 : i32
    return %c0_i32, %c0_i32_0 : i32, i32
  }
  func.func @transform_6(%arg0: i32, %arg1: i32) -> (i32, i32) {
    %c0_i32 = arith.constant 0 : i32
    %c0_i32_0 = arith.constant 0 : i32
    %c0_i32_1 = arith.constant 0 : i32
    return %c0_i32, %c0_i32_0 : i32, i32
  }
  func.func @transform_7(%arg0: i32, %arg1: i32) -> (i32, i32) {
    %c0_i32 = arith.constant 0 : i32
    %c0_i32_0 = arith.constant 0 : i32
    %c0_i32_1 = arith.constant 0 : i32
    return %c0_i32, %c0_i32_0 : i32, i32
  }
  func.func @transform_8(%arg0: i32, %arg1: i32) -> (i32, i32, i32) {
    %c0_i32 = arith.constant 0 : i32
    %c0_i32_0 = arith.constant 0 : i32
    return %arg0, %arg1, %c0_i32 : i32, i32, i32
  }
}

</mosaic_0001>

<llo_original>
// kernel: distilbert_mlm_forward.5
$region0: #{distilbert_mlm_forward.5}
  #allocation0 [shape = 'u32[]', space=smem, size = 0x4, offset = 0x4, fixed_abs, tag = 'smem constant byte address 0x4 - core index']
  #allocation1 [shape = 'u32[144,128]{1,0:T(1,128)}', space=vmem, size = 0x12000, scoped, tag = 'internal scratch']
  %s0 = inlined_call_operand.hbm [shape: f32[2,32,128], index: 0, kind: input, shape index: {}]
  %s1 = inlined_call_operand.hbm [shape: f32[32,128], index: 1, kind: input, shape index: {}]
  %s2 = inlined_call_operand.hbm [shape: f32[1,128], index: 2, kind: input, shape index: {}]
  %s3 = inlined_call_operand.hbm [shape: f32[1,128], index: 3, kind: input, shape index: {}]
  %s4 = inlined_call_operand.hbm [shape: bf16[2,32,128], index: 4, kind: output, shape index: {}]
  %s5 = sld [smem:[#allocation0]]
  $region65: #{distilbert_mlm_forward.5} parent=0
    _
  %s7 = ssub.s32 1, %s5
  %s8 = scalar_select 0, %s7, %s5
  $region1: #{distilbert_mlm_forward.5} parent=0
    #allocation2 [shape = 'u8[32768]{0}', space=vmem, size = 0x8000, scoped, tag = 'input window, operand 0']
    #allocation3 [shape = 's32[2]{0}', space=sflag, size = 0x8, scoped, tag = 'scoped memory for distilbert_mlm_forward.5']
    #allocation4 [shape = 's32[2]{0}', space=sflag, size = 0x8, scoped, tag = 'scoped memory for distilbert_mlm_forward.5']
    #allocation5 [shape = 'u8[16384]{0}', space=vmem, size = 0x4000, scoped, tag = 'input window, operand 1, single buffered']
    #allocation6 [shape = 's32[1]{0}', space=sflag, size = 0x4, scoped, tag = 'scoped memory for distilbert_mlm_forward.5']
    #allocation7 [shape = 'u8[512]{0}', space=vmem, size = 0x400, scoped, tag = 'input window, operand 2, single buffered']
    #allocation8 [shape = 'u8[512]{0}', space=vmem, size = 0x400, scoped, tag = 'input window, operand 3, single buffered']
    #allocation9 [shape = 's32[1]{0}', space=sflag, size = 0x4, scoped, tag = 'scoped memory for distilbert_mlm_forward.5']
    #allocation10 [shape = 'u8[16384]{0}', space=vmem, size = 0x4000, scoped, tag = 'output window, operand 0']
    %9 = vsyncpa [#allocation3], 0
    %s10 = scalar_lea.sflag [#allocation3], 1
    %11 = vsyncpa %s10, 0
    %12 = vsyncpa [#allocation6], 0
    %13 = vsyncpa [#allocation9], 0
    %14 = vsyncpa [#allocation4], 0
    %s15 = scalar_lea.sflag [#allocation4], 1
    %16 = vsyncpa %s15, 0
    loop: start=0, step=1, limit=4
    $region2: #{distilbert_mlm_forward.5} parent=1 // loop_pre_header
      _
    $region3: #{distilbert_mlm_forward.5} parent=1 // loop_header
      %s18 = sphi 0, %s22
      %p19 = scmp.ge.s32.totalorder %s18, 4
      %s28 = sphi 0, %s30
      %s31 = sphi 0, %s28
      %s32 = sphi 0, %s31
      %s48 = sphi 0, %s32
      %s52 = sphi 0, %s52
      %s54 = sphi 0, %s52
      %s55 = sphi 0, %s54
      %s69 = sphi 0, %s55
      %s73 = sphi 0, %s73
      %s75 = sphi 0, %s73
      %s76 = sphi 0, %s75
      %s90 = sphi 0, %s76
      %s94 = sphi 0, %s94
      %s96 = sphi 0, %s94
      %s97 = sphi 0, %s96
      %s111 = sphi 0, %s97
      %s117 = sphi 0, %s119
      %s120 = sphi 0, %s117
      %s121 = sphi 0, %s120
      %s137 = sphi 0, %s121
    $region4: #{distilbert_mlm_forward.5} parent=1 // loop_header_branch
      %21 = sbr.rel (%p19) target = $region8
    $region5: #{distilbert_mlm_forward.5} parent=1 // loop_body
      %s23 = ssub.s32 %s18, 1
      %s24 = ssub.s32 %s18, 2
      %s25 = sadd.s32 %s18, 1
      %s26 = ssub.s32 %s18, %s25
      %p27 = scmp.eq.s32.totalorder %s26, 0
      %s29 = sadd.s32 %s28, 1
      %s30 = scalar_select %p27, %s28, %s29
      %p33 = pneg %p27
      %p34 = scmp.eq.s32.totalorder %s18, 1
      %p35 = por %p33, %p34
      %p36 = scmp.ne.s32.totalorder %s28, %s31
      %p37 = scmp.eq.s32.totalorder %s18, 0
      %p38 = por %p36, %p37
      %p39 = scmp.ne.s32.totalorder %s28, %s31
      %p40 = scmp.eq.s32.totalorder %s23, 1
      %p41 = por %p39, %p40
      %p42 = scmp.ne.s32.totalorder %s31, %s32
      %p43 = scmp.eq.s32.totalorder %s23, 0
      %p44 = por %p42, %p43
      %p45 = scmp.ne.s32.totalorder %s31, %s32
      %p46 = scmp.eq.s32.totalorder %s24, 1
      %p47 = por %p45, %p46
      %p49 = scmp.ne.s32.totalorder %s32, %s48
      %p50 = scmp.eq.s32.totalorder %s24, 0
      %p51 = por %p49, %p50
      %s53 = sadd.s32 %s52, 1
      %p56 = scmp.eq.s32.totalorder %s18, 1
      %p57 = scmp.ne.s32.totalorder %s52, %s54
      %p58 = scmp.eq.s32.totalorder %s18, 0
      %p59 = por %p57, %p58
      %p60 = scmp.ne.s32.totalorder %s52, %s54
      %p61 = scmp.eq.s32.totalorder %s23, 1
      %p62 = por %p60, %p61
      %p63 = scmp.ne.s32.totalorder %s54, %s55
      %p64 = scmp.eq.s32.totalorder %s23, 0
      %p65 = por %p63, %p64
      %p66 = scmp.ne.s32.totalorder %s54, %s55
      %p67 = scmp.eq.s32.totalorder %s24, 1
      %p68 = por %p66, %p67
      %p70 = scmp.ne.s32.totalorder %s55, %s69
      %p71 = scmp.eq.s32.totalorder %s24, 0
      %p72 = por %p70, %p71
      %s74 = sadd.s32 %s73, 1
      %p77 = scmp.eq.s32.totalorder %s18, 1
      %p78 = scmp.ne.s32.totalorder %s73, %s75
      %p79 = scmp.eq.s32.totalorder %s18, 0
      %p80 = por %p78, %p79
      %p81 = scmp.ne.s32.totalorder %s73, %s75
      %p82 = scmp.eq.s32.totalorder %s23, 1
      %p83 = por %p81, %p82
      %p84 = scmp.ne.s32.totalorder %s75, %s76
      %p85 = scmp.eq.s32.totalorder %s23, 0
      %p86 = por %p84, %p85
      %p87 = scmp.ne.s32.totalorder %s75, %s76
      %p88 = scmp.eq.s32.totalorder %s24, 1
      %p89 = por %p87, %p88
      %p91 = scmp.ne.s32.totalorder %s76, %s90
      %p92 = scmp.eq.s32.totalorder %s24, 0
      %p93 = por %p91, %p92
      %s95 = sadd.s32 %s94, 1
      %p98 = scmp.eq.s32.totalorder %s18, 1
      %p99 = scmp.ne.s32.totalorder %s94, %s96
      %p100 = scmp.eq.s32.totalorder %s18, 0
      %p101 = por %p99, %p100
      %p102 = scmp.ne.s32.totalorder %s94, %s96
      %p103 = scmp.eq.s32.totalorder %s23, 1
      %p104 = por %p102, %p103
      %p105 = scmp.ne.s32.totalorder %s96, %s97
      %p106 = scmp.eq.s32.totalorder %s23, 0
      %p107 = por %p105, %p106
      %p108 = scmp.ne.s32.totalorder %s96, %s97
      %p109 = scmp.eq.s32.totalorder %s24, 1
      %p110 = por %p108, %p109
      %p112 = scmp.ne.s32.totalorder %s97, %s111
      %p113 = scmp.eq.s32.totalorder %s24, 0
      %p114 = por %p112, %p113
      %s115 = ssub.s32 %s18, %s25
      %p116 = scmp.eq.s32.totalorder %s115, 0
      %s118 = sadd.s32 %s117, 1
      %s119 = scalar_select %p116, %s117, %s118
      %p122 = pneg %p116
      %p123 = scmp.eq.s32.totalorder %s18, 1
      %p124 = por %p122, %p123
      %p125 = scmp.ne.s32.totalorder %s117, %s120
      %p126 = scmp.eq.s32.totalorder %s18, 0
      %p127 = por %p125, %p126
      %p128 = scmp.ne.s32.totalorder %s117, %s120
      %p129 = scmp.eq.s32.totalorder %s23, 1
      %p130 = por %p128, %p129
      %p131 = scmp.ne.s32.totalorder %s120, %s121
      %p132 = scmp.eq.s32.totalorder %s23, 0
      %p133 = por %p131, %p132
      %p134 = scmp.ne.s32.totalorder %s120, %s121
      %p135 = scmp.eq.s32.totalorder %s24, 1
      %p136 = por %p134, %p135
      %p138 = scmp.ne.s32.totalorder %s121, %s137
      %p139 = scmp.eq.s32.totalorder %s24, 0
      %p140 = por %p138, %p139
      %p141 = scmp.le.s32.totalorder 1, %s18
      %p142 = scmp.lt.s32.totalorder %s18, 3
      %p143 = pnand %p141, %p142
      %p144 = pneg %p143
      // Predicated region
      $region9: #{distilbert_mlm_forward.5} parent=5 // pred_check
        _
      $region10: #{distilbert_mlm_forward.5} parent=5 // pred_check_branch
        %146 = sbr.rel (%p143) target = $region12
      $region11: #{distilbert_mlm_forward.5} parent=5 // pred_region
        %s147 = ssub.s32 %s18, 1
        // Predicated region
        $region13: #{distilbert_mlm_forward.5} parent=11 // pred_check
          %p148 = pneg %p65
        $region14: #{distilbert_mlm_forward.5} parent=11 // pred_check_branch
          %150 = sbr.rel (%p148) target = $region16
        $region15: #{distilbert_mlm_forward.5} parent=11 // pred_region
          %s152 = ssub.s32 512, 512
          %153 = vsyncadd [#allocation6], %s152
          %s154 = sshll.u32 [#allocation5], 4
          %s155 = int_to_ptr.vmem [resolvable:$true] %s154
          %160 = dma.hbm_to_vmem [thread:$0]  %s1, 512, %s155, [#allocation6], 128, 128, 8
        $region16: #{distilbert_mlm_forward.5} parent=11 // pred_fallthru
          _
        // Predicated region
        $region17: #{distilbert_mlm_forward.5} parent=11 // pred_check
          %p161 = pneg %p86
        $region18: #{distilbert_mlm_forward.5} parent=11 // pred_check_branch
          %163 = sbr.rel (%p161) target = $region20
        $region19: #{distilbert_mlm_forward.5} parent=11 // pred_region
          %s165 = ssub.s32 16, 16
          %166 = vsyncadd [#allocation6], %s165
          %s168 = sshll.u32 [#allocation7], 4
          %s169 = int_to_ptr.vmem [resolvable:$true] %s168
          %171 = dma.hbm_to_vmem [thread:$0]  %s2, 16, %s169, [#allocation6]
        $region20: #{distilbert_mlm_forward.5} parent=11 // pred_fallthru
          _
        // Predicated region
        $region21: #{distilbert_mlm_forward.5} parent=11 // pred_check
          %p172 = pneg %p107
        $region22: #{distilbert_mlm_forward.5} parent=11 // pred_check_branch
          %174 = sbr.rel (%p172) target = $region24
        $region23: #{distilbert_mlm_forward.5} parent=11 // pred_region
          %s176 = ssub.s32 16, 16
          %177 = vsyncadd [#allocation9], %s176
          %s179 = sshll.u32 [#allocation8], 4
          %s180 = int_to_ptr.vmem [resolvable:$true] %s179
          %182 = dma.hbm_to_vmem [thread:$0]  %s3, 16, %s180, [#allocation9]
        $region24: #{distilbert_mlm_forward.5} parent=11 // pred_fallthru
          _
      $region12: #{distilbert_mlm_forward.5} parent=5 // pred_fallthru
        _
      %p183 = scmp.lt.s32.totalorder %s18, 2
      // Predicated region
      $region25: #{distilbert_mlm_forward.5} parent=5 // pred_check
        %p184 = pneg %p183
      $region26: #{distilbert_mlm_forward.5} parent=5 // pred_check_branch
        %186 = sbr.rel (%p184) target = $region28
      $region27: #{distilbert_mlm_forward.5} parent=5 // pred_region
        // Predicated region
        $region29: #{distilbert_mlm_forward.5} parent=27 // pred_check
          %p187 = pneg %p38
        $region30: #{distilbert_mlm_forward.5} parent=27 // pred_check_branch
          %189 = sbr.rel (%p187) target = $region32
        $region31: #{distilbert_mlm_forward.5} parent=27 // pred_region
          %s190 = sand.u32 %s28, 1
          %s191 = scalar_lea.sflag [#allocation3], %s190
          %s192 = sand.u32 %s28, 1
          %s193 = smul.addr %s192, 32
          %s194 = scalar_lea.vmem [#allocation2], %s193
          %s196 = ssub.s32 512, 512
          %197 = vsyncadd %s191, %s196
          %s198 = smul.addr %s18, 4
          %s199 = smul.addr %s198, 128
          %s200 = scalar_lea.hbm %s0, %s199
          %s201 = sshll.u32 %s194, 4
          %s202 = int_to_ptr.vmem [resolvable:$true] %s201
          %207 = dma.hbm_to_vmem [thread:$0]  %s200, 512, %s202, %s191, 128, 128, 8
        $region32: #{distilbert_mlm_forward.5} parent=27 // pred_fallthru
          _
      $region28: #{distilbert_mlm_forward.5} parent=5 // pred_fallthru
        _
      %p208 = scmp.le.s32.totalorder 1, %s18
      %p209 = scmp.lt.s32.totalorder %s18, 3
      %p210 = pnand %p208, %p209
      %p211 = pneg %p210
      // Predicated region
      $region33: #{distilbert_mlm_forward.5} parent=5 // pred_check
        _
      $region34: #{distilbert_mlm_forward.5} parent=5 // pred_check_branch
        %213 = sbr.rel (%p210) target = $region36
      $region35: #{distilbert_mlm_forward.5} parent=5 // pred_region
        %s214 = ssub.s32 %s18, 1
        %s215 = sand.u32 %s31, 1
        %s216 = scalar_lea.sflag [#allocation3], %s215
        %s217 = sand.u32 %s31, 1
        %s218 = smul.addr %s217, 32
        %s219 = scalar_lea.vmem [#allocation2], %s218
        // Predicated region
        $region37: #{distilbert_mlm_forward.5} parent=35 // pred_check
          %p220 = pneg %p44
        $region38: #{distilbert_mlm_forward.5} parent=35 // pred_check_branch
          %222 = sbr.rel (%p220) target = $region40
        $region39: #{distilbert_mlm_forward.5} parent=35 // pred_region
          %223 = dma.done %s216, 512
        $region40: #{distilbert_mlm_forward.5} parent=35 // pred_fallthru
          _
        // Predicated region
        $region41: #{distilbert_mlm_forward.5} parent=35 // pred_check
          %p224 = pneg %p65
        $region42: #{distilbert_mlm_forward.5} parent=35 // pred_check_branch
          %226 = sbr.rel (%p224) target = $region44
        $region43: #{distilbert_mlm_forward.5} parent=35 // pred_region
          %227 = dma.done [#allocation6], 512
        $region44: #{distilbert_mlm_forward.5} parent=35 // pred_fallthru
          _
        // Predicated region
        $region45: #{distilbert_mlm_forward.5} parent=35 // pred_check
          %p228 = pneg %p86
        $region46: #{distilbert_mlm_forward.5} parent=35 // pred_check_branch
          %230 = sbr.rel (%p228) target = $region48
        $region47: #{distilbert_mlm_forward.5} parent=35 // pred_region
          %231 = dma.done [#allocation6], 16
        $region48: #{distilbert_mlm_forward.5} parent=35 // pred_fallthru
          _
        // Predicated region
        $region49: #{distilbert_mlm_forward.5} parent=35 // pred_check
          %p232 = pneg %p107
        $region50: #{distilbert_mlm_forward.5} parent=35 // pred_check_branch
          %234 = sbr.rel (%p232) target = $region52
        $region51: #{distilbert_mlm_forward.5} parent=35 // pred_region
          %235 = dma.done [#allocation9], 16
        $region52: #{distilbert_mlm_forward.5} parent=35 // pred_fallthru
          _
        %s236 = sand.u32 %s31, 1
        %s237 = scalar_lea.sflag [#allocation3], %s236
        %s238 = sand.u32 %s31, 1
        %s239 = smul.addr %s238, 32
        %s240 = scalar_lea.vmem [#allocation2], %s239
        %p241 = pneg %p44
        %p242 = pneg %p41
        %p243 = pneg %p65
        %p244 = pneg %p62
        %p245 = pneg %p86
        %p246 = pneg %p83
        %p247 = pneg %p107
        %p248 = pneg %p104
        %p249 = pneg %p133
        %p250 = pneg %p130
        %s251 = sand.u32 %s120, 1
        %s252 = scalar_lea.sflag [#allocation4], %s251
        %s253 = sand.u32 %s120, 1
        %s254 = smul.addr %s253, 16
        %s255 = scalar_lea.vmem [#allocation10], %s254
        %v256 = vld [vmem:[%s219] sm:$0xff]
        %v257 = vld [vmem:[%s219 + $0x8] sm:$0xff]
        %v258 = vld [vmem:[%s219 + $0x10] sm:$0xff]
        %v259 = vld [vmem:[%s219 + $0x18] sm:$0xff]
        %v260 = vld [vmem:[#allocation5] sm:$0xff]
        %v261 = vld [vmem:[#allocation5 + $0x8] sm:$0xff]
        %v262 = vld [vmem:[#allocation5 + $0x10] sm:$0xff]
        %v263 = vld [vmem:[#allocation5 + $0x18] sm:$0xff]
        %v264 = vadd.f32 %v256, %v260
        %v265 = vadd.f32 %v257, %v261
        %v266 = vadd.f32 %v258, %v262
        %v267 = vadd.f32 %v259, %v263
        %v268 = vld [vmem:[#allocation7] sm:$0x1]
        %v269 = vld [vmem:[#allocation8] sm:$0x1]
        %270 = vadd.xlane.f32.xlu0 %v264
        %v271 = vpop.xlane.xlu0 %270
        %272 = vadd.xlane.f32.xlu0 %v265
        %v273 = vpop.xlane.xlu0 %272
        %274 = vadd.xlane.f32.xlu0 %v266
        %v275 = vpop.xlane.xlu0 %274
        %276 = vadd.xlane.f32.xlu0 %v267
        %v277 = vpop.xlane.xlu0 %276
        %v278 = vrcp.pop 128.0
        %v279 = vmul.f32 %v271, %v278
        %v280 = vmul.f32 %v273, %v278
        %v281 = vmul.f32 %v275, %v278
        %v282 = vmul.f32 %v277, %v278
        %v283 = vsub.f32 %v264, %v279
        %v284 = vsub.f32 %v265, %v280
        %v285 = vsub.f32 %v266, %v281
        %v286 = vsub.f32 %v267, %v282
        %v287 = vmul.f32 %v283, %v283
        %v288 = vmul.f32 %v284, %v284
        %v289 = vmul.f32 %v285, %v285
        %v290 = vmul.f32 %v286, %v286
        %291 = vadd.xlane.f32.xlu0 %v287
        %v292 = vpop.xlane.xlu0 %291
        %293 = vadd.xlane.f32.xlu0 %v288
        %v294 = vpop.xlane.xlu0 %293
        %295 = vadd.xlane.f32.xlu0 %v289
        %v296 = vpop.xlane.xlu0 %295
        %297 = vadd.xlane.f32.xlu0 %v290
        %v298 = vpop.xlane.xlu0 %297
        %v299 = vmul.f32 %v292, %v278
        %v300 = vmul.f32 %v294, %v278
        %v301 = vmul.f32 %v296, %v278
        %v302 = vmul.f32 %v298, %v278
        %v303 = vadd.f32 %v299, 1e-12
        %v304 = vadd.f32 %v300, 1e-12
        %v305 = vadd.f32 %v301, 1e-12
        %v306 = vadd.f32 %v302, 1e-12
        %v307 = vrsqrt.pop %v303
        %v308 = vrsqrt.pop %v304
        %v309 = vrsqrt.pop %v305
        %v310 = vrsqrt.pop %v306
        %v311 = vmul.f32 %v283, %v307
        %v312 = vmul.f32 %v284, %v308
        %v313 = vmul.f32 %v285, %v309
        %v314 = vmul.f32 %v286, %v310
        %v316 = vlaneseq
        %v317 = vshrl.u32 %v316, 7
        %v318 = vsub.s32 0, %v317
        %v319 = vrot.slane %v268, %v318
        %v321 = vmul.f32 %v311, %v319
        %v322 = vmul.f32 %v312, %v319
        %v323 = vmul.f32 %v313, %v319
        %v324 = vmul.f32 %v314, %v319
        %v326 = vlaneseq
        %v327 = vshrl.u32 %v326, 7
        %v328 = vsub.s32 0, %v327
        %v329 = vrot.slane %v269, %v328
        %v331 = vadd.f32 %v321, %v329
        %v332 = vadd.f32 %v322, %v329
        %v333 = vadd.f32 %v323, %v329
        %v334 = vadd.f32 %v324, %v329
        %v335 = vpack.c.bf16 %v332, %v331
        %v336 = vpack.c.bf16 %v334, %v333
        %v339 = vunpack.c.l.b16 %v335
        %v340 = vunpack.c.h.b16 %v335
        %v341 = vunpack.c.l.b16 %v336
        %v342 = vunpack.c.h.b16 %v336
        %v343 = vpack.c.b16 %v339, %v339
        %v344 = vpack.c.b16 %v340, %v340
        %v345 = vpack.c.b16 %v341, %v341
        %v346 = vpack.c.b16 %v342, %v342
        %351 = vst [vmem:[%s255] sm:$0xf] %v343
        %352 = vst [vmem:[%s255 + $0x4] sm:$0xf] %v344
        %353 = vst [vmem:[%s255 + $0x8] sm:$0xf] %v345
        %354 = vst [vmem:[%s255 + $0xc] sm:$0xf] %v346
        %s355 = sand.u32 %s120, 1
        %s356 = scalar_lea.sflag [#allocation4], %s355
        %s357 = sand.u32 %s120, 1
        %s358 = smul.addr %s357, 16
        %s359 = scalar_lea.vmem [#allocation10], %s358
        // Predicated region
        $region53: #{distilbert_mlm_forward.5} parent=35 // pred_check
          %p360 = pneg %p130
        $region54: #{distilbert_mlm_forward.5} parent=35 // pred_check_branch
          %362 = sbr.rel (%p360) target = $region56
        $region55: #{distilbert_mlm_forward.5} parent=35 // pred_region
          %s364 = ssub.s32 256, 256
          %365 = vsyncadd %s356, %s364
          %s366 = smul.addr %s23, 4
          %s367 = smul.addr %s366, 64
          %s368 = scalar_lea.hbm %s4, %s367
          %s369 = sshll.u32 %s359, 4
          %s370 = int_to_ptr.vmem [resolvable:$true] %s369
          %375 = dma.vmem_to_hbm [thread:$0]  %s370, 256, %s368, %s356, 64, 64, 4
        $region56: #{distilbert_mlm_forward.5} parent=35 // pred_fallthru
          _
      $region36: #{distilbert_mlm_forward.5} parent=5 // pred_fallthru
        _
      %p376 = scmp.le.s32.totalorder 2, %s18
      // Predicated region
      $region57: #{distilbert_mlm_forward.5} parent=5 // pred_check
        %p377 = pneg %p376
      $region58: #{distilbert_mlm_forward.5} parent=5 // pred_check_branch
        %379 = sbr.rel (%p377) target = $region60
      $region59: #{distilbert_mlm_forward.5} parent=5 // pred_region
        %s380 = ssub.s32 %s18, 2
        // Predicated region
        $region61: #{distilbert_mlm_forward.5} parent=59 // pred_check
          %p381 = pneg %p136
        $region62: #{distilbert_mlm_forward.5} parent=59 // pred_check_branch
          %383 = sbr.rel (%p381) target = $region64
        $region63: #{distilbert_mlm_forward.5} parent=59 // pred_region
          %s384 = sand.u32 %s121, 1
          %s385 = scalar_lea.sflag [#allocation4], %s384
          %s386 = sand.u32 %s121, 1
          %s387 = smul.addr %s386, 16
          %s388 = scalar_lea.vmem [#allocation10], %s387
          %389 = dma.done %s385, 256
        $region64: #{distilbert_mlm_forward.5} parent=59 // pred_fallthru
          _
      $region60: #{distilbert_mlm_forward.5} parent=5 // pred_fallthru
        _
    $region6: #{distilbert_mlm_forward.5} parent=1 // loop_footer
      %s22 = sadd.s32 1, %s18
    $region7: #{distilbert_mlm_forward.5} parent=1 // loop_footer_branch
      %17 = sbr.rel target = $region3
    $region8: #{distilbert_mlm_forward.5} parent=1 // loop_exit
      _
    %390 = vsyncpa [#allocation3], 1
    %s391 = scalar_lea.sflag [#allocation3], 1
    %392 = vsyncpa %s391, 1
    %393 = vsyncpa [#allocation6], 1
    %394 = vsyncpa [#allocation9], 1
    %395 = vsyncpa [#allocation4], 1
    %s396 = scalar_lea.sflag [#allocation4], 1
    %397 = vsyncpa %s396, 1

// kernel: distilbert_mlm_forward.9
$region0: #{distilbert_mlm_forward.9}
  #allocation0 [shape = 'u32[]', space=smem, size = 0x4, offset = 0x4, fixed_abs, tag = 'smem constant byte address 0x4 - core index']
  #allocation1 [shape = 'u32[144,128]{1,0:T(1,128)}', space=vmem, size = 0x12000, scoped, tag = 'internal scratch']
  %s0 = inlined_call_operand.hbm [shape: bf16[64,128], index: 0, kind: input, shape index: {}]
  %s1 = inlined_call_operand.hbm [shape: bf16[128,512], index: 1, kind: input, shape index: {}]
  %s2 = inlined_call_operand.hbm [shape: f32[1,512], index: 2, kind: input, shape index: {}]
  %s3 = inlined_call_operand.hbm [shape: f32[64,512], index: 3, kind: output, shape index: {}]
  %s4 = sld [smem:[#allocation0]]
  $region57: #{distilbert_mlm_forward.9} parent=0
    _
  %s6 = ssub.s32 1, %s4
  %s7 = scalar_select 0, %s6, %s4
  $region1: #{distilbert_mlm_forward.9} parent=0
    #allocation2 [shape = 'u8[16384]{0}', space=vmem, size = 0x4000, scoped, tag = 'input window, operand 0, single buffered']
    #allocation3 [shape = 's32[2]{0}', space=sflag, size = 0x8, scoped, tag = 'scoped memory for distilbert_mlm_forward.9']
    #allocation4 [shape = 's32[2]{0}', space=sflag, size = 0x8, scoped, tag = 'scoped memory for distilbert_mlm_forward.9']
    #allocation5 [shape = 'u8[131072]{0}', space=vmem, size = 0x20000, scoped, tag = 'input window, operand 1']
    #allocation6 [shape = 's32[2]{0}', space=sflag, size = 0x8, scoped, tag = 'scoped memory for distilbert_mlm_forward.9']
    #allocation7 [shape = 'u8[2048]{0}', space=vmem, size = 0x800, scoped, tag = 'input window, operand 2']
    #allocation8 [shape = 'u8[65536]{0}', space=vmem, size = 0x10000, scoped, tag = 'output window, operand 0']
    %8 = vsyncpa [#allocation3], 0
    %9 = vsyncpa [#allocation6], 0
    %s10 = scalar_lea.sflag [#allocation6], 1
    %11 = vsyncpa %s10, 0
    %12 = vsyncpa [#allocation4], 0
    %s13 = scalar_lea.sflag [#allocation4], 1
    %14 = vsyncpa %s13, 0
    loop: start=0, step=1, limit=6
    $region2: #{distilbert_mlm_forward.9} parent=1 // loop_pre_header
      _
    $region3: #{distilbert_mlm_forward.9} parent=1 // loop_header
      %s16 = sphi 0, %s20
      %p17 = scmp.ge.s32.totalorder %s16, 6
      %s23 = sphi 0, %s35
      %s24 = sphi 0, %s31
      %s25 = sphi 0, %s23
      %s26 = sphi 0, %s24
      %s27 = sphi 0, %s25
      %s28 = sphi 0, %s26
      %s36 = sphi 0, %s36
      %s38 = sphi 0, %s36
      %s39 = sphi 0, %s38
      %s53 = sphi 0, %s39
      %s59 = sphi 0, %s61
      %s62 = sphi 0, %s59
      %s63 = sphi 0, %s62
      %s79 = sphi 0, %s63
      %s85 = sphi 0, %s87
      %s88 = sphi 0, %s85
      %s89 = sphi 0, %s88
      %s105 = sphi 0, %s89
      %s113 = sphi 0, %s115
      %s116 = sphi 0, %s113
      %s117 = sphi 0, %s116
      %s133 = sphi 0, %s117
    $region4: #{distilbert_mlm_forward.9} parent=1 // loop_header_branch
      %19 = sbr.rel (%p17) target = $region8
    $region5: #{distilbert_mlm_forward.9} parent=1 // loop_body
      %s21 = ssub.s32 %s16, 1
      %s22 = ssub.s32 %s16, 2
      %s29 = sadd.s32 1, %s24
      %p30 = scmp.ge.s32.totalorder %s29, 2
      %s31 = scalar_select %p30, 0, %s29
      %s32 = sadd.s32 1, %s23
      %s33 = scalar_select %p30, %s32, %s23
      %p34 = scmp.ge.s32.totalorder %s33, 2
      %s35 = scalar_select %p34, 0, %s33
      %s37 = sadd.s32 %s36, 1
      %p40 = scmp.eq.s32.totalorder %s16, 3
      %p41 = scmp.ne.s32.totalorder %s36, %s38
      %p42 = scmp.eq.s32.totalorder %s16, 0
      %p43 = por %p41, %p42
      %p44 = scmp.ne.s32.totalorder %s36, %s38
      %p45 = scmp.eq.s32.totalorder %s21, 3
      %p46 = por %p44, %p45
      %p47 = scmp.ne.s32.totalorder %s38, %s39
      %p48 = scmp.eq.s32.totalorder %s21, 0
      %p49 = por %p47, %p48
      %p50 = scmp.ne.s32.totalorder %s38, %s39
      %p51 = scmp.eq.s32.totalorder %s22, 3
      %p52 = por %p50, %p51
      %p54 = scmp.ne.s32.totalorder %s39, %s53
      %p55 = scmp.eq.s32.totalorder %s22, 0
      %p56 = por %p54, %p55
      %s57 = ssub.s32 %s23, %s35
      %p58 = scmp.eq.s32.totalorder %s57, 0
      %s60 = sadd.s32 %s59, 1
      %s61 = scalar_select %p58, %s59, %s60
      %p64 = pneg %p58
      %p65 = scmp.eq.s32.totalorder %s16, 3
      %p66 = por %p64, %p65
      %p67 = scmp.ne.s32.totalorder %s59, %s62
      %p68 = scmp.eq.s32.totalorder %s16, 0
      %p69 = por %p67, %p68
      %p70 = scmp.ne.s32.totalorder %s59, %s62
      %p71 = scmp.eq.s32.totalorder %s21, 3
      %p72 = por %p70, %p71
      %p73 = scmp.ne.s32.totalorder %s62, %s63
      %p74 = scmp.eq.s32.totalorder %s21, 0
      %p75 = por %p73, %p74
      %p76 = scmp.ne.s32.totalorder %s62, %s63
      %p77 = scmp.eq.s32.totalorder %s22, 3
      %p78 = por %p76, %p77
      %p80 = scmp.ne.s32.totalorder %s63, %s79
      %p81 = scmp.eq.s32.totalorder %s22, 0
      %p82 = por %p80, %p81
      %s83 = ssub.s32 %s23, %s35
      %p84 = scmp.eq.s32.totalorder %s83, 0
      %s86 = sadd.s32 %s85, 1
      %s87 = scalar_select %p84, %s85, %s86
      %p90 = pneg %p84
      %p91 = scmp.eq.s32.totalorder %s16, 3
      %p92 = por %p90, %p91
      %p93 = scmp.ne.s32.totalorder %s85, %s88
      %p94 = scmp.eq.s32.totalorder %s16, 0
      %p95 = por %p93, %p94
      %p96 = scmp.ne.s32.totalorder %s85, %s88
      %p97 = scmp.eq.s32.totalorder %s21, 3
      %p98 = por %p96, %p97
      %p99 = scmp.ne.s32.totalorder %s88, %s89
      %p100 = scmp.eq.s32.totalorder %s21, 0
      %p101 = por %p99, %p100
      %p102 = scmp.ne.s32.totalorder %s88, %s89
      %p103 = scmp.eq.s32.totalorder %s22, 3
      %p104 = por %p102, %p103
      %p106 = scmp.ne.s32.totalorder %s89, %s105
      %p107 = scmp.eq.s32.totalorder %s22, 0
      %p108 = por %p106, %p107
      %s109 = ssub.s32 %s24, %s31
      %s110 = ssub.s32 %s23, %s35
      %s111 = sor.u32 %s109, %s110
      %p112 = scmp.eq.s32.totalorder %s111, 0
      %s114 = sadd.s32 %s113, 1
      %s115 = scalar_select %p112, %s113, %s114
      %p118 = pneg %p112
      %p119 = scmp.eq.s32.totalorder %s16, 3
      %p120 = por %p118, %p119
      %p121 = scmp.ne.s32.totalorder %s113, %s116
      %p122 = scmp.eq.s32.totalorder %s16, 0
      %p123 = por %p121, %p122
      %p124 = scmp.ne.s32.totalorder %s113, %s116
      %p125 = scmp.eq.s32.totalorder %s21, 3
      %p126 = por %p124, %p125
      %p127 = scmp.ne.s32.totalorder %s116, %s117
      %p128 = scmp.eq.s32.totalorder %s21, 0
      %p129 = por %p127, %p128
      %p130 = scmp.ne.s32.totalorder %s116, %s117
      %p131 = scmp.eq.s32.totalorder %s22, 3
      %p132 = por %p130, %p131
      %p134 = scmp.ne.s32.totalorder %s117, %s133
      %p135 = scmp.eq.s32.totalorder %s22, 0
      %p136 = por %p134, %p135
      %p137 = scmp.le.s32.totalorder 1, %s16
      %p138 = scmp.lt.s32.totalorder %s16, 5
      %p139 = pnand %p137, %p138
      %p140 = pneg %p139
      // Predicated region
      $region9: #{distilbert_mlm_forward.9} parent=5 // pred_check
        _
      $region10: #{distilbert_mlm_forward.9} parent=5 // pred_check_branch
        %142 = sbr.rel (%p139) target = $region12
      $region11: #{distilbert_mlm_forward.9} parent=5 // pred_region
        %s143 = ssub.s32 %s16, 1
        // Predicated region
        $region13: #{distilbert_mlm_forward.9} parent=11 // pred_check
          %p144 = pneg %p49
        $region14: #{distilbert_mlm_forward.9} parent=11 // pred_check_branch
          %146 = sbr.rel (%p144) target = $region16
        $region15: #{distilbert_mlm_forward.9} parent=11 // pred_region
          %s148 = ssub.s32 512, 512
          %149 = vsyncadd [#allocation3], %s148
          %s150 = sshll.u32 [#allocation2], 4
          %s151 = int_to_ptr.vmem [resolvable:$true] %s150
          %156 = dma.hbm_to_vmem [thread:$0]  %s0, 512, %s151, [#allocation3], 64, 64, 4
        $region16: #{distilbert_mlm_forward.9} parent=11 // pred_fallthru
          _
      $region12: #{distilbert_mlm_forward.9} parent=5 // pred_fallthru
        _
      %p157 = scmp.lt.s32.totalorder %s16, 4
      // Predicated region
      $region17: #{distilbert_mlm_forward.9} parent=5 // pred_check
        %p158 = pneg %p157
      $region18: #{distilbert_mlm_forward.9} parent=5 // pred_check_branch
        %160 = sbr.rel (%p158) target = $region20
      $region19: #{distilbert_mlm_forward.9} parent=5 // pred_region
        // Predicated region
        $region21: #{distilbert_mlm_forward.9} parent=19 // pred_check
          %p161 = pneg %p69
        $region22: #{distilbert_mlm_forward.9} parent=19 // pred_check_branch
          %163 = sbr.rel (%p161) target = $region24
        $region23: #{distilbert_mlm_forward.9} parent=19 // pred_region
          %s164 = sand.u32 %s16, 1
          %s165 = scalar_lea.sflag [#allocation6], %s164
          %s166 = sand.u32 %s59, 1
          %s167 = smul.addr %s166, 128
          %s168 = scalar_lea.vmem [#allocation5], %s167
          %s169 = smul.u32 2, %s23
          %s171 = ssub.s32 2048, 2048
          %172 = vsyncadd %s165, %s171
          %s173 = smul.addr %s169, 64
          %s174 = scalar_lea.hbm %s1, %s173
          %s175 = sshll.u32 %s168, 4
          %s176 = int_to_ptr.vmem [resolvable:$true] %s175
          %181 = dma.hbm_to_vmem [thread:$0]  %s174, 2048, %s176, %s165, 256, 128, 8
        $region24: #{distilbert_mlm_forward.9} parent=19 // pred_fallthru
          _
        // Predicated region
        $region25: #{distilbert_mlm_forward.9} parent=19 // pred_check
          %p182 = pneg %p95
        $region26: #{distilbert_mlm_forward.9} parent=19 // pred_check_branch
          %184 = sbr.rel (%p182) target = $region28
        $region27: #{distilbert_mlm_forward.9} parent=19 // pred_region
          %s185 = sand.u32 %s16, 1
          %s186 = scalar_lea.sflag [#allocation6], %s185
          %s187 = sand.u32 %s85, 1
          %s188 = smul.addr %s187, 2
          %s189 = scalar_lea.vmem [#allocation7], %s188
          %s190 = smul.u32 2, %s23
          %s192 = ssub.s32 32, 32
          %193 = vsyncadd %s186, %s192
          %s194 = smul.addr %s190, 16
          %s195 = scalar_lea.hbm %s2, %s194
          %s197 = sshll.u32 %s189, 4
          %s198 = int_to_ptr.vmem [resolvable:$true] %s197
          %200 = dma.hbm_to_vmem [thread:$0]  %s195, 32, %s198, %s186
        $region28: #{distilbert_mlm_forward.9} parent=19 // pred_fallthru
          _
      $region20: #{distilbert_mlm_forward.9} parent=5 // pred_fallthru
        _
      %p201 = scmp.le.s32.totalorder 1, %s16
      %p202 = scmp.lt.s32.totalorder %s16, 5
      %p203 = pnand %p201, %p202
      %p204 = pneg %p203
      // Predicated region
      $region29: #{distilbert_mlm_forward.9} parent=5 // pred_check
        _
      $region30: #{distilbert_mlm_forward.9} parent=5 // pred_check_branch
        %206 = sbr.rel (%p203) target = $region32
      $region31: #{distilbert_mlm_forward.9} parent=5 // pred_region
        %s207 = ssub.s32 %s16, 1
        // Predicated region
        $region33: #{distilbert_mlm_forward.9} parent=31 // pred_check
          %p208 = pneg %p49
        $region34: #{distilbert_mlm_forward.9} parent=31 // pred_check_branch
          %210 = sbr.rel (%p208) target = $region36
        $region35: #{distilbert_mlm_forward.9} parent=31 // pred_region
          %211 = dma.done [#allocation3], 512
        $region36: #{distilbert_mlm_forward.9} parent=31 // pred_fallthru
          _
        %s212 = sand.u32 %s21, 1
        %s213 = scalar_lea.sflag [#allocation6], %s212
        %s214 = sand.u32 %s62, 1
        %s215 = smul.addr %s214, 128
        %s216 = scalar_lea.vmem [#allocation5], %s215
        // Predicated region
        $region37: #{distilbert_mlm_forward.9} parent=31 // pred_check
          %p217 = pneg %p75
        $region38: #{distilbert_mlm_forward.9} parent=31 // pred_check_branch
          %219 = sbr.rel (%p217) target = $region40
        $region39: #{distilbert_mlm_forward.9} parent=31 // pred_region
          %220 = dma.done %s213, 2048
        $region40: #{distilbert_mlm_forward.9} parent=31 // pred_fallthru
          _
        %s221 = sand.u32 %s21, 1
        %s222 = scalar_lea.sflag [#allocation6], %s221
        %s223 = sand.u32 %s88, 1
        %s224 = smul.addr %s223, 2
        %s225 = scalar_lea.vmem [#allocation7], %s224
        // Predicated region
        $region41: #{distilbert_mlm_forward.9} parent=31 // pred_check
          %p226 = pneg %p101
        $region42: #{distilbert_mlm_forward.9} parent=31 // pred_check_branch
          %228 = sbr.rel (%p226) target = $region44
        $region43: #{distilbert_mlm_forward.9} parent=31 // pred_region
          %229 = dma.done %s222, 32
        $region44: #{distilbert_mlm_forward.9} parent=31 // pred_fallthru
          _
        %p230 = pneg %p49
        %p231 = pneg %p46
        %s232 = sand.u32 %s21, 1
        %s233 = scalar_lea.sflag [#allocation6], %s232
        %s234 = sand.u32 %s62, 1
        %s235 = smul.addr %s234, 128
        %s236 = scalar_lea.vmem [#allocation5], %s235
        %p237 = pneg %p75
        %p238 = pneg %p72
        %s239 = sand.u32 %s21, 1
        %s240 = scalar_lea.sflag [#allocation6], %s239
        %s241 = sand.u32 %s88, 1
        %s242 = smul.addr %s241, 2
        %s243 = scalar_lea.vmem [#allocation7], %s242
        %p244 = pneg %p101
        %p245 = pneg %p98
        %p246 = pneg %p129
        %p247 = pneg %p126
        %s248 = sand.u32 %s116, 1
        %s249 = scalar_lea.sflag [#allocation4], %s248
        %s250 = sand.u32 %s116, 1
        %s251 = smul.addr %s250, 64
        %s252 = scalar_lea.vmem [#allocation8], %s251
        %s253 = smul.u32 2, %s25
        %s254 = smul.u32 2, %s25
        %s255 = smul.u32 4, %s26
        %s256 = smul.u32 2, %s25
        %s258 = smul.u32 %s26, 32
        %s259 = sshra.s32 %s258, 3
        %s260 = sand.u32 %s258, 7
        %s261 = smul.addr %s259, 4
        %s262 = scalar_lea.vmem [#allocation2], %s261
        %v263 = vld [vmem:[%s262] sm:$0xf]
        %v264 = vld [vmem:[%s262 + $0x4] sm:$0xf]
        %v265 = vld [vmem:[%s262 + $0x8] sm:$0xf]
        %v266 = vld [vmem:[%s262 + $0xc] sm:$0xf]
        %v267 = vld [vmem:[%s216] sm:$0xff]
        %v268 = vld [vmem:[%s216 + $0x8] sm:$0xff]
        %v269 = vld [vmem:[%s216 + $0x10] sm:$0xff]
        %v270 = vld [vmem:[%s216 + $0x18] sm:$0xff]
        %v271 = vld [vmem:[%s216 + $0x20] sm:$0xff]
        %v272 = vld [vmem:[%s216 + $0x28] sm:$0xff]
        %v273 = vld [vmem:[%s216 + $0x30] sm:$0xff]
        %v274 = vld [vmem:[%s216 + $0x38] sm:$0xff]
        %v275 = vld [vmem:[%s216 + $0x40] sm:$0xff]
        %v276 = vld [vmem:[%s216 + $0x48] sm:$0xff]
        %v277 = vld [vmem:[%s216 + $0x50] sm:$0xff]
        %v278 = vld [vmem:[%s216 + $0x58] sm:$0xff]
        %v279 = vld [vmem:[%s216 + $0x60] sm:$0xff]
        %v280 = vld [vmem:[%s216 + $0x68] sm:$0xff]
        %v281 = vld [vmem:[%s216 + $0x70] sm:$0xff]
        %v282 = vld [vmem:[%s216 + $0x78] sm:$0xff]
        %v283 = vld [vmem:[%s225] sm:$0x3]
        %v285 = vlaneseq
        %v286 = vshrl.u32 %v285, 7
        %v287 = vsub.s32 0, %v286
        %v288 = vrot.slane %v283, %v287
        %v289 = vlaneseq
        %v290 = vshrl.u32 %v289, 7
        %v291 = vsub.s32 1, %v290
        %v292 = vrot.slane %v283, %v291
        %v299 = vunpack.c.l.b16 %v263
        %v300 = vunpack.c.l.b16 %v264
        %v301 = vunpack.c.l.b16 %v265
        %v302 = vunpack.c.l.b16 %v266
        %v303 = vpack.c.b16 %v300, %v299
        %v304 = vpack.c.b16 %v302, %v301
        %v323 = vunpack.c.l.b16 %v267
        %v324 = vunpack.c.h.b16 %v267
        %v325 = vunpack.c.l.b16 %v268
        %v326 = vunpack.c.h.b16 %v268
        %v327 = vunpack.c.l.b16 %v269
        %v328 = vunpack.c.h.b16 %v269
        %v329 = vunpack.c.l.b16 %v270
        %v330 = vunpack.c.h.b16 %v270
        %v331 = vunpack.c.l.b16 %v271
        %v332 = vunpack.c.h.b16 %v271
        %v333 = vunpack.c.l.b16 %v272
        %v334 = vunpack.c.h.b16 %v272
        %v335 = vunpack.c.l.b16 %v273
        %v336 = vunpack.c.h.b16 %v273
        %v337 = vunpack.c.l.b16 %v274
        %v338 = vunpack.c.h.b16 %v274
        %v339 = vunpack.c.l.b16 %v275
        %v340 = vunpack.c.h.b16 %v275
        %v341 = vunpack.c.l.b16 %v276
        %v342 = vunpack.c.h.b16 %v276
        %v343 = vunpack.c.l.b16 %v277
        %v344 = vunpack.c.h.b16 %v277
        %v345 = vunpack.c.l.b16 %v278
        %v346 = vunpack.c.h.b16 %v278
        %v347 = vunpack.c.l.b16 %v279
        %v348 = vunpack.c.h.b16 %v279
        %v349 = vunpack.c.l.b16 %v280
        %v350 = vunpack.c.h.b16 %v280
        %v351 = vunpack.c.l.b16 %v281
        %v352 = vunpack.c.h.b16 %v281
        %v353 = vunpack.c.l.b16 %v282
        %v354 = vunpack.c.h.b16 %v282
        %v355 = vpack.c.b16 %v325, %v323
        %v356 = vpack.c.b16 %v326, %v324
        %v357 = vpack.c.b16 %v329, %v327
        %v358 = vpack.c.b16 %v330, %v328
        %v359 = vpack.c.b16 %v333, %v331
        %v360 = vpack.c.b16 %v334, %v332
        %v361 = vpack.c.b16 %v337, %v335
        %v362 = vpack.c.b16 %v338, %v336
        %v363 = vpack.c.b16 %v341, %v339
        %v364 = vpack.c.b16 %v342, %v340
        %v365 = vpack.c.b16 %v345, %v343
        %v366 = vpack.c.b16 %v346, %v344
        %v367 = vpack.c.b16 %v349, %v347
        %v368 = vpack.c.b16 %v350, %v348
        %v369 = vpack.c.b16 %v353, %v351
        %v370 = vpack.c.b16 %v354, %v352
        %387 = vmatprep.subr.bf16.mxu0 %v356
        %388 = vmatpush1.bf16.msra.mxu0 %v355
        %389 = vmatprep.subr.bf16.mxu0 %v358
        %390 = vmatpush1.bf16.msra.mxu0 %v357
        %391 = vmatprep.subr.bf16.mxu0 %v360
        %392 = vmatpush1.bf16.msra.mxu0 %v359
        %393 = vmatprep.subr.bf16.mxu0 %v362
        %394 = vmatpush1.bf16.msra.mxu0 %v361
        %395 = vmatprep.subr.bf16.mxu0 %v364
        %396 = vmatpush1.bf16.msra.mxu0 %v363
        %397 = vmatprep.subr.bf16.mxu0 %v366
        %398 = vmatpush1.bf16.msra.mxu0 %v365
        %399 = vmatprep.subr.bf16.mxu0 %v368
        %400 = vmatpush1.bf16.msra.mxu0 %v367
        %401 = vmatprep.subr.bf16.mxu0 %v370
        %402 = vmatpush1.bf16.msra.mxu0 %v369
        %403 = vmatprep.subr.bf16.mxu0 0
        %404 = vmatpush1.bf16.msra.mxu0 0
        %405 = vmatprep.subr.bf16.mxu0 0
        %406 = vmatpush1.bf16.msra.mxu0 0
        %407 = vmatprep.subr.bf16.mxu0 0
        %408 = vmatpush1.bf16.msra.mxu0 0
        %409 = vmatprep.subr.bf16.mxu0 0
        %410 = vmatpush1.bf16.msra.mxu0 0
        %411 = vmatprep.subr.bf16.mxu0 0
        %412 = vmatpush1.bf16.msra.mxu0 0
        %413 = vmatprep.subr.bf16.mxu0 0
        %414 = vmatpush1.bf16.msra.mxu0 0
        %415 = vmatprep.subr.bf16.mxu0 0
        %416 = vmatpush1.bf16.msra.mxu0 0
        %417 = vmatprep.subr.bf16.mxu0 0
        %418 = vmatpush1.bf16.msra.mxu0 0
        %419 = vmatprep.mubr.bf16.mxu0 0
        %420 = vmatmul.mubr.bf16.gmra.mrb[0].mxu0 %v303
        %v421 = vpop.f32.mrb[0].mxu0
        %v422 = vadd.f32 %v288, %v421
        %v423 = vpop.f32.mrb[0].mxu0
        %v424 = vadd.f32 %v292, %v423
        %v425 = vpop.f32.mrb[0].mxu0
        %v426 = vadd.f32 %v288, %v425
        %v427 = vpop.f32.mrb[0].mxu0
        %v428 = vadd.f32 %v292, %v427
        %429 = vmatprep.mubr.bf16.mxu0 0
        %430 = vmatmul.mubr.bf16.gmra.mrb[0].mxu0 %v304
        %v431 = vpop.f32.mrb[0].mxu0
        %v432 = vadd.f32 %v288, %v431
        %v433 = vpop.f32.mrb[0].mxu0
        %v434 = vadd.f32 %v292, %v433
        %v435 = vpop.f32.mrb[0].mxu0
        %v436 = vadd.f32 %v288, %v435
        %v437 = vpop.f32.mrb[0].mxu0
        %v438 = vadd.f32 %v292, %v437
        %439 = vdwg.mxu0
        %440 = vst [vmem:[%s252] sm:$0xff] %v422
        %441 = vst [vmem:[%s252 + $0x8] sm:$0xff] %v424
        %442 = vst [vmem:[%s252 + $0x10] sm:$0xff] %v426
        %443 = vst [vmem:[%s252 + $0x18] sm:$0xff] %v428
        %444 = vst [vmem:[%s252 + $0x20] sm:$0xff] %v432
        %445 = vst [vmem:[%s252 + $0x28] sm:$0xff] %v434
        %446 = vst [vmem:[%s252 + $0x30] sm:$0xff] %v436
        %447 = vst [vmem:[%s252 + $0x38] sm:$0xff] %v438
        %s448 = sand.u32 %s116, 1
        %s449 = scalar_lea.sflag [#allocation4], %s448
        %s450 = sand.u32 %s116, 1
        %s451 = smul.addr %s450, 64
        %s452 = scalar_lea.vmem [#allocation8], %s451
        // Predicated region
        $region45: #{distilbert_mlm_forward.9} parent=31 // pred_check
          %p453 = pneg %p126
        $region46: #{distilbert_mlm_forward.9} parent=31 // pred_check_branch
          %455 = sbr.rel (%p453) target = $region48
        $region47: #{distilbert_mlm_forward.9} parent=31 // pred_region
          %s456 = smul.u32 4, %s26
          %s457 = smul.u32 2, %s25
          %s459 = ssub.s32 1024, 1024
          %460 = vsyncadd %s449, %s459
          %s461 = smul.addr %s456, 4
          %s462 = sadd.s32 %s457, %s461
          %s463 = smul.addr %s462, 128
          %s464 = scalar_lea.hbm %s3, %s463
          %s465 = sshll.u32 %s452, 4
          %s466 = int_to_ptr.vmem [resolvable:$true] %s465
          %471 = dma.vmem_to_hbm [thread:$0]  %s466, 1024, %s464, %s449, 256, 512, 16
        $region48: #{distilbert_mlm_forward.9} parent=31 // pred_fallthru
          _
      $region32: #{distilbert_mlm_forward.9} parent=5 // pred_fallthru
        _
      %p472 = scmp.le.s32.totalorder 2, %s16
      // Predicated region
      $region49: #{distilbert_mlm_forward.9} parent=5 // pred_check
        %p473 = pneg %p472
      $region50: #{distilbert_mlm_forward.9} parent=5 // pred_check_branch
        %475 = sbr.rel (%p473) target = $region52
      $region51: #{distilbert_mlm_forward.9} parent=5 // pred_region
        %s476 = ssub.s32 %s16, 2
        // Predicated region
        $region53: #{distilbert_mlm_forward.9} parent=51 // pred_check
          %p477 = pneg %p132
        $region54: #{distilbert_mlm_forward.9} parent=51 // pred_check_branch
          %479 = sbr.rel (%p477) target = $region56
        $region55: #{distilbert_mlm_forward.9} parent=51 // pred_region
          %s480 = sand.u32 %s117, 1
          %s481 = scalar_lea.sflag [#allocation4], %s480
          %s482 = sand.u32 %s117, 1
          %s483 = smul.addr %s482, 64
          %s484 = scalar_lea.vmem [#allocation8], %s483
          %485 = dma.done %s481, 1024
        $region56: #{distilbert_mlm_forward.9} parent=51 // pred_fallthru
          _
      $region52: #{distilbert_mlm_forward.9} parent=5 // pred_fallthru
        _
    $region6: #{distilbert_mlm_forward.9} parent=1 // loop_footer
      %s20 = sadd.s32 1, %s16
    $region7: #{distilbert_mlm_forward.9} parent=1 // loop_footer_branch
      %15 = sbr.rel target = $region3
    $region8: #{distilbert_mlm_forward.9} parent=1 // loop_exit
      _
    %486 = vsyncpa [#allocation3], 1
    %s487 = scalar_lea.sflag [#allocation3], 1
    %488 = vsyncpa %s487, 1
    %489 = vsyncpa [#allocation6], 1
    %s490 = scalar_lea.sflag [#allocation6], 1
    %491 = vsyncpa %s490, 1
    %492 = vsyncpa [#allocation4], 1
    %s493 = scalar_lea.sflag [#allocation4], 1
    %494 = vsyncpa %s493, 1

// kernel: distilbert_mlm_forward.8
$region0: #{distilbert_mlm_forward.8}
  #allocation0 [shape = 'u32[]', space=smem, size = 0x4, offset = 0x4, fixed_abs, tag = 'smem constant byte address 0x4 - core index']
  #allocation1 [shape = 'u32[144,128]{1,0:T(1,128)}', space=vmem, size = 0x12000, scoped, tag = 'internal scratch']
  %s0 = inlined_call_operand.hbm [shape: bf16[2,32,128], index: 0, kind: input, shape index: {}]
  %s1 = inlined_call_operand.hbm [shape: f32[1,128], index: 1, kind: input, shape index: {}]
  %s2 = inlined_call_operand.hbm [shape: f32[1,128], index: 2, kind: input, shape index: {}]
  %s3 = inlined_call_operand.hbm [shape: bf16[2,32,128], index: 3, kind: output, shape index: {}]
  %s4 = sld [smem:[#allocation0]]
  $region57: #{distilbert_mlm_forward.8} parent=0
    _
  %s6 = ssub.s32 1, %s4
  %s7 = scalar_select 0, %s6, %s4
  $region1: #{distilbert_mlm_forward.8} parent=0
    #allocation2 [shape = 'u8[16384]{0}', space=vmem, size = 0x4000, scoped, tag = 'input window, operand 0']
    #allocation3 [shape = 's32[2]{0}', space=sflag, size = 0x8, scoped, tag = 'scoped memory for distilbert_mlm_forward.8']
    #allocation4 [shape = 's32[2]{0}', space=sflag, size = 0x8, scoped, tag = 'scoped memory for distilbert_mlm_forward.8']
    #allocation5 [shape = 'u8[512]{0}', space=vmem, size = 0x400, scoped, tag = 'input window, operand 1, single buffered']
    #allocation6 [shape = 's32[1]{0}', space=sflag, size = 0x4, scoped, tag = 'scoped memory for distilbert_mlm_forward.8']
    #allocation7 [shape = 'u8[512]{0}', space=vmem, size = 0x400, scoped, tag = 'input window, operand 2, single buffered']
    #allocation8 [shape = 'u8[16384]{0}', space=vmem, size = 0x4000, scoped, tag = 'output window, operand 0']
    %8 = vsyncpa [#allocation3], 0
    %s9 = scalar_lea.sflag [#allocation3], 1
    %10 = vsyncpa %s9, 0
    %11 = vsyncpa [#allocation6], 0
    %12 = vsyncpa [#allocation4], 0
    %s13 = scalar_lea.sflag [#allocation4], 1
    %14 = vsyncpa %s13, 0
    loop: start=0, step=1, limit=4
    $region2: #{distilbert_mlm_forward.8} parent=1 // loop_pre_header
      _
    $region3: #{distilbert_mlm_forward.8} parent=1 // loop_header
      %s16 = sphi 0, %s20
      %p17 = scmp.ge.s32.totalorder %s16, 4
      %s26 = sphi 0, %s28
      %s29 = sphi 0, %s26
      %s30 = sphi 0, %s29
      %s46 = sphi 0, %s30
      %s50 = sphi 0, %s50
      %s52 = sphi 0, %s50
      %s53 = sphi 0, %s52
      %s67 = sphi 0, %s53
      %s71 = sphi 0, %s71
      %s73 = sphi 0, %s71
      %s74 = sphi 0, %s73
      %s88 = sphi 0, %s74
      %s94 = sphi 0, %s96
      %s97 = sphi 0, %s94
      %s98 = sphi 0, %s97
      %s114 = sphi 0, %s98
    $region4: #{distilbert_mlm_forward.8} parent=1 // loop_header_branch
      %19 = sbr.rel (%p17) target = $region8
    $region5: #{distilbert_mlm_forward.8} parent=1 // loop_body
      %s21 = ssub.s32 %s16, 1
      %s22 = ssub.s32 %s16, 2
      %s23 = sadd.s32 %s16, 1
      %s24 = ssub.s32 %s16, %s23
      %p25 = scmp.eq.s32.totalorder %s24, 0
      %s27 = sadd.s32 %s26, 1
      %s28 = scalar_select %p25, %s26, %s27
      %p31 = pneg %p25
      %p32 = scmp.eq.s32.totalorder %s16, 1
      %p33 = por %p31, %p32
      %p34 = scmp.ne.s32.totalorder %s26, %s29
      %p35 = scmp.eq.s32.totalorder %s16, 0
      %p36 = por %p34, %p35
      %p37 = scmp.ne.s32.totalorder %s26, %s29
      %p38 = scmp.eq.s32.totalorder %s21, 1
      %p39 = por %p37, %p38
      %p40 = scmp.ne.s32.totalorder %s29, %s30
      %p41 = scmp.eq.s32.totalorder %s21, 0
      %p42 = por %p40, %p41
      %p43 = scmp.ne.s32.totalorder %s29, %s30
      %p44 = scmp.eq.s32.totalorder %s22, 1
      %p45 = por %p43, %p44
      %p47 = scmp.ne.s32.totalorder %s30, %s46
      %p48 = scmp.eq.s32.totalorder %s22, 0
      %p49 = por %p47, %p48
      %s51 = sadd.s32 %s50, 1
      %p54 = scmp.eq.s32.totalorder %s16, 1
      %p55 = scmp.ne.s32.totalorder %s50, %s52
      %p56 = scmp.eq.s32.totalorder %s16, 0
      %p57 = por %p55, %p56
      %p58 = scmp.ne.s32.totalorder %s50, %s52
      %p59 = scmp.eq.s32.totalorder %s21, 1
      %p60 = por %p58, %p59
      %p61 = scmp.ne.s32.totalorder %s52, %s53
      %p62 = scmp.eq.s32.totalorder %s21, 0
      %p63 = por %p61, %p62
      %p64 = scmp.ne.s32.totalorder %s52, %s53
      %p65 = scmp.eq.s32.totalorder %s22, 1
      %p66 = por %p64, %p65
      %p68 = scmp.ne.s32.totalorder %s53, %s67
      %p69 = scmp.eq.s32.totalorder %s22, 0
      %p70 = por %p68, %p69
      %s72 = sadd.s32 %s71, 1
      %p75 = scmp.eq.s32.totalorder %s16, 1
      %p76 = scmp.ne.s32.totalorder %s71, %s73
      %p77 = scmp.eq.s32.totalorder %s16, 0
      %p78 = por %p76, %p77
      %p79 = scmp.ne.s32.totalorder %s71, %s73
      %p80 = scmp.eq.s32.totalorder %s21, 1
      %p81 = por %p79, %p80
      %p82 = scmp.ne.s32.totalorder %s73, %s74
      %p83 = scmp.eq.s32.totalorder %s21, 0
      %p84 = por %p82, %p83
      %p85 = scmp.ne.s32.totalorder %s73, %s74
      %p86 = scmp.eq.s32.totalorder %s22, 1
      %p87 = por %p85, %p86
      %p89 = scmp.ne.s32.totalorder %s74, %s88
      %p90 = scmp.eq.s32.totalorder %s22, 0
      %p91 = por %p89, %p90
      %s92 = ssub.s32 %s16, %s23
      %p93 = scmp.eq.s32.totalorder %s92, 0
      %s95 = sadd.s32 %s94, 1
      %s96 = scalar_select %p93, %s94, %s95
      %p99 = pneg %p93
      %p100 = scmp.eq.s32.totalorder %s16, 1
      %p101 = por %p99, %p100
      %p102 = scmp.ne.s32.totalorder %s94, %s97
      %p103 = scmp.eq.s32.totalorder %s16, 0
      %p104 = por %p102, %p103
      %p105 = scmp.ne.s32.totalorder %s94, %s97
      %p106 = scmp.eq.s32.totalorder %s21, 1
      %p107 = por %p105, %p106
      %p108 = scmp.ne.s32.totalorder %s97, %s98
      %p109 = scmp.eq.s32.totalorder %s21, 0
      %p110 = por %p108, %p109
      %p111 = scmp.ne.s32.totalorder %s97, %s98
      %p112 = scmp.eq.s32.totalorder %s22, 1
      %p113 = por %p111, %p112
      %p115 = scmp.ne.s32.totalorder %s98, %s114
      %p116 = scmp.eq.s32.totalorder %s22, 0
      %p117 = por %p115, %p116
      %p118 = scmp.le.s32.totalorder 1, %s16
      %p119 = scmp.lt.s32.totalorder %s16, 3
      %p120 = pnand %p118, %p119
      %p121 = pneg %p120
      // Predicated region
      $region9: #{distilbert_mlm_forward.8} parent=5 // pred_check
        _
      $region10: #{distilbert_mlm_forward.8} parent=5 // pred_check_branch
        %123 = sbr.rel (%p120) target = $region12
      $region11: #{distilbert_mlm_forward.8} parent=5 // pred_region
        %s124 = ssub.s32 %s16, 1
        // Predicated region
        $region13: #{distilbert_mlm_forward.8} parent=11 // pred_check
          %p125 = pneg %p63
        $region14: #{distilbert_mlm_forward.8} parent=11 // pred_check_branch
          %127 = sbr.rel (%p125) target = $region16
        $region15: #{distilbert_mlm_forward.8} parent=11 // pred_region
          %s129 = ssub.s32 16, 16
          %130 = vsyncadd [#allocation6], %s129
          %s132 = sshll.u32 [#allocation5], 4
          %s133 = int_to_ptr.vmem [resolvable:$true] %s132
          %135 = dma.hbm_to_vmem [thread:$0]  %s1, 16, %s133, [#allocation6]
        $region16: #{distilbert_mlm_forward.8} parent=11 // pred_fallthru
          _
        // Predicated region
        $region17: #{distilbert_mlm_forward.8} parent=11 // pred_check
          %p136 = pneg %p84
        $region18: #{distilbert_mlm_forward.8} parent=11 // pred_check_branch
          %138 = sbr.rel (%p136) target = $region20
        $region19: #{distilbert_mlm_forward.8} parent=11 // pred_region
          %s140 = ssub.s32 16, 16
          %141 = vsyncadd [#allocation6], %s140
          %s143 = sshll.u32 [#allocation7], 4
          %s144 = int_to_ptr.vmem [resolvable:$true] %s143
          %146 = dma.hbm_to_vmem [thread:$0]  %s2, 16, %s144, [#allocation6]
        $region20: #{distilbert_mlm_forward.8} parent=11 // pred_fallthru
          _
      $region12: #{distilbert_mlm_forward.8} parent=5 // pred_fallthru
        _
      %p147 = scmp.lt.s32.totalorder %s16, 2
      // Predicated region
      $region21: #{distilbert_mlm_forward.8} parent=5 // pred_check
        %p148 = pneg %p147
      $region22: #{distilbert_mlm_forward.8} parent=5 // pred_check_branch
        %150 = sbr.rel (%p148) target = $region24
      $region23: #{distilbert_mlm_forward.8} parent=5 // pred_region
        // Predicated region
        $region25: #{distilbert_mlm_forward.8} parent=23 // pred_check
          %p151 = pneg %p36
        $region26: #{distilbert_mlm_forward.8} parent=23 // pred_check_branch
          %153 = sbr.rel (%p151) target = $region28
        $region27: #{distilbert_mlm_forward.8} parent=23 // pred_region
          %s154 = sand.u32 %s26, 1
          %s155 = scalar_lea.sflag [#allocation3], %s154
          %s156 = sand.u32 %s26, 1
          %s157 = smul.addr %s156, 16
          %s158 = scalar_lea.vmem [#allocation2], %s157
          %s160 = ssub.s32 256, 256
          %161 = vsyncadd %s155, %s160
          %s162 = smul.addr %s16, 4
          %s163 = smul.addr %s162, 64
          %s164 = scalar_lea.hbm %s0, %s163
          %s165 = sshll.u32 %s158, 4
          %s166 = int_to_ptr.vmem [resolvable:$true] %s165
          %171 = dma.hbm_to_vmem [thread:$0]  %s164, 256, %s166, %s155, 64, 64, 4
        $region28: #{distilbert_mlm_forward.8} parent=23 // pred_fallthru
          _
      $region24: #{distilbert_mlm_forward.8} parent=5 // pred_fallthru
        _
      %p172 = scmp.le.s32.totalorder 1, %s16
      %p173 = scmp.lt.s32.totalorder %s16, 3
      %p174 = pnand %p172, %p173
      %p175 = pneg %p174
      // Predicated region
      $region29: #{distilbert_mlm_forward.8} parent=5 // pred_check
        _
      $region30: #{distilbert_mlm_forward.8} parent=5 // pred_check_branch
        %177 = sbr.rel (%p174) target = $region32
      $region31: #{distilbert_mlm_forward.8} parent=5 // pred_region
        %s178 = ssub.s32 %s16, 1
        %s179 = sand.u32 %s29, 1
        %s180 = scalar_lea.sflag [#allocation3], %s179
        %s181 = sand.u32 %s29, 1
        %s182 = smul.addr %s181, 16
        %s183 = scalar_lea.vmem [#allocation2], %s182
        // Predicated region
        $region33: #{distilbert_mlm_forward.8} parent=31 // pred_check
          %p184 = pneg %p42
        $region34: #{distilbert_mlm_forward.8} parent=31 // pred_check_branch
          %186 = sbr.rel (%p184) target = $region36
        $region35: #{distilbert_mlm_forward.8} parent=31 // pred_region
          %187 = dma.done %s180, 256
        $region36: #{distilbert_mlm_forward.8} parent=31 // pred_fallthru
          _
        // Predicated region
        $region37: #{distilbert_mlm_forward.8} parent=31 // pred_check
          %p188 = pneg %p63
        $region38: #{distilbert_mlm_forward.8} parent=31 // pred_check_branch
          %190 = sbr.rel (%p188) target = $region40
        $region39: #{distilbert_mlm_forward.8} parent=31 // pred_region
          %191 = dma.done [#allocation6], 16
        $region40: #{distilbert_mlm_forward.8} parent=31 // pred_fallthru
          _
        // Predicated region
        $region41: #{distilbert_mlm_forward.8} parent=31 // pred_check
          %p192 = pneg %p84
        $region42: #{distilbert_mlm_forward.8} parent=31 // pred_check_branch
          %194 = sbr.rel (%p192) target = $region44
        $region43: #{distilbert_mlm_forward.8} parent=31 // pred_region
          %195 = dma.done [#allocation6], 16
        $region44: #{distilbert_mlm_forward.8} parent=31 // pred_fallthru
          _
        %s196 = sand.u32 %s29, 1
        %s197 = scalar_lea.sflag [#allocation3], %s196
        %s198 = sand.u32 %s29, 1
        %s199 = smul.addr %s198, 16
        %s200 = scalar_lea.vmem [#allocation2], %s199
        %p201 = pneg %p42
        %p202 = pneg %p39
        %p203 = pneg %p63
        %p204 = pneg %p60
        %p205 = pneg %p84
        %p206 = pneg %p81
        %p207 = pneg %p110
        %p208 = pneg %p107
        %s209 = sand.u32 %s97, 1
        %s210 = scalar_lea.sflag [#allocation4], %s209
        %s211 = sand.u32 %s97, 1
        %s212 = smul.addr %s211, 16
        %s213 = scalar_lea.vmem [#allocation8], %s212
        %v214 = vld [vmem:[%s183] sm:$0xf]
        %v215 = vld [vmem:[%s183 + $0x4] sm:$0xf]
        %v216 = vld [vmem:[%s183 + $0x8] sm:$0xf]
        %v217 = vld [vmem:[%s183 + $0xc] sm:$0xf]
        %v218 = vunpack.c.l.bf16 %v214
        %v219 = vunpack.c.l.bf16 %v215
        %v220 = vunpack.c.l.bf16 %v216
        %v221 = vunpack.c.l.bf16 %v217
        %v222 = vld [vmem:[#allocation5] sm:$0x1]
        %v223 = vld [vmem:[#allocation7] sm:$0x1]
        %224 = vadd.xlane.f32.xlu0 %v218
        %v225 = vpop.xlane.xlu0 %224
        %226 = vadd.xlane.f32.xlu0 %v219
        %v227 = vpop.xlane.xlu0 %226
        %228 = vadd.xlane.f32.xlu0 %v220
        %v229 = vpop.xlane.xlu0 %228
        %230 = vadd.xlane.f32.xlu0 %v221
        %v231 = vpop.xlane.xlu0 %230
        %v232 = vrcp.pop 128.0
        %v233 = vmul.f32 %v225, %v232
        %v234 = vmul.f32 %v227, %v232
        %v235 = vmul.f32 %v229, %v232
        %v236 = vmul.f32 %v231, %v232
        %v237 = vsub.f32 %v218, %v233
        %v238 = vsub.f32 %v219, %v234
        %v239 = vsub.f32 %v220, %v235
        %v240 = vsub.f32 %v221, %v236
        %v241 = vmul.f32 %v237, %v237
        %v242 = vmul.f32 %v238, %v238
        %v243 = vmul.f32 %v239, %v239
        %v244 = vmul.f32 %v240, %v240
        %245 = vadd.xlane.f32.xlu0 %v241
        %v246 = vpop.xlane.xlu0 %245
        %247 = vadd.xlane.f32.xlu0 %v242
        %v248 = vpop.xlane.xlu0 %247
        %249 = vadd.xlane.f32.xlu0 %v243
        %v250 = vpop.xlane.xlu0 %249
        %251 = vadd.xlane.f32.xlu0 %v244
        %v252 = vpop.xlane.xlu0 %251
        %v253 = vmul.f32 %v246, %v232
        %v254 = vmul.f32 %v248, %v232
        %v255 = vmul.f32 %v250, %v232
        %v256 = vmul.f32 %v252, %v232
        %v257 = vadd.f32 %v253, 1e-12
        %v258 = vadd.f32 %v254, 1e-12
        %v259 = vadd.f32 %v255, 1e-12
        %v260 = vadd.f32 %v256, 1e-12
        %v261 = vrsqrt.pop %v257
        %v262 = vrsqrt.pop %v258
        %v263 = vrsqrt.pop %v259
        %v264 = vrsqrt.pop %v260
        %v265 = vmul.f32 %v237, %v261
        %v266 = vmul.f32 %v238, %v262
        %v267 = vmul.f32 %v239, %v263
        %v268 = vmul.f32 %v240, %v264
        %v270 = vlaneseq
        %v271 = vshrl.u32 %v270, 7
        %v272 = vsub.s32 0, %v271
        %v273 = vrot.slane %v222, %v272
        %v275 = vmul.f32 %v265, %v273
        %v276 = vmul.f32 %v266, %v273
        %v277 = vmul.f32 %v267, %v273
        %v278 = vmul.f32 %v268, %v273
        %v280 = vlaneseq
        %v281 = vshrl.u32 %v280, 7
        %v282 = vsub.s32 0, %v281
        %v283 = vrot.slane %v223, %v282
        %v285 = vadd.f32 %v275, %v283
        %v286 = vadd.f32 %v276, %v283
        %v287 = vadd.f32 %v277, %v283
        %v288 = vadd.f32 %v278, %v283
        %v289 = vmul.f32 %v285, 0.5
        %v290 = vmul.f32 %v286, 0.5
        %v291 = vmul.f32 %v287, 0.5
        %v292 = vmul.f32 %v288, 0.5
        %v293 = vmul.f32 %v285, 0.70710677
        %v294 = vmul.f32 %v286, 0.70710677
        %v295 = vmul.f32 %v287, 0.70710677
        %v296 = vmul.f32 %v288, 0.70710677
        %v297 = vand.u32 2147483647, %v293
        %v298 = vand.u32 2147483647, %v294
        %v299 = vand.u32 2147483647, %v295
        %v300 = vand.u32 2147483647, %v296
        %v301 = vmul.f32 %v297, 0.3275911
        %v302 = vmul.f32 %v298, 0.3275911
        %v303 = vmul.f32 %v299, 0.3275911
        %v304 = vmul.f32 %v300, 0.3275911
        %v305 = vadd.f32 %v301, 1.0
        %v306 = vadd.f32 %v302, 1.0
        %v307 = vadd.f32 %v303, 1.0
        %v308 = vadd.f32 %v304, 1.0
        %v309 = vrcp.pop %v305
        %v310 = vmul.f32 1.0, %v309
        %v311 = vrcp.pop %v306
        %v312 = vmul.f32 1.0, %v311
        %v313 = vrcp.pop %v307
        %v314 = vmul.f32 1.0, %v313
        %v315 = vrcp.pop %v308
        %v316 = vmul.f32 1.0, %v315
        %v317 = vmul.f32 %v310, 1.0614054
        %v318 = vmul.f32 %v312, 1.0614054
        %v319 = vmul.f32 %v314, 1.0614054
        %v320 = vmul.f32 %v316, 1.0614054
        %v321 = vadd.f32 %v317, -1.4531521
        %v322 = vadd.f32 %v318, -1.4531521
        %v323 = vadd.f32 %v319, -1.4531521
        %v324 = vadd.f32 %v320, -1.4531521
        %v325 = vmul.f32 %v321, %v310
        %v326 = vmul.f32 %v322, %v312
        %v327 = vmul.f32 %v323, %v314
        %v328 = vmul.f32 %v324, %v316
        %v329 = vadd.f32 %v325, 1.4214138
        %v330 = vadd.f32 %v326, 1.4214138
        %v331 = vadd.f32 %v327, 1.4214138
        %v332 = vadd.f32 %v328, 1.4214138
        %v333 = vmul.f32 %v329, %v310
        %v334 = vmul.f32 %v330, %v312
        %v335 = vmul.f32 %v331, %v314
        %v336 = vmul.f32 %v332, %v316
        %v337 = vadd.f32 %v333, -0.28449672
        %v338 = vadd.f32 %v334, -0.28449672
        %v339 = vadd.f32 %v335, -0.28449672
        %v340 = vadd.f32 %v336, -0.28449672
        %v341 = vmul.f32 %v337, %v310
        %v342 = vmul.f32 %v338, %v312
        %v343 = vmul.f32 %v339, %v314
        %v344 = vmul.f32 %v340, %v316
        %v345 = vadd.f32 %v341, 0.2548296
        %v346 = vadd.f32 %v342, 0.2548296
        %v347 = vadd.f32 %v343, 0.2548296
        %v348 = vadd.f32 %v344, 0.2548296
        %v349 = vmul.f32 %v345, %v310
        %v350 = vmul.f32 %v346, %v312
        %v351 = vmul.f32 %v347, %v314
        %v352 = vmul.f32 %v348, %v316
        %v353 = vsub.f32 0.0, %v297
        %v354 = vsub.f32 0.0, %v298
        %v355 = vsub.f32 0.0, %v299
        %v356 = vsub.f32 0.0, %v300
        %v357 = vmul.f32 %v353, %v297
        %v358 = vmul.f32 %v354, %v298
        %v359 = vmul.f32 %v355, %v299
        %v360 = vmul.f32 %v356, %v300
        %v361 = vmul.f32 %v357, 1.442695
        %v362 = vpow.pop %v361
        %v363 = vmul.f32 %v358, 1.442695
        %v364 = vpow.pop %v363
        %v365 = vmul.f32 %v359, 1.442695
        %v366 = vpow.pop %v365
        %v367 = vmul.f32 %v360, 1.442695
        %v368 = vpow.pop %v367
        %v369 = vmul.f32 %v349, %v362
        %v370 = vmul.f32 %v350, %v364
        %v371 = vmul.f32 %v351, %v366
        %v372 = vmul.f32 %v352, %v368
        %v373 = vsub.f32 1.0, %v369
        %v374 = vsub.f32 1.0, %v370
        %v375 = vsub.f32 1.0, %v371
        %v376 = vsub.f32 1.0, %v372
        %vm377 = vcmp.ge.f32.partialorder %v293, 0.0
        %vm378 = vcmp.ge.f32.partialorder %v294, 0.0
        %vm379 = vcmp.ge.f32.partialorder %v295, 0.0
        %vm380 = vcmp.ge.f32.partialorder %v296, 0.0
        %v381 = vsub.f32 0.0, %v373
        %v382 = vsub.f32 0.0, %v374
        %v383 = vsub.f32 0.0, %v375
        %v384 = vsub.f32 0.0, %v376
        %v385 = vsel %vm377, %v373, %v381
        %v386 = vsel %vm378, %v374, %v382
        %v387 = vsel %vm379, %v375, %v383
        %v388 = vsel %vm380, %v376, %v384
        %v389 = vadd.f32 %v385, 1.0
        %v390 = vadd.f32 %v386, 1.0
        %v391 = vadd.f32 %v387, 1.0
        %v392 = vadd.f32 %v388, 1.0
        %v393 = vmul.f32 %v289, %v389
        %v394 = vmul.f32 %v290, %v390
        %v395 = vmul.f32 %v291, %v391
        %v396 = vmul.f32 %v292, %v392
        %v397 = vpack.c.bf16 %v394, %v393
        %v398 = vpack.c.bf16 %v396, %v395
        %v401 = vunpack.c.l.b16 %v397
        %v402 = vunpack.c.h.b16 %v397
        %v403 = vunpack.c.l.b16 %v398
        %v404 = vunpack.c.h.b16 %v398
        %v405 = vpack.c.b16 %v401, %v401
        %v406 = vpack.c.b16 %v402, %v402
        %v407 = vpack.c.b16 %v403, %v403
        %v408 = vpack.c.b16 %v404, %v404
        %413 = vst [vmem:[%s213] sm:$0xf] %v405
        %414 = vst [vmem:[%s213 + $0x4] sm:$0xf] %v406
        %415 = vst [vmem:[%s213 + $0x8] sm:$0xf] %v407
        %416 = vst [vmem:[%s213 + $0xc] sm:$0xf] %v408
        %s417 = sand.u32 %s97, 1
        %s418 = scalar_lea.sflag [#allocation4], %s417
        %s419 = sand.u32 %s97, 1
        %s420 = smul.addr %s419, 16
        %s421 = scalar_lea.vmem [#allocation8], %s420
        // Predicated region
        $region45: #{distilbert_mlm_forward.8} parent=31 // pred_check
          %p422 = pneg %p107
        $region46: #{distilbert_mlm_forward.8} parent=31 // pred_check_branch
          %424 = sbr.rel (%p422) target = $region48
        $region47: #{distilbert_mlm_forward.8} parent=31 // pred_region
          %s426 = ssub.s32 256, 256
          %427 = vsyncadd %s418, %s426
          %s428 = smul.addr %s21, 4
          %s429 = smul.addr %s428, 64
          %s430 = scalar_lea.hbm %s3, %s429
          %s431 = sshll.u32 %s421, 4
          %s432 = int_to_ptr.vmem [resolvable:$true] %s431
          %437 = dma.vmem_to_hbm [thread:$0]  %s432, 256, %s430, %s418, 64, 64, 4
        $region48: #{distilbert_mlm_forward.8} parent=31 // pred_fallthru
          _
      $region32: #{distilbert_mlm_forward.8} parent=5 // pred_fallthru
        _
      %p438 = scmp.le.s32.totalorder 2, %s16
      // Predicated region
      $region49: #{distilbert_mlm_forward.8} parent=5 // pred_check
        %p439 = pneg %p438
      $region50: #{distilbert_mlm_forward.8} parent=5 // pred_check_branch
        %441 = sbr.rel (%p439) target = $region52
      $region51: #{distilbert_mlm_forward.8} parent=5 // pred_region
        %s442 = ssub.s32 %s16, 2
        // Predicated region
        $region53: #{distilbert_mlm_forward.8} parent=51 // pred_check
          %p443 = pneg %p113
        $region54: #{distilbert_mlm_forward.8} parent=51 // pred_check_branch
          %445 = sbr.rel (%p443) target = $region56
        $region55: #{distilbert_mlm_forward.8} parent=51 // pred_region
          %s446 = sand.u32 %s98, 1
          %s447 = scalar_lea.sflag [#allocation4], %s446
          %s448 = sand.u32 %s98, 1
          %s449 = smul.addr %s448, 16
          %s450 = scalar_lea.vmem [#allocation8], %s449
          %451 = dma.done %s447, 256
        $region56: #{distilbert_mlm_forward.8} parent=51 // pred_fallthru
          _
      $region52: #{distilbert_mlm_forward.8} parent=5 // pred_fallthru
        _
    $region6: #{distilbert_mlm_forward.8} parent=1 // loop_footer
      %s20 = sadd.s32 1, %s16
    $region7: #{distilbert_mlm_forward.8} parent=1 // loop_footer_branch
      %15 = sbr.rel target = $region3
    $region8: #{distilbert_mlm_forward.8} parent=1 // loop_exit
      _
    %452 = vsyncpa [#allocation3], 1
    %s453 = scalar_lea.sflag [#allocation3], 1
    %454 = vsyncpa %s453, 1
    %455 = vsyncpa [#allocation6], 1
    %456 = vsyncpa [#allocation4], 1
    %s457 = scalar_lea.sflag [#allocation4], 1
    %458 = vsyncpa %s457, 1

// kernel: distilbert_mlm_forward.6
$region0: #{distilbert_mlm_forward.6}
  #allocation0 [shape = 'u32[]', space=smem, size = 0x4, offset = 0x4, fixed_abs, tag = 'smem constant byte address 0x4 - core index']
  #allocation1 [shape = 'u32[144,128]{1,0:T(1,128)}', space=vmem, size = 0x12000, scoped, tag = 'internal scratch']
  #allocation2 [shape = 'bf16[4,32,32]{2,1,0:T(16,128)(2,1)}', space=vmem, size = 0x8000, scoped, tag = 'scratch operand']
  #allocation3 [shape = 'bf16[4,32,32]{2,1,0:T(16,128)(2,1)}', space=vmem, size = 0x8000, scoped, tag = 'scratch operand']
  #allocation4 [shape = 'bf16[4,32,32]{2,1,0:T(16,128)(2,1)}', space=vmem, size = 0x8000, scoped, tag = 'scratch operand']
  %s0 = inlined_call_operand.hbm [shape: bf16[2,32,128], index: 0, kind: input, shape index: {}]
  %s1 = inlined_call_operand.hbm [shape: bf16[128,384], index: 1, kind: input, shape index: {}]
  %s2 = inlined_call_operand.hbm [shape: f32[1,384], index: 2, kind: input, shape index: {}]
  %s3 = inlined_call_operand.hbm [shape: bf16[4,32,128], index: 3, kind: input, shape index: {}]
  %s4 = inlined_call_operand.hbm [shape: bf16[128,256], index: 4, kind: input, shape index: {}]
  %s5 = inlined_call_operand.hbm [shape: f32[1,256], index: 5, kind: input, shape index: {}]
  %s6 = inlined_call_operand.hbm [shape: bf16[256,128], index: 6, kind: input, shape index: {}]
  %s7 = inlined_call_operand.hbm [shape: f32[8,128], index: 7, kind: input, shape index: {}]
  %s8 = inlined_call_operand.hbm [shape: bf16[2,32,128], index: 8, kind: output, shape index: {}]
  %s9 = sld [smem:[#allocation0]]
  $region101: #{distilbert_mlm_forward.6} parent=0
    _
  %s11 = ssub.s32 1, %s9
  %s12 = scalar_select 0, %s11, %s9
  $region1: #{distilbert_mlm_forward.6} parent=0
    #allocation5 [shape = 'u8[16384]{0}', space=vmem, size = 0x4000, scoped, tag = 'input window, operand 0']
    #allocation6 [shape = 's32[2]{0}', space=sflag, size = 0x8, scoped, tag = 'scoped memory for distilbert_mlm_forward.6']
    #allocation7 [shape = 's32[2]{0}', space=sflag, size = 0x8, scoped, tag = 'scoped memory for distilbert_mlm_forward.6']
    #allocation8 [shape = 'u8[98304]{0}', space=vmem, size = 0x18000, scoped, tag = 'input window, operand 1, single buffered']
    #allocation9 [shape = 's32[1]{0}', space=sflag, size = 0x4, scoped, tag = 'scoped memory for distilbert_mlm_forward.6']
    #allocation10 [shape = 'u8[1536]{0}', space=vmem, size = 0x800, scoped, tag = 'input window, operand 2, single buffered']
    #allocation11 [shape = 'u8[32768]{0}', space=vmem, size = 0x8000, scoped, tag = 'input window, operand 3, single buffered']
    #allocation12 [shape = 's32[1]{0}', space=sflag, size = 0x4, scoped, tag = 'scoped memory for distilbert_mlm_forward.6']
    #allocation13 [shape = 'u8[65536]{0}', space=vmem, size = 0x10000, scoped, tag = 'input window, operand 4, single buffered']
    #allocation14 [shape = 'u8[1024]{0}', space=vmem, size = 0x400, scoped, tag = 'input window, operand 5, single buffered']
    #allocation15 [shape = 's32[1]{0}', space=sflag, size = 0x4, scoped, tag = 'scoped memory for distilbert_mlm_forward.6']
    #allocation16 [shape = 'u8[65536]{0}', space=vmem, size = 0x10000, scoped, tag = 'input window, operand 6, single buffered']
    #allocation17 [shape = 'u8[4096]{0}', space=vmem, size = 0x1000, scoped, tag = 'input window, operand 7, single buffered']
    #allocation18 [shape = 's32[1]{0}', space=sflag, size = 0x4, scoped, tag = 'scoped memory for distilbert_mlm_forward.6']
    #allocation19 [shape = 'u8[8192]{0}', space=vmem, size = 0x2000, scoped, tag = 'output window, operand 0']
    %13 = vsyncpa [#allocation6], 0
    %s14 = scalar_lea.sflag [#allocation6], 1
    %15 = vsyncpa %s14, 0
    %16 = vsyncpa [#allocation9], 0
    %17 = vsyncpa [#allocation12], 0
    %18 = vsyncpa [#allocation15], 0
    %19 = vsyncpa [#allocation18], 0
    %20 = vsyncpa [#allocation7], 0
    %s21 = scalar_lea.sflag [#allocation7], 1
    %22 = vsyncpa %s21, 0
    loop: start=0, step=1, limit=6
    $region2: #{distilbert_mlm_forward.6} parent=1 // loop_pre_header
      _
    $region3: #{distilbert_mlm_forward.6} parent=1 // loop_header
      %s24 = sphi 0, %s28
      %p25 = scmp.ge.s32.totalorder %s24, 6
      %s31 = sphi 0, %s43
      %s32 = sphi 0, %s39
      %s33 = sphi 0, %s31
      %s34 = sphi 0, %s32
      %s35 = sphi 0, %s33
      %s36 = sphi 0, %s34
      %s46 = sphi 0, %s48
      %s49 = sphi 0, %s46
      %s50 = sphi 0, %s49
      %s66 = sphi 0, %s50
      %s70 = sphi 0, %s70
      %s72 = sphi 0, %s70
      %s73 = sphi 0, %s72
      %s87 = sphi 0, %s73
      %s91 = sphi 0, %s91
      %s93 = sphi 0, %s91
      %s94 = sphi 0, %s93
      %s108 = sphi 0, %s94
      %s112 = sphi 0, %s112
      %s114 = sphi 0, %s112
      %s115 = sphi 0, %s114
      %s129 = sphi 0, %s115
      %s133 = sphi 0, %s133
      %s135 = sphi 0, %s133
      %s136 = sphi 0, %s135
      %s150 = sphi 0, %s136
      %s154 = sphi 0, %s154
      %s156 = sphi 0, %s154
      %s157 = sphi 0, %s156
      %s171 = sphi 0, %s157
      %s175 = sphi 0, %s175
      %s177 = sphi 0, %s175
      %s178 = sphi 0, %s177
      %s192 = sphi 0, %s178
      %s196 = sphi 0, %s196
      %s198 = sphi 0, %s196
      %s199 = sphi 0, %s198
      %s213 = sphi 0, %s199
      %s221 = sphi 0, %s223
      %s224 = sphi 0, %s221
      %s225 = sphi 0, %s224
      %s241 = sphi 0, %s225
    $region4: #{distilbert_mlm_forward.6} parent=1 // loop_header_branch
      %27 = sbr.rel (%p25) target = $region8
    $region5: #{distilbert_mlm_forward.6} parent=1 // loop_body
      %s29 = ssub.s32 %s24, 1
      %s30 = ssub.s32 %s24, 2
      %s37 = sadd.s32 1, %s32
      %p38 = scmp.ge.s32.totalorder %s37, 2
      %s39 = scalar_select %p38, 0, %s37
      %s40 = sadd.s32 1, %s31
      %s41 = scalar_select %p38, %s40, %s31
      %p42 = scmp.ge.s32.totalorder %s41, 2
      %s43 = scalar_select %p42, 0, %s41
      %s44 = ssub.s32 %s31, %s43
      %p45 = scmp.eq.s32.totalorder %s44, 0
      %s47 = sadd.s32 %s46, 1
      %s48 = scalar_select %p45, %s46, %s47
      %p51 = pneg %p45
      %p52 = scmp.eq.s32.totalorder %s24, 3
      %p53 = por %p51, %p52
      %p54 = scmp.ne.s32.totalorder %s46, %s49
      %p55 = scmp.eq.s32.totalorder %s24, 0
      %p56 = por %p54, %p55
      %p57 = scmp.ne.s32.totalorder %s46, %s49
      %p58 = scmp.eq.s32.totalorder %s29, 3
      %p59 = por %p57, %p58
      %p60 = scmp.ne.s32.totalorder %s49, %s50
      %p61 = scmp.eq.s32.totalorder %s29, 0
      %p62 = por %p60, %p61
      %p63 = scmp.ne.s32.totalorder %s49, %s50
      %p64 = scmp.eq.s32.totalorder %s30, 3
      %p65 = por %p63, %p64
      %p67 = scmp.ne.s32.totalorder %s50, %s66
      %p68 = scmp.eq.s32.totalorder %s30, 0
      %p69 = por %p67, %p68
      %s71 = sadd.s32 %s70, 1
      %p74 = scmp.eq.s32.totalorder %s24, 3
      %p75 = scmp.ne.s32.totalorder %s70, %s72
      %p76 = scmp.eq.s32.totalorder %s24, 0
      %p77 = por %p75, %p76
      %p78 = scmp.ne.s32.totalorder %s70, %s72
      %p79 = scmp.eq.s32.totalorder %s29, 3
      %p80 = por %p78, %p79
      %p81 = scmp.ne.s32.totalorder %s72, %s73
      %p82 = scmp.eq.s32.totalorder %s29, 0
      %p83 = por %p81, %p82
      %p84 = scmp.ne.s32.totalorder %s72, %s73
      %p85 = scmp.eq.s32.totalorder %s30, 3
      %p86 = por %p84, %p85
      %p88 = scmp.ne.s32.totalorder %s73, %s87
      %p89 = scmp.eq.s32.totalorder %s30, 0
      %p90 = por %p88, %p89
      %s92 = sadd.s32 %s91, 1
      %p95 = scmp.eq.s32.totalorder %s24, 3
      %p96 = scmp.ne.s32.totalorder %s91, %s93
      %p97 = scmp.eq.s32.totalorder %s24, 0
      %p98 = por %p96, %p97
      %p99 = scmp.ne.s32.totalorder %s91, %s93
      %p100 = scmp.eq.s32.totalorder %s29, 3
      %p101 = por %p99, %p100
      %p102 = scmp.ne.s32.totalorder %s93, %s94
      %p103 = scmp.eq.s32.totalorder %s29, 0
      %p104 = por %p102, %p103
      %p105 = scmp.ne.s32.totalorder %s93, %s94
      %p106 = scmp.eq.s32.totalorder %s30, 3
      %p107 = por %p105, %p106
      %p109 = scmp.ne.s32.totalorder %s94, %s108
      %p110 = scmp.eq.s32.totalorder %s30, 0
      %p111 = por %p109, %p110
      %s113 = sadd.s32 %s112, 1
      %p116 = scmp.eq.s32.totalorder %s24, 3
      %p117 = scmp.ne.s32.totalorder %s112, %s114
      %p118 = scmp.eq.s32.totalorder %s24, 0
      %p119 = por %p117, %p118
      %p120 = scmp.ne.s32.totalorder %s112, %s114
      %p121 = scmp.eq.s32.totalorder %s29, 3
      %p122 = por %p120, %p121
      %p123 = scmp.ne.s32.totalorder %s114, %s115
      %p124 = scmp.eq.s32.totalorder %s29, 0
      %p125 = por %p123, %p124
      %p126 = scmp.ne.s32.totalorder %s114, %s115
      %p127 = scmp.eq.s32.totalorder %s30, 3
      %p128 = por %p126, %p127
      %p130 = scmp.ne.s32.totalorder %s115, %s129
      %p131 = scmp.eq.s32.totalorder %s30, 0
      %p132 = por %p130, %p131
      %s134 = sadd.s32 %s133, 1
      %p137 = scmp.eq.s32.totalorder %s24, 3
      %p138 = scmp.ne.s32.totalorder %s133, %s135
      %p139 = scmp.eq.s32.totalorder %s24, 0
      %p140 = por %p138, %p139
      %p141 = scmp.ne.s32.totalorder %s133, %s135
      %p142 = scmp.eq.s32.totalorder %s29, 3
      %p143 = por %p141, %p142
      %p144 = scmp.ne.s32.totalorder %s135, %s136
      %p145 = scmp.eq.s32.totalorder %s29, 0
      %p146 = por %p144, %p145
      %p147 = scmp.ne.s32.totalorder %s135, %s136
      %p148 = scmp.eq.s32.totalorder %s30, 3
      %p149 = por %p147, %p148
      %p151 = scmp.ne.s32.totalorder %s136, %s150
      %p152 = scmp.eq.s32.totalorder %s30, 0
      %p153 = por %p151, %p152
      %s155 = sadd.s32 %s154, 1
      %p158 = scmp.eq.s32.totalorder %s24, 3
      %p159 = scmp.ne.s32.totalorder %s154, %s156
      %p160 = scmp.eq.s32.totalorder %s24, 0
      %p161 = por %p159, %p160
      %p162 = scmp.ne.s32.totalorder %s154, %s156
      %p163 = scmp.eq.s32.totalorder %s29, 3
      %p164 = por %p162, %p163
      %p165 = scmp.ne.s32.totalorder %s156, %s157
      %p166 = scmp.eq.s32.totalorder %s29, 0
      %p167 = por %p165, %p166
      %p168 = scmp.ne.s32.totalorder %s156, %s157
      %p169 = scmp.eq.s32.totalorder %s30, 3
      %p170 = por %p168, %p169
      %p172 = scmp.ne.s32.totalorder %s157, %s171
      %p173 = scmp.eq.s32.totalorder %s30, 0
      %p174 = por %p172, %p173
      %s176 = sadd.s32 %s175, 1
      %p179 = scmp.eq.s32.totalorder %s24, 3
      %p180 = scmp.ne.s32.totalorder %s175, %s177
      %p181 = scmp.eq.s32.totalorder %s24, 0
      %p182 = por %p180, %p181
      %p183 = scmp.ne.s32.totalorder %s175, %s177
      %p184 = scmp.eq.s32.totalorder %s29, 3
      %p185 = por %p183, %p184
      %p186 = scmp.ne.s32.totalorder %s177, %s178
      %p187 = scmp.eq.s32.totalorder %s29, 0
      %p188 = por %p186, %p187
      %p189 = scmp.ne.s32.totalorder %s177, %s178
      %p190 = scmp.eq.s32.totalorder %s30, 3
      %p191 = por %p189, %p190
      %p193 = scmp.ne.s32.totalorder %s178, %s192
      %p194 = scmp.eq.s32.totalorder %s30, 0
      %p195 = por %p193, %p194
      %s197 = sadd.s32 %s196, 1
      %p200 = scmp.eq.s32.totalorder %s24, 3
      %p201 = scmp.ne.s32.totalorder %s196, %s198
      %p202 = scmp.eq.s32.totalorder %s24, 0
      %p203 = por %p201, %p202
      %p204 = scmp.ne.s32.totalorder %s196, %s198
      %p205 = scmp.eq.s32.totalorder %s29, 3
      %p206 = por %p204, %p205
      %p207 = scmp.ne.s32.totalorder %s198, %s199
      %p208 = scmp.eq.s32.totalorder %s29, 0
      %p209 = por %p207, %p208
      %p210 = scmp.ne.s32.totalorder %s198, %s199
      %p211 = scmp.eq.s32.totalorder %s30, 3
      %p212 = por %p210, %p211
      %p214 = scmp.ne.s32.totalorder %s199, %s213
      %p215 = scmp.eq.s32.totalorder %s30, 0
      %p216 = por %p214, %p215
      %s217 = ssub.s32 %s31, %s43
      %s218 = ssub.s32 %s32, %s39
      %s219 = sor.u32 %s217, %s218
      %p220 = scmp.eq.s32.totalorder %s219, 0
      %s222 = sadd.s32 %s221, 1
      %s223 = scalar_select %p220, %s221, %s222
      %p226 = pneg %p220
      %p227 = scmp.eq.s32.totalorder %s24, 3
      %p228 = por %p226, %p227
      %p229 = scmp.ne.s32.totalorder %s221, %s224
      %p230 = scmp.eq.s32.totalorder %s24, 0
      %p231 = por %p229, %p230
      %p232 = scmp.ne.s32.totalorder %s221, %s224
      %p233 = scmp.eq.s32.totalorder %s29, 3
      %p234 = por %p232, %p233
      %p235 = scmp.ne.s32.totalorder %s224, %s225
      %p236 = scmp.eq.s32.totalorder %s29, 0
      %p237 = por %p235, %p236
      %p238 = scmp.ne.s32.totalorder %s224, %s225
      %p239 = scmp.eq.s32.totalorder %s30, 3
      %p240 = por %p238, %p239
      %p242 = scmp.ne.s32.totalorder %s225, %s241
      %p243 = scmp.eq.s32.totalorder %s30, 0
      %p244 = por %p242, %p243
      %p245 = scmp.le.s32.totalorder 1, %s24
      %p246 = scmp.lt.s32.totalorder %s24, 5
      %p247 = pnand %p245, %p246
      %p248 = pneg %p247
      // Predicated region
      $region9: #{distilbert_mlm_forward.6} parent=5 // pred_check
        _
      $region10: #{distilbert_mlm_forward.6} parent=5 // pred_check_branch
        %250 = sbr.rel (%p247) target = $region12
      $region11: #{distilbert_mlm_forward.6} parent=5 // pred_region
        %s251 = ssub.s32 %s24, 1
        // Predicated region
        $region13: #{distilbert_mlm_forward.6} parent=11 // pred_check
          %p252 = pneg %p83
        $region14: #{distilbert_mlm_forward.6} parent=11 // pred_check_branch
          %254 = sbr.rel (%p252) target = $region16
        $region15: #{distilbert_mlm_forward.6} parent=11 // pred_region
          %s256 = ssub.s32 3072, 3072
          %257 = vsyncadd [#allocation9], %s256
          %s258 = sshll.u32 [#allocation8], 4
          %s259 = int_to_ptr.vmem [resolvable:$true] %s258
          %264 = dma.hbm_to_vmem [thread:$0]  %s1, 3072, %s259, [#allocation9], 192, 192, 12
        $region16: #{distilbert_mlm_forward.6} parent=11 // pred_fallthru
          _
        // Predicated region
        $region17: #{distilbert_mlm_forward.6} parent=11 // pred_check
          %p265 = pneg %p104
        $region18: #{distilbert_mlm_forward.6} parent=11 // pred_check_branch
          %267 = sbr.rel (%p265) target = $region20
        $region19: #{distilbert_mlm_forward.6} parent=11 // pred_region
          %s269 = ssub.s32 48, 48
          %270 = vsyncadd [#allocation9], %s269
          %s272 = sshll.u32 [#allocation10], 4
          %s273 = int_to_ptr.vmem [resolvable:$true] %s272
          %275 = dma.hbm_to_vmem [thread:$0]  %s2, 48, %s273, [#allocation9]
        $region20: #{distilbert_mlm_forward.6} parent=11 // pred_fallthru
          _
        // Predicated region
        $region21: #{distilbert_mlm_forward.6} parent=11 // pred_check
          %p276 = pneg %p125
        $region22: #{distilbert_mlm_forward.6} parent=11 // pred_check_branch
          %278 = sbr.rel (%p276) target = $region24
        $region23: #{distilbert_mlm_forward.6} parent=11 // pred_region
          %s280 = ssub.s32 1024, 1024
          %281 = vsyncadd [#allocation12], %s280
          %s282 = sshll.u32 [#allocation11], 4
          %s283 = int_to_ptr.vmem [resolvable:$true] %s282
          %288 = dma.hbm_to_vmem [thread:$0]  %s3, 1024, %s283, [#allocation12], 64, 64, 4
        $region24: #{distilbert_mlm_forward.6} parent=11 // pred_fallthru
          _
        // Predicated region
        $region25: #{distilbert_mlm_forward.6} parent=11 // pred_check
          %p289 = pneg %p146
        $region26: #{distilbert_mlm_forward.6} parent=11 // pred_check_branch
          %291 = sbr.rel (%p289) target = $region28
        $region27: #{distilbert_mlm_forward.6} parent=11 // pred_region
          %s293 = ssub.s32 2048, 2048
          %294 = vsyncadd [#allocation12], %s293
          %s295 = sshll.u32 [#allocation13], 4
          %s296 = int_to_ptr.vmem [resolvable:$true] %s295
          %301 = dma.hbm_to_vmem [thread:$0]  %s4, 2048, %s296, [#allocation12], 128, 128, 8
        $region28: #{distilbert_mlm_forward.6} parent=11 // pred_fallthru
          _
        // Predicated region
        $region29: #{distilbert_mlm_forward.6} parent=11 // pred_check
          %p302 = pneg %p167
        $region30: #{distilbert_mlm_forward.6} parent=11 // pred_check_branch
          %304 = sbr.rel (%p302) target = $region32
        $region31: #{distilbert_mlm_forward.6} parent=11 // pred_region
          %s306 = ssub.s32 32, 32
          %307 = vsyncadd [#allocation15], %s306
          %s309 = sshll.u32 [#allocation14], 4
          %s310 = int_to_ptr.vmem [resolvable:$true] %s309
          %312 = dma.hbm_to_vmem [thread:$0]  %s5, 32, %s310, [#allocation15]
        $region32: #{distilbert_mlm_forward.6} parent=11 // pred_fallthru
          _
        // Predicated region
        $region33: #{distilbert_mlm_forward.6} parent=11 // pred_check
          %p313 = pneg %p188
        $region34: #{distilbert_mlm_forward.6} parent=11 // pred_check_branch
          %315 = sbr.rel (%p313) target = $region36
        $region35: #{distilbert_mlm_forward.6} parent=11 // pred_region
          %s317 = ssub.s32 2048, 2048
          %318 = vsyncadd [#allocation15], %s317
          %s319 = sshll.u32 [#allocation16], 4
          %s320 = int_to_ptr.vmem [resolvable:$true] %s319
          %325 = dma.hbm_to_vmem [thread:$0]  %s6, 2048, %s320, [#allocation15], 64, 64, 4
        $region36: #{distilbert_mlm_forward.6} parent=11 // pred_fallthru
          _
        // Predicated region
        $region37: #{distilbert_mlm_forward.6} parent=11 // pred_check
          %p326 = pneg %p209
        $region38: #{distilbert_mlm_forward.6} parent=11 // pred_check_branch
          %328 = sbr.rel (%p326) target = $region40
        $region39: #{distilbert_mlm_forward.6} parent=11 // pred_region
          %s330 = ssub.s32 128, 128
          %331 = vsyncadd [#allocation18], %s330
          %s333 = sshll.u32 [#allocation17], 4
          %s334 = int_to_ptr.vmem [resolvable:$true] %s333
          %336 = dma.hbm_to_vmem [thread:$0]  %s7, 128, %s334, [#allocation18]
        $region40: #{distilbert_mlm_forward.6} parent=11 // pred_fallthru
          _
      $region12: #{distilbert_mlm_forward.6} parent=5 // pred_fallthru
        _
      %p337 = scmp.lt.s32.totalorder %s24, 4
      // Predicated region
      $region41: #{distilbert_mlm_forward.6} parent=5 // pred_check
        %p338 = pneg %p337
      $region42: #{distilbert_mlm_forward.6} parent=5 // pred_check_branch
        %340 = sbr.rel (%p338) target = $region44
      $region43: #{distilbert_mlm_forward.6} parent=5 // pred_region
        // Predicated region
        $region45: #{distilbert_mlm_forward.6} parent=43 // pred_check
          %p341 = pneg %p56
        $region46: #{distilbert_mlm_forward.6} parent=43 // pred_check_branch
          %343 = sbr.rel (%p341) target = $region48
        $region47: #{distilbert_mlm_forward.6} parent=43 // pred_region
          %s344 = sand.u32 %s46, 1
          %s345 = scalar_lea.sflag [#allocation6], %s344
          %s346 = sand.u32 %s46, 1
          %s347 = smul.addr %s346, 16
          %s348 = scalar_lea.vmem [#allocation5], %s347
          %s350 = ssub.s32 256, 256
          %351 = vsyncadd %s345, %s350
          %s352 = smul.addr %s31, 4
          %s353 = smul.addr %s352, 64
          %s354 = scalar_lea.hbm %s0, %s353
          %s355 = sshll.u32 %s348, 4
          %s356 = int_to_ptr.vmem [resolvable:$true] %s355
          %361 = dma.hbm_to_vmem [thread:$0]  %s354, 256, %s356, %s345, 64, 64, 4
        $region48: #{distilbert_mlm_forward.6} parent=43 // pred_fallthru
          _
      $region44: #{distilbert_mlm_forward.6} parent=5 // pred_fallthru
        _
      %p362 = scmp.le.s32.totalorder 1, %s24
      %p363 = scmp.lt.s32.totalorder %s24, 5
      %p364 = pnand %p362, %p363
      %p365 = pneg %p364
      // Predicated region
      $region49: #{distilbert_mlm_forward.6} parent=5 // pred_check
        _
      $region50: #{distilbert_mlm_forward.6} parent=5 // pred_check_branch
        %367 = sbr.rel (%p364) target = $region52
      $region51: #{distilbert_mlm_forward.6} parent=5 // pred_region
        %s368 = ssub.s32 %s24, 1
        %s369 = sand.u32 %s49, 1
        %s370 = scalar_lea.sflag [#allocation6], %s369
        %s371 = sand.u32 %s49, 1
        %s372 = smul.addr %s371, 16
        %s373 = scalar_lea.vmem [#allocation5], %s372
        // Predicated region
        $region53: #{distilbert_mlm_forward.6} parent=51 // pred_check
          %p374 = pneg %p62
        $region54: #{distilbert_mlm_forward.6} parent=51 // pred_check_branch
          %376 = sbr.rel (%p374) target = $region56
        $region55: #{distilbert_mlm_forward.6} parent=51 // pred_region
          %377 = dma.done %s370, 256
        $region56: #{distilbert_mlm_forward.6} parent=51 // pred_fallthru
          _
        // Predicated region
        $region57: #{distilbert_mlm_forward.6} parent=51 // pred_check
          %p378 = pneg %p83
        $region58: #{distilbert_mlm_forward.6} parent=51 // pred_check_branch
          %380 = sbr.rel (%p378) target = $region60
        $region59: #{distilbert_mlm_forward.6} parent=51 // pred_region
          %381 = dma.done [#allocation9], 3072
        $region60: #{distilbert_mlm_forward.6} parent=51 // pred_fallthru
          _
        // Predicated region
        $region61: #{distilbert_mlm_forward.6} parent=51 // pred_check
          %p382 = pneg %p104
        $region62: #{distilbert_mlm_forward.6} parent=51 // pred_check_branch
          %384 = sbr.rel (%p382) target = $region64
        $region63: #{distilbert_mlm_forward.6} parent=51 // pred_region
          %385 = dma.done [#allocation9], 48
        $region64: #{distilbert_mlm_forward.6} parent=51 // pred_fallthru
          _
        // Predicated region
        $region65: #{distilbert_mlm_forward.6} parent=51 // pred_check
          %p386 = pneg %p125
        $region66: #{distilbert_mlm_forward.6} parent=51 // pred_check_branch
          %388 = sbr.rel (%p386) target = $region68
        $region67: #{distilbert_mlm_forward.6} parent=51 // pred_region
          %389 = dma.done [#allocation12], 1024
        $region68: #{distilbert_mlm_forward.6} parent=51 // pred_fallthru
          _
        // Predicated region
        $region69: #{distilbert_mlm_forward.6} parent=51 // pred_check
          %p390 = pneg %p146
        $region70: #{distilbert_mlm_forward.6} parent=51 // pred_check_branch
          %392 = sbr.rel (%p390) target = $region72
        $region71: #{distilbert_mlm_forward.6} parent=51 // pred_region
          %393 = dma.done [#allocation12], 2048
        $region72: #{distilbert_mlm_forward.6} parent=51 // pred_fallthru
          _
        // Predicated region
        $region73: #{distilbert_mlm_forward.6} parent=51 // pred_check
          %p394 = pneg %p167
        $region74: #{distilbert_mlm_forward.6} parent=51 // pred_check_branch
          %396 = sbr.rel (%p394) target = $region76
        $region75: #{distilbert_mlm_forward.6} parent=51 // pred_region
          %397 = dma.done [#allocation15], 32
        $region76: #{distilbert_mlm_forward.6} parent=51 // pred_fallthru
          _
        // Predicated region
        $region77: #{distilbert_mlm_forward.6} parent=51 // pred_check
          %p398 = pneg %p188
        $region78: #{distilbert_mlm_forward.6} parent=51 // pred_check_branch
          %400 = sbr.rel (%p398) target = $region80
        $region79: #{distilbert_mlm_forward.6} parent=51 // pred_region
          %401 = dma.done [#allocation15], 2048
        $region80: #{distilbert_mlm_forward.6} parent=51 // pred_fallthru
          _
        // Predicated region
        $region81: #{distilbert_mlm_forward.6} parent=51 // pred_check
          %p402 = pneg %p209
        $region82: #{distilbert_mlm_forward.6} parent=51 // pred_check_branch
          %404 = sbr.rel (%p402) target = $region84
        $region83: #{distilbert_mlm_forward.6} parent=51 // pred_region
          %405 = dma.done [#allocation18], 128
        $region84: #{distilbert_mlm_forward.6} parent=51 // pred_fallthru
          _
        %s406 = sand.u32 %s49, 1
        %s407 = scalar_lea.sflag [#allocation6], %s406
        %s408 = sand.u32 %s49, 1
        %s409 = smul.addr %s408, 16
        %s410 = scalar_lea.vmem [#allocation5], %s409
        %p411 = pneg %p62
        %p412 = pneg %p59
        %p413 = pneg %p83
        %p414 = pneg %p80
        %p415 = pneg %p104
        %p416 = pneg %p101
        %p417 = pneg %p125
        %p418 = pneg %p122
        %p419 = pneg %p146
        %p420 = pneg %p143
        %p421 = pneg %p167
        %p422 = pneg %p164
        %p423 = pneg %p188
        %p424 = pneg %p185
        %p425 = pneg %p209
        %p426 = pneg %p206
        %p427 = pneg %p237
        %p428 = pneg %p234
        %s429 = sand.u32 %s224, 1
        %s430 = scalar_lea.sflag [#allocation7], %s429
        %s431 = sand.u32 %s224, 1
        %s432 = smul.addr %s431, 8
        %s433 = scalar_lea.vmem [#allocation19], %s432
        %s434 = smul.u32 2, %s34
        %v436 = vld [vmem:[#allocation17] sm:$0xff]
        %p437 = scmp.eq.s32.totalorder %s34, 0
        // Predicated region
        $region85: #{distilbert_mlm_forward.6} parent=51 // pred_check
          %p438 = pneg %p437
        $region86: #{distilbert_mlm_forward.6} parent=51 // pred_check_branch
          %440 = sbr.rel (%p438) target = $region88
        $region87: #{distilbert_mlm_forward.6} parent=51 // pred_region
          %v441 = vld [vmem:[%s373] sm:$0xf]
          %v442 = vld [vmem:[%s373 + $0x4] sm:$0xf]
          %v443 = vld [vmem:[%s373 + $0x8] sm:$0xf]
          %v444 = vld [vmem:[%s373 + $0xc] sm:$0xf]
          %v445 = vld [vmem:[#allocation8] sm:$0xff]
          %v446 = vld [vmem:[#allocation8 + $0x8] sm:$0xf]
          %v447 = vld [vmem:[#allocation8 + $0xc] sm:$0xff]
          %v448 = vld [vmem:[#allocation8 + $0x14] sm:$0xf]
          %v449 = vld [vmem:[#allocation8 + $0x18] sm:$0xff]
          %v450 = vld [vmem:[#allocation8 + $0x20] sm:$0xf]
          %v451 = vld [vmem:[#allocation8 + $0x24] sm:$0xff]
          %v452 = vld [vmem:[#allocation8 + $0x2c] sm:$0xf]
          %v453 = vld [vmem:[#allocation8 + $0x30] sm:$0xff]
          %v454 = vld [vmem:[#allocation8 + $0x38] sm:$0xf]
          %v455 = vld [vmem:[#allocation8 + $0x3c] sm:$0xff]
          %v456 = vld [vmem:[#allocation8 + $0x44] sm:$0xf]
          %v457 = vld [vmem:[#allocation8 + $0x48] sm:$0xff]
          %v458 = vld [vmem:[#allocation8 + $0x50] sm:$0xf]
          %v459 = vld [vmem:[#allocation8 + $0x54] sm:$0xff]
          %v460 = vld [vmem:[#allocation8 + $0x5c] sm:$0xf]
          %v461 = vld [vmem:[#allocation8 + $0x60] sm:$0xff]
          %v462 = vld [vmem:[#allocation8 + $0x68] sm:$0xf]
          %v463 = vld [vmem:[#allocation8 + $0x6c] sm:$0xff]
          %v464 = vld [vmem:[#allocation8 + $0x74] sm:$0xf]
          %v465 = vld [vmem:[#allocation8 + $0x78] sm:$0xff]
          %v466 = vld [vmem:[#allocation8 + $0x80] sm:$0xf]
          %v467 = vld [vmem:[#allocation8 + $0x84] sm:$0xff]
          %v468 = vld [vmem:[#allocation8 + $0x8c] sm:$0xf]
          %v469 = vld [vmem:[#allocation8 + $0x90] sm:$0xff]
          %v470 = vld [vmem:[#allocation8 + $0x98] sm:$0xf]
          %v471 = vld [vmem:[#allocation8 + $0x9c] sm:$0xff]
          %v472 = vld [vmem:[#allocation8 + $0xa4] sm:$0xf]
          %v473 = vld [vmem:[#allocation8 + $0xa8] sm:$0xff]
          %v474 = vld [vmem:[#allocation8 + $0xb0] sm:$0xf]
          %v475 = vld [vmem:[#allocation8 + $0xb4] sm:$0xff]
          %v476 = vld [vmem:[#allocation8 + $0xbc] sm:$0xf]
          %v477 = vld [vmem:[#allocation10] sm:$0x7]
          %v479 = vlaneseq
          %v480 = vshrl.u32 %v479, 7
          %v481 = vsub.s32 0, %v480
          %v482 = vrot.slane %v477, %v481
          %v483 = vlaneseq
          %v484 = vshrl.u32 %v483, 7
          %v485 = vsub.s32 1, %v484
          %v486 = vrot.slane %v477, %v485
          %v487 = vlaneseq
          %v488 = vshrl.u32 %v487, 7
          %v489 = vsub.s32 2, %v488
          %v490 = vrot.slane %v477, %v489
          %v498 = vunpack.c.l.b16 %v441
          %v499 = vunpack.c.l.b16 %v442
          %v500 = vunpack.c.l.b16 %v443
          %v501 = vunpack.c.l.b16 %v444
          %v502 = vpack.c.b16 %v499, %v498
          %v503 = vpack.c.b16 %v501, %v500
          %v538 = vunpack.c.l.b16 %v445
          %v539 = vunpack.c.h.b16 %v445
          %v540 = vunpack.c.l.b16 %v446
          %v541 = vunpack.c.l.b16 %v447
          %v542 = vunpack.c.h.b16 %v447
          %v543 = vunpack.c.l.b16 %v448
          %v544 = vunpack.c.l.b16 %v449
          %v545 = vunpack.c.h.b16 %v449
          %v546 = vunpack.c.l.b16 %v450
          %v547 = vunpack.c.l.b16 %v451
          %v548 = vunpack.c.h.b16 %v451
          %v549 = vunpack.c.l.b16 %v452
          %v550 = vunpack.c.l.b16 %v453
          %v551 = vunpack.c.h.b16 %v453
          %v552 = vunpack.c.l.b16 %v454
          %v553 = vunpack.c.l.b16 %v455
          %v554 = vunpack.c.h.b16 %v455
          %v555 = vunpack.c.l.b16 %v456
          %v556 = vunpack.c.l.b16 %v457
          %v557 = vunpack.c.h.b16 %v457
          %v558 = vunpack.c.l.b16 %v458
          %v559 = vunpack.c.l.b16 %v459
          %v560 = vunpack.c.h.b16 %v459
          %v561 = vunpack.c.l.b16 %v460
          %v562 = vunpack.c.l.b16 %v461
          %v563 = vunpack.c.h.b16 %v461
          %v564 = vunpack.c.l.b16 %v462
          %v565 = vunpack.c.l.b16 %v463
          %v566 = vunpack.c.h.b16 %v463
          %v567 = vunpack.c.l.b16 %v464
          %v568 = vunpack.c.l.b16 %v465
          %v569 = vunpack.c.h.b16 %v465
          %v570 = vunpack.c.l.b16 %v466
          %v571 = vunpack.c.l.b16 %v467
          %v572 = vunpack.c.h.b16 %v467
          %v573 = vunpack.c.l.b16 %v468
          %v574 = vunpack.c.l.b16 %v469
          %v575 = vunpack.c.h.b16 %v469
          %v576 = vunpack.c.l.b16 %v470
          %v577 = vunpack.c.l.b16 %v471
          %v578 = vunpack.c.h.b16 %v471
          %v579 = vunpack.c.l.b16 %v472
          %v580 = vunpack.c.l.b16 %v473
          %v581 = vunpack.c.h.b16 %v473
          %v582 = vunpack.c.l.b16 %v474
          %v583 = vunpack.c.l.b16 %v475
          %v584 = vunpack.c.h.b16 %v475
          %v585 = vunpack.c.l.b16 %v476
          %v586 = vpack.c.b16 %v541, %v538
          %v587 = vpack.c.b16 %v542, %v539
          %v588 = vpack.c.b16 %v543, %v540
          %v589 = vpack.c.b16 %v547, %v544
          %v590 = vpack.c.b16 %v548, %v545
          %v591 = vpack.c.b16 %v549, %v546
          %v592 = vpack.c.b16 %v553, %v550
          %v593 = vpack.c.b16 %v554, %v551
          %v594 = vpack.c.b16 %v555, %v552
          %v595 = vpack.c.b16 %v559, %v556
          %v596 = vpack.c.b16 %v560, %v557
          %v597 = vpack.c.b16 %v561, %v558
          %v598 = vpack.c.b16 %v565, %v562
          %v599 = vpack.c.b16 %v566, %v563
          %v600 = vpack.c.b16 %v567, %v564
          %v601 = vpack.c.b16 %v571, %v568
          %v602 = vpack.c.b16 %v572, %v569
          %v603 = vpack.c.b16 %v573, %v570
          %v604 = vpack.c.b16 %v577, %v574
          %v605 = vpack.c.b16 %v578, %v575
          %v606 = vpack.c.b16 %v579, %v576
          %v607 = vpack.c.b16 %v583, %v580
          %v608 = vpack.c.b16 %v584, %v581
          %v609 = vpack.c.b16 %v585, %v582
          %634 = vmatprep.subr.bf16.mxu0 %v587
          %635 = vmatpush1.bf16.msra.mxu0 %v586
          %636 = vmatprep.subr.bf16.mxu0 %v590
          %637 = vmatpush1.bf16.msra.mxu0 %v589
          %638 = vmatprep.subr.bf16.mxu0 %v593
          %639 = vmatpush1.bf16.msra.mxu0 %v592
          %640 = vmatprep.subr.bf16.mxu0 %v596
          %641 = vmatpush1.bf16.msra.mxu0 %v595
          %642 = vmatprep.subr.bf16.mxu0 %v599
          %643 = vmatpush1.bf16.msra.mxu0 %v598
          %644 = vmatprep.subr.bf16.mxu0 %v602
          %645 = vmatpush1.bf16.msra.mxu0 %v601
          %646 = vmatprep.subr.bf16.mxu0 %v605
          %647 = vmatpush1.bf16.msra.mxu0 %v604
          %648 = vmatprep.subr.bf16.mxu0 %v608
          %649 = vmatpush1.bf16.msra.mxu0 %v607
          %650 = vmatprep.subr.bf16.mxu0 0
          %651 = vmatpush1.bf16.msra.mxu0 0
          %652 = vmatprep.subr.bf16.mxu0 0
          %653 = vmatpush1.bf16.msra.mxu0 0
          %654 = vmatprep.subr.bf16.mxu0 0
          %655 = vmatpush1.bf16.msra.mxu0 0
          %656 = vmatprep.subr.bf16.mxu0 0
          %657 = vmatpush1.bf16.msra.mxu0 0
          %658 = vmatprep.subr.bf16.mxu0 0
          %659 = vmatpush1.bf16.msra.mxu0 0
          %660 = vmatprep.subr.bf16.mxu0 0
          %661 = vmatpush1.bf16.msra.mxu0 0
          %662 = vmatprep.subr.bf16.mxu0 0
          %663 = vmatpush1.bf16.msra.mxu0 0
          %664 = vmatprep.subr.bf16.mxu0 0
          %665 = vmatpush1.bf16.msra.mxu0 0
          %666 = vmatprep.mubr.bf16.mxu0 0
          %667 = vmatmul.mubr.bf16.gmra.mrb[0].mxu0 %v502
          %v668 = vpop.f32.mrb[0].mxu0
          %v669 = vadd.f32 %v482, %v668
          %v670 = vpop.f32.mrb[0].mxu0
          %v671 = vadd.f32 %v486, %v670
          %v672 = vpop.f32.mrb[0].mxu0
          %v673 = vadd.f32 %v482, %v672
          %v674 = vpop.f32.mrb[0].mxu0
          %v675 = vadd.f32 %v486, %v674
          %676 = vmatprep.mubr.bf16.mxu0 0
          %677 = vmatmul.mubr.bf16.gmra.mrb[0].mxu0 %v503
          %v678 = vpop.f32.mrb[0].mxu0
          %v679 = vadd.f32 %v482, %v678
          %v680 = vpop.f32.mrb[0].mxu0
          %v681 = vadd.f32 %v486, %v680
          %v682 = vpop.f32.mrb[0].mxu0
          %v683 = vadd.f32 %v482, %v682
          %v684 = vpop.f32.mrb[0].mxu0
          %v685 = vadd.f32 %v486, %v684
          %686 = vdwg.mxu0
          %687 = vmatprep.subr.bf16.mxu0 0
          %688 = vmatpush1.bf16.msra.mxu0 %v588
          %689 = vmatprep.subr.bf16.mxu0 0
          %690 = vmatpush1.bf16.msra.mxu0 %v591
          %691 = vmatprep.subr.bf16.mxu0 0
          %692 = vmatpush1.bf16.msra.mxu0 %v594
          %693 = vmatprep.subr.bf16.mxu0 0
          %694 = vmatpush1.bf16.msra.mxu0 %v597
          %695 = vmatprep.subr.bf16.mxu0 0
          %696 = vmatpush1.bf16.msra.mxu0 %v600
          %697 = vmatprep.subr.bf16.mxu0 0
          %698 = vmatpush1.bf16.msra.mxu0 %v603
          %699 = vmatprep.subr.bf16.mxu0 0
          %700 = vmatpush1.bf16.msra.mxu0 %v606
          %701 = vmatprep.subr.bf16.mxu0 0
          %702 = vmatpush1.bf16.msra.mxu0 %v609
          %703 = vmatprep.subr.bf16.mxu0 0
          %704 = vmatpush1.bf16.msra.mxu0 0
          %705 = vmatprep.subr.bf16.mxu0 0
          %706 = vmatpush1.bf16.msra.mxu0 0
          %707 = vmatprep.subr.bf16.mxu0 0
          %708 = vmatpush1.bf16.msra.mxu0 0
          %709 = vmatprep.subr.bf16.mxu0 0
          %710 = vmatpush1.bf16.msra.mxu0 0
          %711 = vmatprep.subr.bf16.mxu0 0
          %712 = vmatpush1.bf16.msra.mxu0 0
          %713 = vmatprep.subr.bf16.mxu0 0
          %714 = vmatpush1.bf16.msra.mxu0 0
          %715 = vmatprep.subr.bf16.mxu0 0
          %716 = vmatpush1.bf16.msra.mxu0 0
          %717 = vmatprep.subr.bf16.mxu0 0
          %718 = vmatpush1.bf16.msra.mxu0 0
          %719 = vmatprep.mubr.bf16.mxu0 0
          %720 = vmatmul.mubr.bf16.gmra.mrb[0].mxu0 %v502
          %v721 = vpop.f32.mrb[0].mxu0
          %v722 = vadd.f32 %v490, %v721
          %v723 = vpop.f32.mrb[0].mxu0
          %v724 = vpop.f32.mrb[0].mxu0
          %v725 = vadd.f32 %v490, %v724
          %v726 = vpop.f32.mrb[0].mxu0
          %727 = vmatprep.mubr.bf16.mxu0 0
          %728 = vmatmul.mubr.bf16.gmra.mrb[0].mxu0 %v503
          %v729 = vpop.f32.mrb[0].mxu0
          %v730 = vadd.f32 %v490, %v729
          %v731 = vpop.f32.mrb[0].mxu0
          %v732 = vpop.f32.mrb[0].mxu0
          %v733 = vadd.f32 %v490, %v732
          %v734 = vpop.f32.mrb[0].mxu0
          %735 = vdwg.mxu0
          %v736 = vpack.c.bf16 %v673, %v669
          %v737 = vpack.c.bf16 %v675, %v671
          %v738 = vpack.c.bf16 %v725, %v722
          %v739 = vpack.c.bf16 %v683, %v679
          %v740 = vpack.c.bf16 %v685, %v681
          %v741 = vpack.c.bf16 %v733, %v730
          %vm742 = vcmask 261120
          %743 = vst.msk [vmem:[#allocation2] sm:$0xff] %vm742, %v736
          %744 = vst.msk [vmem:[#allocation2 + $0x8] sm:$0xff] %vm742, %v739
          %745 = vst.msk [vmem:[#allocation3] sm:$0xff] %vm742, %v737
          %746 = vst.msk [vmem:[#allocation3 + $0x8] sm:$0xff] %vm742, %v740
          %747 = vst.msk [vmem:[#allocation4] sm:$0xff] %vm742, %v738
          %748 = vst.msk [vmem:[#allocation4 + $0x8] sm:$0xff] %vm742, %v741
          %751 = vrot.lane.b32.xlu0 %v736, 96
          %v752 = vpop.permute.xlu0 %751
          %753 = vrot.lane.b32.xlu0 %v739, 96
          %v754 = vpop.permute.xlu0 %753
          %s757 = scalar_lea.vmem [#allocation2], 16
          %758 = vst.msk [vmem:[%s757] sm:$0xff] %vm742, %v752
          %759 = vst.msk [vmem:[%s757 + $0x8] sm:$0xff] %vm742, %v754
          %762 = vrot.lane.b32.xlu0 %v737, 96
          %v763 = vpop.permute.xlu0 %762
          %764 = vrot.lane.b32.xlu0 %v740, 96
          %v765 = vpop.permute.xlu0 %764
          %s768 = scalar_lea.vmem [#allocation3], 16
          %769 = vst.msk [vmem:[%s768] sm:$0xff] %vm742, %v763
          %770 = vst.msk [vmem:[%s768 + $0x8] sm:$0xff] %vm742, %v765
          %773 = vrot.lane.b32.xlu0 %v738, 96
          %v774 = vpop.permute.xlu0 %773
          %775 = vrot.lane.b32.xlu0 %v741, 96
          %v776 = vpop.permute.xlu0 %775
          %s779 = scalar_lea.vmem [#allocation4], 16
          %780 = vst.msk [vmem:[%s779] sm:$0xff] %vm742, %v774
          %781 = vst.msk [vmem:[%s779 + $0x8] sm:$0xff] %vm742, %v776
          %782 = vrot.lane.b32.xlu0 %v736, 64
          %v783 = vpop.permute.xlu0 %782
          %784 = vrot.lane.b32.xlu0 %v739, 64
          %v785 = vpop.permute.xlu0 %784
          %s788 = scalar_lea.vmem [#allocation2], 32
          %789 = vst.msk [vmem:[%s788] sm:$0xff] %vm742, %v783
          %790 = vst.msk [vmem:[%s788 + $0x8] sm:$0xff] %vm742, %v785
          %791 = vrot.lane.b32.xlu0 %v737, 64
          %v792 = vpop.permute.xlu0 %791
          %793 = vrot.lane.b32.xlu0 %v740, 64
          %v794 = vpop.permute.xlu0 %793
          %s797 = scalar_lea.vmem [#allocation3], 32
          %798 = vst.msk [vmem:[%s797] sm:$0xff] %vm742, %v792
          %799 = vst.msk [vmem:[%s797 + $0x8] sm:$0xff] %vm742, %v794
          %800 = vrot.lane.b32.xlu0 %v738, 64
          %v801 = vpop.permute.xlu0 %800
          %802 = vrot.lane.b32.xlu0 %v741, 64
          %v803 = vpop.permute.xlu0 %802
          %s806 = scalar_lea.vmem [#allocation4], 32
          %807 = vst.msk [vmem:[%s806] sm:$0xff] %vm742, %v801
          %808 = vst.msk [vmem:[%s806 + $0x8] sm:$0xff] %vm742, %v803
          %809 = vrot.lane.b32.xlu0 %v736, 32
          %v810 = vpop.permute.xlu0 %809
          %811 = vrot.lane.b32.xlu0 %v739, 32
          %v812 = vpop.permute.xlu0 %811
          %s815 = scalar_lea.vmem [#allocation2], 48
          %816 = vst.msk [vmem:[%s815] sm:$0xff] %vm742, %v810
          %817 = vst.msk [vmem:[%s815 + $0x8] sm:$0xff] %vm742, %v812
          %818 = vrot.lane.b32.xlu0 %v737, 32
          %v819 = vpop.permute.xlu0 %818
          %820 = vrot.lane.b32.xlu0 %v740, 32
          %v821 = vpop.permute.xlu0 %820
          %s824 = scalar_lea.vmem [#allocation3], 48
          %825 = vst.msk [vmem:[%s824] sm:$0xff] %vm742, %v819
          %826 = vst.msk [vmem:[%s824 + $0x8] sm:$0xff] %vm742, %v821
          %827 = vrot.lane.b32.xlu0 %v738, 32
          %v828 = vpop.permute.xlu0 %827
          %829 = vrot.lane.b32.xlu0 %v741, 32
          %v830 = vpop.permute.xlu0 %829
          %s833 = scalar_lea.vmem [#allocation4], 48
          %834 = vst.msk [vmem:[%s833] sm:$0xff] %vm742, %v828
          %835 = vst.msk [vmem:[%s833 + $0x8] sm:$0xff] %vm742, %v830
        $region88: #{distilbert_mlm_forward.6} parent=51 // pred_fallthru
          _
        %s836 = smul.u32 %s34, 16
        %s837 = sshra.s32 %s836, 3
        %s838 = sand.u32 %s836, 7
        %s839 = smul.addr %s837, 4
        %s840 = scalar_lea.vmem %s373, %s839 [#allocation5]
        %v841 = vld [vmem:[%s840] sm:$0xf]
        %v842 = vld [vmem:[%s840 + $0x4] sm:$0xf]
        %v843 = vunpack.c.l.bf16 %v841
        %v844 = vunpack.c.l.bf16 %v842
        %s845 = sshra.s32 %s836, 4
        %s846 = sand.u32 %s836, 15
        %s847 = smul.addr %s845, 8
        %s848 = scalar_lea.vmem [#allocation2], %s847
        %v849 = vld [vmem:[%s848] sm:$0xff]
        %v850 = vld [vmem:[%s848 + $0x10] sm:$0xff]
        %v851 = vld [vmem:[%s848 + $0x20] sm:$0xff]
        %v852 = vld [vmem:[%s848 + $0x30] sm:$0xff]
        %v853 = vld [vmem:[#allocation3] sm:$0xff]
        %v854 = vld [vmem:[#allocation3 + $0x8] sm:$0xff]
        %v855 = vld [vmem:[#allocation3 + $0x10] sm:$0xff]
        %v856 = vld [vmem:[#allocation3 + $0x18] sm:$0xff]
        %v857 = vld [vmem:[#allocation3 + $0x20] sm:$0xff]
        %v858 = vld [vmem:[#allocation3 + $0x28] sm:$0xff]
        %v859 = vld [vmem:[#allocation3 + $0x30] sm:$0xff]
        %v860 = vld [vmem:[#allocation3 + $0x38] sm:$0xff]
        %vm861 = vcmask 261120
        %v863 = vsel %vm861, %v849, 0
        %v866 = vsel %vm861, %v853, 0
        %v869 = vsel %vm861, %v854, 0
        %871 = vmatprep.subr.bf16.mxu0 0
        %872 = vmatpush1.bf16.xpose.msra.mxu0 %v866
        %873 = vmatprep.subr.bf16.mxu0 0
        %874 = vmatpush1.bf16.xpose.msra.mxu0 %v869
        %875 = vmatprep.subr.bf16.mxu0 0
        %876 = vmatpush1.bf16.xpose.msra.mxu0 0
        %877 = vmatprep.subr.bf16.mxu0 0
        %878 = vmatpush1.bf16.xpose.msra.mxu0 0
        %879 = vmatprep.subr.bf16.mxu0 0
        %880 = vmatpush1.bf16.xpose.msra.mxu0 0
        %881 = vmatprep.subr.bf16.mxu0 0
        %882 = vmatpush1.bf16.xpose.msra.mxu0 0
        %883 = vmatprep.subr.bf16.mxu0 0
        %884 = vmatpush1.bf16.xpose.msra.mxu0 0
        %885 = vmatprep.subr.bf16.mxu0 0
        %886 = vmatpush1.bf16.xpose.msra.mxu0 0
        %887 = vmatprep.subr.bf16.mxu0 0
        %888 = vmatpush1.bf16.xpose.msra.mxu0 0
        %889 = vmatprep.subr.bf16.mxu0 0
        %890 = vmatpush1.bf16.xpose.msra.mxu0 0
        %891 = vmatprep.subr.bf16.mxu0 0
        %892 = vmatpush1.bf16.xpose.msra.mxu0 0
        %893 = vmatprep.subr.bf16.mxu0 0
        %894 = vmatpush1.bf16.xpose.msra.mxu0 0
        %895 = vmatprep.subr.bf16.mxu0 0
        %896 = vmatpush1.bf16.xpose.msra.mxu0 0
        %897 = vmatprep.subr.bf16.mxu0 0
        %898 = vmatpush1.bf16.xpose.msra.mxu0 0
        %899 = vmatprep.subr.bf16.mxu0 0
        %900 = vmatpush1.bf16.xpose.msra.mxu0 0
        %901 = vmatprep.subr.bf16.mxu0 0
        %902 = vmatpush1.bf16.xpose.msra.mxu0 0
        %903 = vmatprep.mubr.bf16.mxu0 0
        %904 = vmatmul.mubr.bf16.gmra.mrb[0].mxu0 %v863
        %v905 = vpop.f32.mrb[0].mxu0
        %v906 = vadd.f32 0.0, %v905
        %v907 = vpop.f32.mrb[0].mxu0
        %v908 = vpop.f32.mrb[0].mxu0
        %v909 = vadd.f32 0.0, %v908
        %v910 = vpop.f32.mrb[0].mxu0
        %911 = vdwg.mxu0
        %v913 = vsel %vm861, %v850, 0
        %v916 = vsel %vm861, %v855, 0
        %v919 = vsel %vm861, %v856, 0
        %921 = vmatprep.subr.bf16.mxu0 0
        %922 = vmatpush1.bf16.xpose.msra.mxu0 %v916
        %923 = vmatprep.subr.bf16.mxu0 0
        %924 = vmatpush1.bf16.xpose.msra.mxu0 %v919
        %925 = vmatprep.subr.bf16.mxu0 0
        %926 = vmatpush1.bf16.xpose.msra.mxu0 0
        %927 = vmatprep.subr.bf16.mxu0 0
        %928 = vmatpush1.bf16.xpose.msra.mxu0 0
        %929 = vmatprep.subr.bf16.mxu0 0
        %930 = vmatpush1.bf16.xpose.msra.mxu0 0
        %931 = vmatprep.subr.bf16.mxu0 0
        %932 = vmatpush1.bf16.xpose.msra.mxu0 0
        %933 = vmatprep.subr.bf16.mxu0 0
        %934 = vmatpush1.bf16.xpose.msra.mxu0 0
        %935 = vmatprep.subr.bf16.mxu0 0
        %936 = vmatpush1.bf16.xpose.msra.mxu0 0
        %937 = vmatprep.subr.bf16.mxu0 0
        %938 = vmatpush1.bf16.xpose.msra.mxu0 0
        %939 = vmatprep.subr.bf16.mxu0 0
        %940 = vmatpush1.bf16.xpose.msra.mxu0 0
        %941 = vmatprep.subr.bf16.mxu0 0
        %942 = vmatpush1.bf16.xpose.msra.mxu0 0
        %943 = vmatprep.subr.bf16.mxu0 0
        %944 = vmatpush1.bf16.xpose.msra.mxu0 0
        %945 = vmatprep.subr.bf16.mxu0 0
        %946 = vmatpush1.bf16.xpose.msra.mxu0 0
        %947 = vmatprep.subr.bf16.mxu0 0
        %948 = vmatpush1.bf16.xpose.msra.mxu0 0
        %949 = vmatprep.subr.bf16.mxu0 0
        %950 = vmatpush1.bf16.xpose.msra.mxu0 0
        %951 = vmatprep.subr.bf16.mxu0 0
        %952 = vmatpush1.bf16.xpose.msra.mxu0 0
        %953 = vmatprep.mubr.bf16.mxu0 0
        %954 = vmatmul.mubr.bf16.gmra.mrb[0].mxu0 %v913
        %v955 = vpop.f32.mrb[0].mxu0
        %v956 = vadd.f32 0.0, %v955
        %v957 = vpop.f32.mrb[0].mxu0
        %v958 = vpop.f32.mrb[0].mxu0
        %v959 = vadd.f32 0.0, %v958
        %v960 = vpop.f32.mrb[0].mxu0
        %961 = vdwg.mxu0
        %v963 = vsel %vm861, %v851, 0
        %v966 = vsel %vm861, %v857, 0
        %v969 = vsel %vm861, %v858, 0
        %971 = vmatprep.subr.bf16.mxu0 0
        %972 = vmatpush1.bf16.xpose.msra.mxu0 %v966
        %973 = vmatprep.subr.bf16.mxu0 0
        %974 = vmatpush1.bf16.xpose.msra.mxu0 %v969
        %975 = vmatprep.subr.bf16.mxu0 0
        %976 = vmatpush1.bf16.xpose.msra.mxu0 0
        %977 = vmatprep.subr.bf16.mxu0 0
        %978 = vmatpush1.bf16.xpose.msra.mxu0 0
        %979 = vmatprep.subr.bf16.mxu0 0
        %980 = vmatpush1.bf16.xpose.msra.mxu0 0
        %981 = vmatprep.subr.bf16.mxu0 0
        %982 = vmatpush1.bf16.xpose.msra.mxu0 0
        %983 = vmatprep.subr.bf16.mxu0 0
        %984 = vmatpush1.bf16.xpose.msra.mxu0 0
        %985 = vmatprep.subr.bf16.mxu0 0
        %986 = vmatpush1.bf16.xpose.msra.mxu0 0
        %987 = vmatprep.subr.bf16.mxu0 0
        %988 = vmatpush1.bf16.xpose.msra.mxu0 0
        %989 = vmatprep.subr.bf16.mxu0 0
        %990 = vmatpush1.bf16.xpose.msra.mxu0 0
        %991 = vmatprep.subr.bf16.mxu0 0
        %992 = vmatpush1.bf16.xpose.msra.mxu0 0
        %993 = vmatprep.subr.bf16.mxu0 0
        %994 = vmatpush1.bf16.xpose.msra.mxu0 0
        %995 = vmatprep.subr.bf16.mxu0 0
        %996 = vmatpush1.bf16.xpose.msra.mxu0 0
        %997 = vmatprep.subr.bf16.mxu0 0
        %998 = vmatpush1.bf16.xpose.msra.mxu0 0
        %999 = vmatprep.subr.bf16.mxu0 0
        %1000 = vmatpush1.bf16.xpose.msra.mxu0 0
        %1001 = vmatprep.subr.bf16.mxu0 0
        %1002 = vmatpush1.bf16.xpose.msra.mxu0 0
        %1003 = vmatprep.mubr.bf16.mxu0 0
        %1004 = vmatmul.mubr.bf16.gmra.mrb[0].mxu0 %v963
        %v1005 = vpop.f32.mrb[0].mxu0
        %v1006 = vadd.f32 0.0, %v1005
        %v1007 = vpop.f32.mrb[0].mxu0
        %v1008 = vpop.f32.mrb[0].mxu0
        %v1009 = vadd.f32 0.0, %v1008
        %v1010 = vpop.f32.mrb[0].mxu0
        %1011 = vdwg.mxu0
        %v1013 = vsel %vm861, %v852, 0
        %v1016 = vsel %vm861, %v859, 0
        %v1019 = vsel %vm861, %v860, 0
        %1021 = vmatprep.subr.bf16.mxu0 0
        %1022 = vmatpush1.bf16.xpose.msra.mxu0 %v1016
        %1023 = vmatprep.subr.bf16.mxu0 0
        %1024 = vmatpush1.bf16.xpose.msra.mxu0 %v1019
        %1025 = vmatprep.subr.bf16.mxu0 0
        %1026 = vmatpush1.bf16.xpose.msra.mxu0 0
        %1027 = vmatprep.subr.bf16.mxu0 0
        %1028 = vmatpush1.bf16.xpose.msra.mxu0 0
        %1029 = vmatprep.subr.bf16.mxu0 0
        %1030 = vmatpush1.bf16.xpose.msra.mxu0 0
        %1031 = vmatprep.subr.bf16.mxu0 0
        %1032 = vmatpush1.bf16.xpose.msra.mxu0 0
        %1033 = vmatprep.subr.bf16.mxu0 0
        %1034 = vmatpush1.bf16.xpose.msra.mxu0 0
        %1035 = vmatprep.subr.bf16.mxu0 0
        %1036 = vmatpush1.bf16.xpose.msra.mxu0 0
        %1037 = vmatprep.subr.bf16.mxu0 0
        %1038 = vmatpush1.bf16.xpose.msra.mxu0 0
        %1039 = vmatprep.subr.bf16.mxu0 0
        %1040 = vmatpush1.bf16.xpose.msra.mxu0 0
        %1041 = vmatprep.subr.bf16.mxu0 0
        %1042 = vmatpush1.bf16.xpose.msra.mxu0 0
        %1043 = vmatprep.subr.bf16.mxu0 0
        %1044 = vmatpush1.bf16.xpose.msra.mxu0 0
        %1045 = vmatprep.subr.bf16.mxu0 0
        %1046 = vmatpush1.bf16.xpose.msra.mxu0 0
        %1047 = vmatprep.subr.bf16.mxu0 0
        %1048 = vmatpush1.bf16.xpose.msra.mxu0 0
        %1049 = vmatprep.subr.bf16.mxu0 0
        %1050 = vmatpush1.bf16.xpose.msra.mxu0 0
        %1051 = vmatprep.subr.bf16.mxu0 0
        %1052 = vmatpush1.bf16.xpose.msra.mxu0 0
        %1053 = vmatprep.mubr.bf16.mxu0 0
        %1054 = vmatmul.mubr.bf16.gmra.mrb[0].mxu0 %v1013
        %v1055 = vpop.f32.mrb[0].mxu0
        %v1056 = vadd.f32 0.0, %v1055
        %v1057 = vpop.f32.mrb[0].mxu0
        %v1058 = vpop.f32.mrb[0].mxu0
        %v1059 = vadd.f32 0.0, %v1058
        %v1060 = vpop.f32.mrb[0].mxu0
        %1061 = vdwg.mxu0
        %v1062 = vsel %vm861, %v906, -inf
        %1063 = vmax.xlane.f32.xlu0 %v1062
        %v1064 = vpop.xlane.xlu0 %1063
        %v1065 = vsel %vm861, %v909, -inf
        %1066 = vmax.xlane.f32.xlu0 %v1065
        %v1067 = vpop.xlane.xlu0 %1066
        %v1068 = vsel %vm861, %v956, -inf
        %1069 = vmax.xlane.f32.xlu0 %v1068
        %v1070 = vpop.xlane.xlu0 %1069
        %v1071 = vsel %vm861, %v959, -inf
        %1072 = vmax.xlane.f32.xlu0 %v1071
        %v1073 = vpop.xlane.xlu0 %1072
        %v1074 = vsel %vm861, %v1006, -inf
        %1075 = vmax.xlane.f32.xlu0 %v1074
        %v1076 = vpop.xlane.xlu0 %1075
        %v1077 = vsel %vm861, %v1009, -inf
        %1078 = vmax.xlane.f32.xlu0 %v1077
        %v1079 = vpop.xlane.xlu0 %1078
        %v1080 = vsel %vm861, %v1056, -inf
        %1081 = vmax.xlane.f32.xlu0 %v1080
        %v1082 = vpop.xlane.xlu0 %1081
        %v1083 = vsel %vm861, %v1059, -inf
        %1084 = vmax.xlane.f32.xlu0 %v1083
        %v1085 = vpop.xlane.xlu0 %1084
        %v1086 = vsub.f32 %v906, %v1064
        %v1087 = vsub.f32 %v909, %v1067
        %v1088 = vsub.f32 %v956, %v1070
        %v1089 = vsub.f32 %v959, %v1073
        %v1090 = vsub.f32 %v1006, %v1076
        %v1091 = vsub.f32 %v1009, %v1079
        %v1092 = vsub.f32 %v1056, %v1082
        %v1093 = vsub.f32 %v1059, %v1085
        %v1094 = vmul.f32 %v1086, 1.442695
        %v1095 = vpow.pop %v1094
        %v1096 = vmul.f32 %v1087, 1.442695
        %v1097 = vpow.pop %v1096
        %v1098 = vmul.f32 %v1088, 1.442695
        %v1099 = vpow.pop %v1098
        %v1100 = vmul.f32 %v1089, 1.442695
        %v1101 = vpow.pop %v1100
        %v1102 = vmul.f32 %v1090, 1.442695
        %v1103 = vpow.pop %v1102
        %v1104 = vmul.f32 %v1091, 1.442695
        %v1105 = vpow.pop %v1104
        %v1106 = vmul.f32 %v1092, 1.442695
        %v1107 = vpow.pop %v1106
        %v1108 = vmul.f32 %v1093, 1.442695
        %v1109 = vpow.pop %v1108
        %v1110 = vsel %vm861, %v1095, 0.0
        %1111 = vadd.xlane.f32.xlu0 %v1110
        %v1112 = vpop.xlane.xlu0 %1111
        %v1113 = vsel %vm861, %v1097, 0.0
        %1114 = vadd.xlane.f32.xlu0 %v1113
        %v1115 = vpop.xlane.xlu0 %1114
        %v1116 = vsel %vm861, %v1099, 0.0
        %1117 = vadd.xlane.f32.xlu0 %v1116
        %v1118 = vpop.xlane.xlu0 %1117
        %v1119 = vsel %vm861, %v1101, 0.0
        %1120 = vadd.xlane.f32.xlu0 %v1119
        %v1121 = vpop.xlane.xlu0 %1120
        %v1122 = vsel %vm861, %v1103, 0.0
        %1123 = vadd.xlane.f32.xlu0 %v1122
        %v1124 = vpop.xlane.xlu0 %1123
        %v1125 = vsel %vm861, %v1105, 0.0
        %1126 = vadd.xlane.f32.xlu0 %v1125
        %v1127 = vpop.xlane.xlu0 %1126
        %v1128 = vsel %vm861, %v1107, 0.0
        %1129 = vadd.xlane.f32.xlu0 %v1128
        %v1130 = vpop.xlane.xlu0 %1129
        %v1131 = vsel %vm861, %v1109, 0.0
        %1132 = vadd.xlane.f32.xlu0 %v1131
        %v1133 = vpop.xlane.xlu0 %1132
        %v1134 = vpack.c.bf16 %v1097, %v1095
        %v1135 = vpack.c.bf16 %v1101, %v1099
        %v1136 = vpack.c.bf16 %v1105, %v1103
        %v1137 = vpack.c.bf16 %v1109, %v1107
        %v1138 = vld [vmem:[#allocation4] sm:$0xff]
        %v1139 = vld [vmem:[#allocation4 + $0x8] sm:$0xff]
        %v1140 = vld [vmem:[#allocation4 + $0x10] sm:$0xff]
        %v1141 = vld [vmem:[#allocation4 + $0x18] sm:$0xff]
        %v1142 = vld [vmem:[#allocation4 + $0x20] sm:$0xff]
        %v1143 = vld [vmem:[#allocation4 + $0x28] sm:$0xff]
        %v1144 = vld [vmem:[#allocation4 + $0x30] sm:$0xff]
        %v1145 = vld [vmem:[#allocation4 + $0x38] sm:$0xff]
        %v1147 = vsel %vm861, %v1134, 0
        %1149 = vmatprep.subr.bf16.mxu0 0
        %1150 = vmatpush1.bf16.msra.mxu0 %v1138
        %1151 = vmatprep.subr.bf16.mxu0 0
        %1152 = vmatpush1.bf16.msra.mxu0 %v1139
        %1153 = vmatprep.subr.bf16.mxu0 0
        %1154 = vmatpush1.bf16.msra.mxu0 0
        %1155 = vmatprep.subr.bf16.mxu0 0
        %1156 = vmatpush1.bf16.msra.mxu0 0
        %1157 = vmatprep.subr.bf16.mxu0 0
        %1158 = vmatpush1.bf16.msra.mxu0 0
        %1159 = vmatprep.subr.bf16.mxu0 0
        %1160 = vmatpush1.bf16.msra.mxu0 0
        %1161 = vmatprep.subr.bf16.mxu0 0
        %1162 = vmatpush1.bf16.msra.mxu0 0
        %1163 = vmatprep.subr.bf16.mxu0 0
        %1164 = vmatpush1.bf16.msra.mxu0 0
        %1165 = vmatprep.subr.bf16.mxu0 0
        %1166 = vmatpush1.bf16.msra.mxu0 0
        %1167 = vmatprep.subr.bf16.mxu0 0
        %1168 = vmatpush1.bf16.msra.mxu0 0
        %1169 = vmatprep.subr.bf16.mxu0 0
        %1170 = vmatpush1.bf16.msra.mxu0 0
        %1171 = vmatprep.subr.bf16.mxu0 0
        %1172 = vmatpush1.bf16.msra.mxu0 0
        %1173 = vmatprep.subr.bf16.mxu0 0
        %1174 = vmatpush1.bf16.msra.mxu0 0
        %1175 = vmatprep.subr.bf16.mxu0 0
        %1176 = vmatpush1.bf16.msra.mxu0 0
        %1177 = vmatprep.subr.bf16.mxu0 0
        %1178 = vmatpush1.bf16.msra.mxu0 0
        %1179 = vmatprep.subr.bf16.mxu0 0
        %1180 = vmatpush1.bf16.msra.mxu0 0
        %1181 = vmatprep.mubr.bf16.mxu0 0
        %1182 = vmatmul.mubr.bf16.gmra.mrb[0].mxu0 %v1147
        %v1183 = vpop.f32.mrb[0].mxu0
        %v1184 = vadd.f32 0.0, %v1183
        %v1185 = vpop.f32.mrb[0].mxu0
        %v1186 = vpop.f32.mrb[0].mxu0
        %v1187 = vadd.f32 0.0, %v1186
        %v1188 = vpop.f32.mrb[0].mxu0
        %1189 = vdwg.mxu0
        %v1191 = vsel %vm861, %v1135, 0
        %1193 = vmatprep.subr.bf16.mxu0 0
        %1194 = vmatpush1.bf16.msra.mxu0 %v1140
        %1195 = vmatprep.subr.bf16.mxu0 0
        %1196 = vmatpush1.bf16.msra.mxu0 %v1141
        %1197 = vmatprep.subr.bf16.mxu0 0
        %1198 = vmatpush1.bf16.msra.mxu0 0
        %1199 = vmatprep.subr.bf16.mxu0 0
        %1200 = vmatpush1.bf16.msra.mxu0 0
        %1201 = vmatprep.subr.bf16.mxu0 0
        %1202 = vmatpush1.bf16.msra.mxu0 0
        %1203 = vmatprep.subr.bf16.mxu0 0
        %1204 = vmatpush1.bf16.msra.mxu0 0
        %1205 = vmatprep.subr.bf16.mxu0 0
        %1206 = vmatpush1.bf16.msra.mxu0 0
        %1207 = vmatprep.subr.bf16.mxu0 0
        %1208 = vmatpush1.bf16.msra.mxu0 0
        %1209 = vmatprep.subr.bf16.mxu0 0
        %1210 = vmatpush1.bf16.msra.mxu0 0
        %1211 = vmatprep.subr.bf16.mxu0 0
        %1212 = vmatpush1.bf16.msra.mxu0 0
        %1213 = vmatprep.subr.bf16.mxu0 0
        %1214 = vmatpush1.bf16.msra.mxu0 0
        %1215 = vmatprep.subr.bf16.mxu0 0
        %1216 = vmatpush1.bf16.msra.mxu0 0
        %1217 = vmatprep.subr.bf16.mxu0 0
        %1218 = vmatpush1.bf16.msra.mxu0 0
        %1219 = vmatprep.subr.bf16.mxu0 0
        %1220 = vmatpush1.bf16.msra.mxu0 0
        %1221 = vmatprep.subr.bf16.mxu0 0
        %1222 = vmatpush1.bf16.msra.mxu0 0
        %1223 = vmatprep.subr.bf16.mxu0 0
        %1224 = vmatpush1.bf16.msra.mxu0 0
        %1225 = vmatprep.mubr.bf16.mxu0 0
        %1226 = vmatmul.mubr.bf16.gmra.mrb[0].mxu0 %v1191
        %v1227 = vpop.f32.mrb[0].mxu0
        %v1228 = vadd.f32 0.0, %v1227
        %v1229 = vpop.f32.mrb[0].mxu0
        %v1230 = vpop.f32.mrb[0].mxu0
        %v1231 = vadd.f32 0.0, %v1230
        %v1232 = vpop.f32.mrb[0].mxu0
        %1233 = vdwg.mxu0
        %v1235 = vsel %vm861, %v1136, 0
        %1237 = vmatprep.subr.bf16.mxu0 0
        %1238 = vmatpush1.bf16.msra.mxu0 %v1142
        %1239 = vmatprep.subr.bf16.mxu0 0
        %1240 = vmatpush1.bf16.msra.mxu0 %v1143
        %1241 = vmatprep.subr.bf16.mxu0 0
        %1242 = vmatpush1.bf16.msra.mxu0 0
        %1243 = vmatprep.subr.bf16.mxu0 0
        %1244 = vmatpush1.bf16.msra.mxu0 0
        %1245 = vmatprep.subr.bf16.mxu0 0
        %1246 = vmatpush1.bf16.msra.mxu0 0
        %1247 = vmatprep.subr.bf16.mxu0 0
        %1248 = vmatpush1.bf16.msra.mxu0 0
        %1249 = vmatprep.subr.bf16.mxu0 0
        %1250 = vmatpush1.bf16.msra.mxu0 0
        %1251 = vmatprep.subr.bf16.mxu0 0
        %1252 = vmatpush1.bf16.msra.mxu0 0
        %1253 = vmatprep.subr.bf16.mxu0 0
        %1254 = vmatpush1.bf16.msra.mxu0 0
        %1255 = vmatprep.subr.bf16.mxu0 0
        %1256 = vmatpush1.bf16.msra.mxu0 0
        %1257 = vmatprep.subr.bf16.mxu0 0
        %1258 = vmatpush1.bf16.msra.mxu0 0
        %1259 = vmatprep.subr.bf16.mxu0 0
        %1260 = vmatpush1.bf16.msra.mxu0 0
        %1261 = vmatprep.subr.bf16.mxu0 0
        %1262 = vmatpush1.bf16.msra.mxu0 0
        %1263 = vmatprep.subr.bf16.mxu0 0
        %1264 = vmatpush1.bf16.msra.mxu0 0
        %1265 = vmatprep.subr.bf16.mxu0 0
        %1266 = vmatpush1.bf16.msra.mxu0 0
        %1267 = vmatprep.subr.bf16.mxu0 0
        %1268 = vmatpush1.bf16.msra.mxu0 0
        %1269 = vmatprep.mubr.bf16.mxu0 0
        %1270 = vmatmul.mubr.bf16.gmra.mrb[0].mxu0 %v1235
        %v1271 = vpop.f32.mrb[0].mxu0
        %v1272 = vadd.f32 0.0, %v1271
        %v1273 = vpop.f32.mrb[0].mxu0
        %v1274 = vpop.f32.mrb[0].mxu0
        %v1275 = vadd.f32 0.0, %v1274
        %v1276 = vpop.f32.mrb[0].mxu0
        %1277 = vdwg.mxu0
        %v1279 = vsel %vm861, %v1137, 0
        %1281 = vmatprep.subr.bf16.mxu0 0
        %1282 = vmatpush1.bf16.msra.mxu0 %v1144
        %1283 = vmatprep.subr.bf16.mxu0 0
        %1284 = vmatpush1.bf16.msra.mxu0 %v1145
        %1285 = vmatprep.subr.bf16.mxu0 0
        %1286 = vmatpush1.bf16.msra.mxu0 0
        %1287 = vmatprep.subr.bf16.mxu0 0
        %1288 = vmatpush1.bf16.msra.mxu0 0
        %1289 = vmatprep.subr.bf16.mxu0 0
        %1290 = vmatpush1.bf16.msra.mxu0 0
        %1291 = vmatprep.subr.bf16.mxu0 0
        %1292 = vmatpush1.bf16.msra.mxu0 0
        %1293 = vmatprep.subr.bf16.mxu0 0
        %1294 = vmatpush1.bf16.msra.mxu0 0
        %1295 = vmatprep.subr.bf16.mxu0 0
        %1296 = vmatpush1.bf16.msra.mxu0 0
        %1297 = vmatprep.subr.bf16.mxu0 0
        %1298 = vmatpush1.bf16.msra.mxu0 0
        %1299 = vmatprep.subr.bf16.mxu0 0
        %1300 = vmatpush1.bf16.msra.mxu0 0
        %1301 = vmatprep.subr.bf16.mxu0 0
        %1302 = vmatpush1.bf16.msra.mxu0 0
        %1303 = vmatprep.subr.bf16.mxu0 0
        %1304 = vmatpush1.bf16.msra.mxu0 0
        %1305 = vmatprep.subr.bf16.mxu0 0
        %1306 = vmatpush1.bf16.msra.mxu0 0
        %1307 = vmatprep.subr.bf16.mxu0 0
        %1308 = vmatpush1.bf16.msra.mxu0 0
        %1309 = vmatprep.subr.bf16.mxu0 0
        %1310 = vmatpush1.bf16.msra.mxu0 0
        %1311 = vmatprep.subr.bf16.mxu0 0
        %1312 = vmatpush1.bf16.msra.mxu0 0
        %1313 = vmatprep.mubr.bf16.mxu0 0
        %1314 = vmatmul.mubr.bf16.gmra.mrb[0].mxu0 %v1279
        %v1315 = vpop.f32.mrb[0].mxu0
        %v1316 = vadd.f32 0.0, %v1315
        %v1317 = vpop.f32.mrb[0].mxu0
        %v1318 = vpop.f32.mrb[0].mxu0
        %v1319 = vadd.f32 0.0, %v1318
        %v1320 = vpop.f32.mrb[0].mxu0
        %1321 = vdwg.mxu0
        %v1322 = vrcp.pop %v1112
        %v1323 = vrcp.pop %v1115
        %v1324 = vrcp.pop %v1118
        %v1325 = vrcp.pop %v1121
        %v1326 = vrcp.pop %v1124
        %v1327 = vrcp.pop %v1127
        %v1328 = vrcp.pop %v1130
        %v1329 = vrcp.pop %v1133
        %v1330 = vmul.f32 %v1184, %v1322
        %v1331 = vmul.f32 %v1187, %v1323
        %v1332 = vmul.f32 %v1228, %v1324
        %v1333 = vmul.f32 %v1231, %v1325
        %v1334 = vmul.f32 %v1272, %v1326
        %v1335 = vmul.f32 %v1275, %v1327
        %v1336 = vmul.f32 %v1316, %v1328
        %v1337 = vmul.f32 %v1319, %v1329
        %v1338 = vpack.c.bf16 %v1331, %v1330
        %v1339 = vpack.c.bf16 %v1333, %v1332
        %v1340 = vpack.c.bf16 %v1335, %v1334
        %v1341 = vpack.c.bf16 %v1337, %v1336
        %v1342 = vld [vmem:[#allocation11] sm:$0xf]
        %v1343 = vld [vmem:[#allocation11 + $0x4] sm:$0xf]
        %v1344 = vld [vmem:[#allocation11 + $0x8] sm:$0xf]
        %v1345 = vld [vmem:[#allocation11 + $0xc] sm:$0xf]
        %v1346 = vld [vmem:[#allocation11 + $0x10] sm:$0xf]
        %v1347 = vld [vmem:[#allocation11 + $0x14] sm:$0xf]
        %v1348 = vld [vmem:[#allocation11 + $0x18] sm:$0xf]
        %v1349 = vld [vmem:[#allocation11 + $0x1c] sm:$0xf]
        %v1350 = vld [vmem:[#allocation11 + $0x20] sm:$0xf]
        %v1351 = vld [vmem:[#allocation11 + $0x24] sm:$0xf]
        %v1352 = vld [vmem:[#allocation11 + $0x28] sm:$0xf]
        %v1353 = vld [vmem:[#allocation11 + $0x2c] sm:$0xf]
        %v1354 = vld [vmem:[#allocation11 + $0x30] sm:$0xf]
        %v1355 = vld [vmem:[#allocation11 + $0x34] sm:$0xf]
        %v1356 = vld [vmem:[#allocation11 + $0x38] sm:$0xf]
        %v1357 = vld [vmem:[#allocation11 + $0x3c] sm:$0xf]
        %v1362 = vunpack.c.l.b16 %v1342
        %v1363 = vunpack.c.l.b16 %v1343
        %v1364 = vunpack.c.l.b16 %v1344
        %v1365 = vunpack.c.l.b16 %v1345
        %v1366 = vpack.c.b16 %v1363, %v1362
        %v1367 = vpack.c.b16 %v1365, %v1364
        %v1371 = vsel %vm861, %v1338, 0
        %1373 = vmatprep.subr.bf16.mxu0 0
        %1374 = vmatpush1.bf16.msra.mxu0 %v1366
        %1375 = vmatprep.subr.bf16.mxu0 0
        %1376 = vmatpush1.bf16.msra.mxu0 %v1367
        %1377 = vmatprep.subr.bf16.mxu0 0
        %1378 = vmatpush1.bf16.msra.mxu0 0
        %1379 = vmatprep.subr.bf16.mxu0 0
        %1380 = vmatpush1.bf16.msra.mxu0 0
        %1381 = vmatprep.subr.bf16.mxu0 0
        %1382 = vmatpush1.bf16.msra.mxu0 0
        %1383 = vmatprep.subr.bf16.mxu0 0
        %1384 = vmatpush1.bf16.msra.mxu0 0
        %1385 = vmatprep.subr.bf16.mxu0 0
        %1386 = vmatpush1.bf16.msra.mxu0 0
        %1387 = vmatprep.subr.bf16.mxu0 0
        %1388 = vmatpush1.bf16.msra.mxu0 0
        %1389 = vmatprep.subr.bf16.mxu0 0
        %1390 = vmatpush1.bf16.msra.mxu0 0
        %1391 = vmatprep.subr.bf16.mxu0 0
        %1392 = vmatpush1.bf16.msra.mxu0 0
        %1393 = vmatprep.subr.bf16.mxu0 0
        %1394 = vmatpush1.bf16.msra.mxu0 0
        %1395 = vmatprep.subr.bf16.mxu0 0
        %1396 = vmatpush1.bf16.msra.mxu0 0
        %1397 = vmatprep.subr.bf16.mxu0 0
        %1398 = vmatpush1.bf16.msra.mxu0 0
        %1399 = vmatprep.subr.bf16.mxu0 0
        %1400 = vmatpush1.bf16.msra.mxu0 0
        %1401 = vmatprep.subr.bf16.mxu0 0
        %1402 = vmatpush1.bf16.msra.mxu0 0
        %1403 = vmatprep.subr.bf16.mxu0 0
        %1404 = vmatpush1.bf16.msra.mxu0 0
        %1405 = vmatprep.mubr.bf16.mxu0 0
        %1406 = vmatmul.mubr.bf16.gmra.mrb[0].mxu0 %v1371
        %v1407 = vpop.f32.mrb[0].mxu0
        %v1408 = vadd.f32 0.0, %v1407
        %v1409 = vpop.f32.mrb[0].mxu0
        %v1410 = vpop.f32.mrb[0].mxu0
        %v1411 = vadd.f32 0.0, %v1410
        %v1412 = vpop.f32.mrb[0].mxu0
        %1413 = vdwg.mxu0
        %v1418 = vunpack.c.l.b16 %v1346
        %v1419 = vunpack.c.l.b16 %v1347
        %v1420 = vunpack.c.l.b16 %v1348
        %v1421 = vunpack.c.l.b16 %v1349
        %v1422 = vpack.c.b16 %v1419, %v1418
        %v1423 = vpack.c.b16 %v1421, %v1420
        %v1427 = vsel %vm861, %v1339, 0
        %1429 = vmatprep.subr.bf16.mxu0 0
        %1430 = vmatpush1.bf16.msra.mxu0 %v1422
        %1431 = vmatprep.subr.bf16.mxu0 0
        %1432 = vmatpush1.bf16.msra.mxu0 %v1423
        %1433 = vmatprep.subr.bf16.mxu0 0
        %1434 = vmatpush1.bf16.msra.mxu0 0
        %1435 = vmatprep.subr.bf16.mxu0 0
        %1436 = vmatpush1.bf16.msra.mxu0 0
        %1437 = vmatprep.subr.bf16.mxu0 0
        %1438 = vmatpush1.bf16.msra.mxu0 0
        %1439 = vmatprep.subr.bf16.mxu0 0
        %1440 = vmatpush1.bf16.msra.mxu0 0
        %1441 = vmatprep.subr.bf16.mxu0 0
        %1442 = vmatpush1.bf16.msra.mxu0 0
        %1443 = vmatprep.subr.bf16.mxu0 0
        %1444 = vmatpush1.bf16.msra.mxu0 0
        %1445 = vmatprep.subr.bf16.mxu0 0
        %1446 = vmatpush1.bf16.msra.mxu0 0
        %1447 = vmatprep.subr.bf16.mxu0 0
        %1448 = vmatpush1.bf16.msra.mxu0 0
        %1449 = vmatprep.subr.bf16.mxu0 0
        %1450 = vmatpush1.bf16.msra.mxu0 0
        %1451 = vmatprep.subr.bf16.mxu0 0
        %1452 = vmatpush1.bf16.msra.mxu0 0
        %1453 = vmatprep.subr.bf16.mxu0 0
        %1454 = vmatpush1.bf16.msra.mxu0 0
        %1455 = vmatprep.subr.bf16.mxu0 0
        %1456 = vmatpush1.bf16.msra.mxu0 0
        %1457 = vmatprep.subr.bf16.mxu0 0
        %1458 = vmatpush1.bf16.msra.mxu0 0
        %1459 = vmatprep.subr.bf16.mxu0 0
        %1460 = vmatpush1.bf16.msra.mxu0 0
        %1461 = vmatprep.mubr.bf16.mxu0 0
        %1462 = vmatmul.mubr.bf16.gmra.mrb[0].mxu0 %v1427
        %v1463 = vpop.f32.mrb[0].mxu0
        %v1464 = vadd.f32 0.0, %v1463
        %v1465 = vpop.f32.mrb[0].mxu0
        %v1466 = vpop.f32.mrb[0].mxu0
        %v1467 = vadd.f32 0.0, %v1466
        %v1468 = vpop.f32.mrb[0].mxu0
        %1469 = vdwg.mxu0
        %v1474 = vunpack.c.l.b16 %v1350
        %v1475 = vunpack.c.l.b16 %v1351
        %v1476 = vunpack.c.l.b16 %v1352
        %v1477 = vunpack.c.l.b16 %v1353
        %v1478 = vpack.c.b16 %v1475, %v1474
        %v1479 = vpack.c.b16 %v1477, %v1476
        %v1483 = vsel %vm861, %v1340, 0
        %1485 = vmatprep.subr.bf16.mxu0 0
        %1486 = vmatpush1.bf16.msra.mxu0 %v1478
        %1487 = vmatprep.subr.bf16.mxu0 0
        %1488 = vmatpush1.bf16.msra.mxu0 %v1479
        %1489 = vmatprep.subr.bf16.mxu0 0
        %1490 = vmatpush1.bf16.msra.mxu0 0
        %1491 = vmatprep.subr.bf16.mxu0 0
        %1492 = vmatpush1.bf16.msra.mxu0 0
        %1493 = vmatprep.subr.bf16.mxu0 0
        %1494 = vmatpush1.bf16.msra.mxu0 0
        %1495 = vmatprep.subr.bf16.mxu0 0
        %1496 = vmatpush1.bf16.msra.mxu0 0
        %1497 = vmatprep.subr.bf16.mxu0 0
        %1498 = vmatpush1.bf16.msra.mxu0 0
        %1499 = vmatprep.subr.bf16.mxu0 0
        %1500 = vmatpush1.bf16.msra.mxu0 0
        %1501 = vmatprep.subr.bf16.mxu0 0
        %1502 = vmatpush1.bf16.msra.mxu0 0
        %1503 = vmatprep.subr.bf16.mxu0 0
        %1504 = vmatpush1.bf16.msra.mxu0 0
        %1505 = vmatprep.subr.bf16.mxu0 0
        %1506 = vmatpush1.bf16.msra.mxu0 0
        %1507 = vmatprep.subr.bf16.mxu0 0
        %1508 = vmatpush1.bf16.msra.mxu0 0
        %1509 = vmatprep.subr.bf16.mxu0 0
        %1510 = vmatpush1.bf16.msra.mxu0 0
        %1511 = vmatprep.subr.bf16.mxu0 0
        %1512 = vmatpush1.bf16.msra.mxu0 0
        %1513 = vmatprep.subr.bf16.mxu0 0
        %1514 = vmatpush1.bf16.msra.mxu0 0
        %1515 = vmatprep.subr.bf16.mxu0 0
        %1516 = vmatpush1.bf16.msra.mxu0 0
        %1517 = vmatprep.mubr.bf16.mxu0 0
        %1518 = vmatmul.mubr.bf16.gmra.mrb[0].mxu0 %v1483
        %v1519 = vpop.f32.mrb[0].mxu0
        %v1520 = vadd.f32 0.0, %v1519
        %v1521 = vpop.f32.mrb[0].mxu0
        %v1522 = vpop.f32.mrb[0].mxu0
        %v1523 = vadd.f32 0.0, %v1522
        %v1524 = vpop.f32.mrb[0].mxu0
        %1525 = vdwg.mxu0
        %v1530 = vunpack.c.l.b16 %v1354
        %v1531 = vunpack.c.l.b16 %v1355
        %v1532 = vunpack.c.l.b16 %v1356
        %v1533 = vunpack.c.l.b16 %v1357
        %v1534 = vpack.c.b16 %v1531, %v1530
        %v1535 = vpack.c.b16 %v1533, %v1532
        %v1539 = vsel %vm861, %v1341, 0
        %1541 = vmatprep.subr.bf16.mxu0 0
        %1542 = vmatpush1.bf16.msra.mxu0 %v1534
        %1543 = vmatprep.subr.bf16.mxu0 0
        %1544 = vmatpush1.bf16.msra.mxu0 %v1535
        %1545 = vmatprep.subr.bf16.mxu0 0
        %1546 = vmatpush1.bf16.msra.mxu0 0
        %1547 = vmatprep.subr.bf16.mxu0 0
        %1548 = vmatpush1.bf16.msra.mxu0 0
        %1549 = vmatprep.subr.bf16.mxu0 0
        %1550 = vmatpush1.bf16.msra.mxu0 0
        %1551 = vmatprep.subr.bf16.mxu0 0
        %1552 = vmatpush1.bf16.msra.mxu0 0
        %1553 = vmatprep.subr.bf16.mxu0 0
        %1554 = vmatpush1.bf16.msra.mxu0 0
        %1555 = vmatprep.subr.bf16.mxu0 0
        %1556 = vmatpush1.bf16.msra.mxu0 0
        %1557 = vmatprep.subr.bf16.mxu0 0
        %1558 = vmatpush1.bf16.msra.mxu0 0
        %1559 = vmatprep.subr.bf16.mxu0 0
        %1560 = vmatpush1.bf16.msra.mxu0 0
        %1561 = vmatprep.subr.bf16.mxu0 0
        %1562 = vmatpush1.bf16.msra.mxu0 0
        %1563 = vmatprep.subr.bf16.mxu0 0
        %1564 = vmatpush1.bf16.msra.mxu0 0
        %1565 = vmatprep.subr.bf16.mxu0 0
        %1566 = vmatpush1.bf16.msra.mxu0 0
        %1567 = vmatprep.subr.bf16.mxu0 0
        %1568 = vmatpush1.bf16.msra.mxu0 0
        %1569 = vmatprep.subr.bf16.mxu0 0
        %1570 = vmatpush1.bf16.msra.mxu0 0
        %1571 = vmatprep.subr.bf16.mxu0 0
        %1572 = vmatpush1.bf16.msra.mxu0 0
        %1573 = vmatprep.mubr.bf16.mxu0 0
        %1574 = vmatmul.mubr.bf16.gmra.mrb[0].mxu0 %v1539
        %v1575 = vpop.f32.mrb[0].mxu0
        %v1576 = vadd.f32 0.0, %v1575
        %v1577 = vpop.f32.mrb[0].mxu0
        %v1578 = vpop.f32.mrb[0].mxu0
        %v1579 = vadd.f32 0.0, %v1578
        %v1580 = vpop.f32.mrb[0].mxu0
        %1581 = vdwg.mxu0
        %v1582 = vadd.f32 %v1408, %v1464
        %v1583 = vadd.f32 %v1582, %v1520
        %v1584 = vadd.f32 %v1583, %v1576
        %v1585 = vadd.f32 %v1411, %v1467
        %v1586 = vadd.f32 %v1585, %v1523
        %v1587 = vadd.f32 %v1586, %v1579
        %v1588 = vlaneseq
        %v1589 = vshrl.u32 %v1588, 7
        %v1590 = vsub.s32 0, %v1589
        %v1591 = vrot.slane %v436, %v1590
        %v1592 = vadd.f32 %v1584, %v1591
        %v1593 = vadd.f32 %v1587, %v1591
        %v1594 = vadd.f32 %v843, %v1592
        %v1595 = vadd.f32 %v844, %v1593
        %1596 = vadd.xlane.f32.xlu0 %v1594
        %v1597 = vpop.xlane.xlu0 %1596
        %1598 = vadd.xlane.f32.xlu0 %v1595
        %v1599 = vpop.xlane.xlu0 %1598
        %v1600 = vrcp.pop 128.0
        %v1601 = vmul.f32 %v1597, %v1600
        %v1602 = vmul.f32 %v1599, %v1600
        %v1603 = vsub.f32 %v1594, %v1601
        %v1604 = vsub.f32 %v1595, %v1602
        %v1605 = vmul.f32 %v1603, %v1603
        %v1606 = vmul.f32 %v1604, %v1604
        %1607 = vadd.xlane.f32.xlu0 %v1605
        %v1608 = vpop.xlane.xlu0 %1607
        %1609 = vadd.xlane.f32.xlu0 %v1606
        %v1610 = vpop.xlane.xlu0 %1609
        %v1611 = vmul.f32 %v1608, %v1600
        %v1612 = vmul.f32 %v1610, %v1600
        %v1613 = vadd.f32 %v1611, 1e-12
        %v1614 = vadd.f32 %v1612, 1e-12
        %v1615 = vrsqrt.pop %v1613
        %v1616 = vrsqrt.pop %v1614
        %v1617 = vmul.f32 %v1603, %v1615
        %v1618 = vmul.f32 %v1604, %v1616
        %v1619 = vlaneseq
        %v1620 = vshrl.u32 %v1619, 7
        %v1621 = vsub.s32 2, %v1620
        %v1622 = vrot.slane %v436, %v1621
        %v1623 = vmul.f32 %v1617, %v1622
        %v1624 = vmul.f32 %v1618, %v1622
        %v1625 = vlaneseq
        %v1626 = vshrl.u32 %v1625, 7
        %v1627 = vsub.s32 3, %v1626
        %v1628 = vrot.slane %v436, %v1627
        %v1629 = vadd.f32 %v1623, %v1628
        %v1630 = vadd.f32 %v1624, %v1628
        %v1631 = vpack.c.bf16 %v1630, %v1629
        %v1632 = vld [vmem:[#allocation13] sm:$0xff]
        %v1633 = vld [vmem:[#allocation13 + $0x8] sm:$0xff]
        %v1634 = vld [vmem:[#allocation13 + $0x10] sm:$0xff]
        %v1635 = vld [vmem:[#allocation13 + $0x18] sm:$0xff]
        %v1636 = vld [vmem:[#allocation13 + $0x20] sm:$0xff]
        %v1637 = vld [vmem:[#allocation13 + $0x28] sm:$0xff]
        %v1638 = vld [vmem:[#allocation13 + $0x30] sm:$0xff]
        %v1639 = vld [vmem:[#allocation13 + $0x38] sm:$0xff]
        %v1640 = vld [vmem:[#allocation13 + $0x40] sm:$0xff]
        %v1641 = vld [vmem:[#allocation13 + $0x48] sm:$0xff]
        %v1642 = vld [vmem:[#allocation13 + $0x50] sm:$0xff]
        %v1643 = vld [vmem:[#allocation13 + $0x58] sm:$0xff]
        %v1644 = vld [vmem:[#allocation13 + $0x60] sm:$0xff]
        %v1645 = vld [vmem:[#allocation13 + $0x68] sm:$0xff]
        %v1646 = vld [vmem:[#allocation13 + $0x70] sm:$0xff]
        %v1647 = vld [vmem:[#allocation13 + $0x78] sm:$0xff]
        %v1648 = vld [vmem:[#allocation14] sm:$0x3]
        %v1650 = vlaneseq
        %v1651 = vshrl.u32 %v1650, 7
        %v1652 = vsub.s32 0, %v1651
        %v1653 = vrot.slane %v1648, %v1652
        %v1654 = vlaneseq
        %v1655 = vshrl.u32 %v1654, 7
        %v1656 = vsub.s32 1, %v1655
        %v1657 = vrot.slane %v1648, %v1656
        %v1676 = vunpack.c.l.b16 %v1632
        %v1677 = vunpack.c.h.b16 %v1632
        %v1678 = vunpack.c.l.b16 %v1633
        %v1679 = vunpack.c.h.b16 %v1633
        %v1680 = vunpack.c.l.b16 %v1634
        %v1681 = vunpack.c.h.b16 %v1634
        %v1682 = vunpack.c.l.b16 %v1635
        %v1683 = vunpack.c.h.b16 %v1635
        %v1684 = vunpack.c.l.b16 %v1636
        %v1685 = vunpack.c.h.b16 %v1636
        %v1686 = vunpack.c.l.b16 %v1637
        %v1687 = vunpack.c.h.b16 %v1637
        %v1688 = vunpack.c.l.b16 %v1638
        %v1689 = vunpack.c.h.b16 %v1638
        %v1690 = vunpack.c.l.b16 %v1639
        %v1691 = vunpack.c.h.b16 %v1639
        %v1692 = vunpack.c.l.b16 %v1640
        %v1693 = vunpack.c.h.b16 %v1640
        %v1694 = vunpack.c.l.b16 %v1641
        %v1695 = vunpack.c.h.b16 %v1641
        %v1696 = vunpack.c.l.b16 %v1642
        %v1697 = vunpack.c.h.b16 %v1642
        %v1698 = vunpack.c.l.b16 %v1643
        %v1699 = vunpack.c.h.b16 %v1643
        %v1700 = vunpack.c.l.b16 %v1644
        %v1701 = vunpack.c.h.b16 %v1644
        %v1702 = vunpack.c.l.b16 %v1645
        %v1703 = vunpack.c.h.b16 %v1645
        %v1704 = vunpack.c.l.b16 %v1646
        %v1705 = vunpack.c.h.b16 %v1646
        %v1706 = vunpack.c.l.b16 %v1647
        %v1707 = vunpack.c.h.b16 %v1647
        %v1708 = vpack.c.b16 %v1678, %v1676
        %v1709 = vpack.c.b16 %v1679, %v1677
        %v1710 = vpack.c.b16 %v1682, %v1680
        %v1711 = vpack.c.b16 %v1683, %v1681
        %v1712 = vpack.c.b16 %v1686, %v1684
        %v1713 = vpack.c.b16 %v1687, %v1685
        %v1714 = vpack.c.b16 %v1690, %v1688
        %v1715 = vpack.c.b16 %v1691, %v1689
        %v1716 = vpack.c.b16 %v1694, %v1692
        %v1717 = vpack.c.b16 %v1695, %v1693
        %v1718 = vpack.c.b16 %v1698, %v1696
        %v1719 = vpack.c.b16 %v1699, %v1697
        %v1720 = vpack.c.b16 %v1702, %v1700
        %v1721 = vpack.c.b16 %v1703, %v1701
        %v1722 = vpack.c.b16 %v1706, %v1704
        %v1723 = vpack.c.b16 %v1707, %v1705
        %1740 = vmatprep.subr.bf16.mxu0 %v1709
        %1741 = vmatpush1.bf16.msra.mxu0 %v1708
        %1742 = vmatprep.subr.bf16.mxu0 %v1711
        %1743 = vmatpush1.bf16.msra.mxu0 %v1710
        %1744 = vmatprep.subr.bf16.mxu0 %v1713
        %1745 = vmatpush1.bf16.msra.mxu0 %v1712
        %1746 = vmatprep.subr.bf16.mxu0 %v1715
        %1747 = vmatpush1.bf16.msra.mxu0 %v1714
        %1748 = vmatprep.subr.bf16.mxu0 %v1717
        %1749 = vmatpush1.bf16.msra.mxu0 %v1716
        %1750 = vmatprep.subr.bf16.mxu0 %v1719
        %1751 = vmatpush1.bf16.msra.mxu0 %v1718
        %1752 = vmatprep.subr.bf16.mxu0 %v1721
        %1753 = vmatpush1.bf16.msra.mxu0 %v1720
        %1754 = vmatprep.subr.bf16.mxu0 %v1723
        %1755 = vmatpush1.bf16.msra.mxu0 %v1722
        %1756 = vmatprep.subr.bf16.mxu0 0
        %1757 = vmatpush1.bf16.msra.mxu0 0
        %1758 = vmatprep.subr.bf16.mxu0 0
        %1759 = vmatpush1.bf16.msra.mxu0 0
        %1760 = vmatprep.subr.bf16.mxu0 0
        %1761 = vmatpush1.bf16.msra.mxu0 0
        %1762 = vmatprep.subr.bf16.mxu0 0
        %1763 = vmatpush1.bf16.msra.mxu0 0
        %1764 = vmatprep.subr.bf16.mxu0 0
        %1765 = vmatpush1.bf16.msra.mxu0 0
        %1766 = vmatprep.subr.bf16.mxu0 0
        %1767 = vmatpush1.bf16.msra.mxu0 0
        %1768 = vmatprep.subr.bf16.mxu0 0
        %1769 = vmatpush1.bf16.msra.mxu0 0
        %1770 = vmatprep.subr.bf16.mxu0 0
        %1771 = vmatpush1.bf16.msra.mxu0 0
        %1772 = vmatprep.mubr.bf16.mxu0 0
        %1773 = vmatmul.mubr.bf16.gmra.mrb[0].mxu0 %v1631
        %v1774 = vpop.f32.mrb[0].mxu0
        %v1775 = vadd.f32 %v1653, %v1774
        %v1776 = vpop.f32.mrb[0].mxu0
        %v1777 = vadd.f32 %v1657, %v1776
        %v1778 = vpop.f32.mrb[0].mxu0
        %v1779 = vadd.f32 %v1653, %v1778
        %v1780 = vpop.f32.mrb[0].mxu0
        %v1781 = vadd.f32 %v1657, %v1780
        %1782 = vdwg.mxu0
        %v1783 = vmul.f32 %v1775, 0.5
        %v1784 = vmul.f32 %v1777, 0.5
        %v1785 = vmul.f32 %v1779, 0.5
        %v1786 = vmul.f32 %v1781, 0.5
        %v1787 = vmul.f32 %v1775, 0.70710677
        %v1788 = vmul.f32 %v1777, 0.70710677
        %v1789 = vmul.f32 %v1779, 0.70710677
        %v1790 = vmul.f32 %v1781, 0.70710677
        %v1791 = vand.u32 2147483647, %v1787
        %v1792 = vand.u32 2147483647, %v1788
        %v1793 = vand.u32 2147483647, %v1789
        %v1794 = vand.u32 2147483647, %v1790
        %v1795 = vmul.f32 %v1791, 0.3275911
        %v1796 = vmul.f32 %v1792, 0.3275911
        %v1797 = vmul.f32 %v1793, 0.3275911
        %v1798 = vmul.f32 %v1794, 0.3275911
        %v1799 = vadd.f32 %v1795, 1.0
        %v1800 = vadd.f32 %v1796, 1.0
        %v1801 = vadd.f32 %v1797, 1.0
        %v1802 = vadd.f32 %v1798, 1.0
        %v1803 = vrcp.pop %v1799
        %v1804 = vmul.f32 1.0, %v1803
        %v1805 = vrcp.pop %v1800
        %v1806 = vmul.f32 1.0, %v1805
        %v1807 = vrcp.pop %v1801
        %v1808 = vmul.f32 1.0, %v1807
        %v1809 = vrcp.pop %v1802
        %v1810 = vmul.f32 1.0, %v1809
        %v1811 = vmul.f32 %v1804, 1.0614054
        %v1812 = vmul.f32 %v1806, 1.0614054
        %v1813 = vmul.f32 %v1808, 1.0614054
        %v1814 = vmul.f32 %v1810, 1.0614054
        %v1815 = vadd.f32 %v1811, -1.4531521
        %v1816 = vadd.f32 %v1812, -1.4531521
        %v1817 = vadd.f32 %v1813, -1.4531521
        %v1818 = vadd.f32 %v1814, -1.4531521
        %v1819 = vmul.f32 %v1815, %v1804
        %v1820 = vmul.f32 %v1816, %v1806
        %v1821 = vmul.f32 %v1817, %v1808
        %v1822 = vmul.f32 %v1818, %v1810
        %v1823 = vadd.f32 %v1819, 1.4214138
        %v1824 = vadd.f32 %v1820, 1.4214138
        %v1825 = vadd.f32 %v1821, 1.4214138
        %v1826 = vadd.f32 %v1822, 1.4214138
        %v1827 = vmul.f32 %v1823, %v1804
        %v1828 = vmul.f32 %v1824, %v1806
        %v1829 = vmul.f32 %v1825, %v1808
        %v1830 = vmul.f32 %v1826, %v1810
        %v1831 = vadd.f32 %v1827, -0.28449672
        %v1832 = vadd.f32 %v1828, -0.28449672
        %v1833 = vadd.f32 %v1829, -0.28449672
        %v1834 = vadd.f32 %v1830, -0.28449672
        %v1835 = vmul.f32 %v1831, %v1804
        %v1836 = vmul.f32 %v1832, %v1806
        %v1837 = vmul.f32 %v1833, %v1808
        %v1838 = vmul.f32 %v1834, %v1810
        %v1839 = vadd.f32 %v1835, 0.2548296
        %v1840 = vadd.f32 %v1836, 0.2548296
        %v1841 = vadd.f32 %v1837, 0.2548296
        %v1842 = vadd.f32 %v1838, 0.2548296
        %v1843 = vmul.f32 %v1839, %v1804
        %v1844 = vmul.f32 %v1840, %v1806
        %v1845 = vmul.f32 %v1841, %v1808
        %v1846 = vmul.f32 %v1842, %v1810
        %v1847 = vsub.f32 0.0, %v1791
        %v1848 = vsub.f32 0.0, %v1792
        %v1849 = vsub.f32 0.0, %v1793
        %v1850 = vsub.f32 0.0, %v1794
        %v1851 = vmul.f32 %v1847, %v1791
        %v1852 = vmul.f32 %v1848, %v1792
        %v1853 = vmul.f32 %v1849, %v1793
        %v1854 = vmul.f32 %v1850, %v1794
        %v1855 = vmul.f32 %v1851, 1.442695
        %v1856 = vpow.pop %v1855
        %v1857 = vmul.f32 %v1852, 1.442695
        %v1858 = vpow.pop %v1857
        %v1859 = vmul.f32 %v1853, 1.442695
        %v1860 = vpow.pop %v1859
        %v1861 = vmul.f32 %v1854, 1.442695
        %v1862 = vpow.pop %v1861
        %v1863 = vmul.f32 %v1843, %v1856
        %v1864 = vmul.f32 %v1844, %v1858
        %v1865 = vmul.f32 %v1845, %v1860
        %v1866 = vmul.f32 %v1846, %v1862
        %v1867 = vsub.f32 1.0, %v1863
        %v1868 = vsub.f32 1.0, %v1864
        %v1869 = vsub.f32 1.0, %v1865
        %v1870 = vsub.f32 1.0, %v1866
        %vm1871 = vcmp.ge.f32.partialorder %v1787, 0.0
        %vm1872 = vcmp.ge.f32.partialorder %v1788, 0.0
        %vm1873 = vcmp.ge.f32.partialorder %v1789, 0.0
        %vm1874 = vcmp.ge.f32.partialorder %v1790, 0.0
        %v1875 = vsub.f32 0.0, %v1867
        %v1876 = vsub.f32 0.0, %v1868
        %v1877 = vsub.f32 0.0, %v1869
        %v1878 = vsub.f32 0.0, %v1870
        %v1879 = vsel %vm1871, %v1867, %v1875
        %v1880 = vsel %vm1872, %v1868, %v1876
        %v1881 = vsel %vm1873, %v1869, %v1877
        %v1882 = vsel %vm1874, %v1870, %v1878
        %v1883 = vadd.f32 %v1879, 1.0
        %v1884 = vadd.f32 %v1880, 1.0
        %v1885 = vadd.f32 %v1881, 1.0
        %v1886 = vadd.f32 %v1882, 1.0
        %v1887 = vmul.f32 %v1783, %v1883
        %v1888 = vmul.f32 %v1784, %v1884
        %v1889 = vmul.f32 %v1785, %v1885
        %v1890 = vmul.f32 %v1786, %v1886
        %v1891 = vpack.c.bf16 %v1889, %v1887
        %v1892 = vpack.c.bf16 %v1890, %v1888
        %v1893 = vld [vmem:[#allocation16] sm:$0xf]
        %v1894 = vld [vmem:[#allocation16 + $0x4] sm:$0xf]
        %v1895 = vld [vmem:[#allocation16 + $0x8] sm:$0xf]
        %v1896 = vld [vmem:[#allocation16 + $0xc] sm:$0xf]
        %v1897 = vld [vmem:[#allocation16 + $0x10] sm:$0xf]
        %v1898 = vld [vmem:[#allocation16 + $0x14] sm:$0xf]
        %v1899 = vld [vmem:[#allocation16 + $0x18] sm:$0xf]
        %v1900 = vld [vmem:[#allocation16 + $0x1c] sm:$0xf]
        %v1901 = vld [vmem:[#allocation16 + $0x20] sm:$0xf]
        %v1902 = vld [vmem:[#allocation16 + $0x24] sm:$0xf]
        %v1903 = vld [vmem:[#allocation16 + $0x28] sm:$0xf]
        %v1904 = vld [vmem:[#allocation16 + $0x2c] sm:$0xf]
        %v1905 = vld [vmem:[#allocation16 + $0x30] sm:$0xf]
        %v1906 = vld [vmem:[#allocation16 + $0x34] sm:$0xf]
        %v1907 = vld [vmem:[#allocation16 + $0x38] sm:$0xf]
        %v1908 = vld [vmem:[#allocation16 + $0x3c] sm:$0xf]
        %v1909 = vld [vmem:[#allocation16 + $0x40] sm:$0xf]
        %v1910 = vld [vmem:[#allocation16 + $0x44] sm:$0xf]
        %v1911 = vld [vmem:[#allocation16 + $0x48] sm:$0xf]
        %v1912 = vld [vmem:[#allocation16 + $0x4c] sm:$0xf]
        %v1913 = vld [vmem:[#allocation16 + $0x50] sm:$0xf]
        %v1914 = vld [vmem:[#allocation16 + $0x54] sm:$0xf]
        %v1915 = vld [vmem:[#allocation16 + $0x58] sm:$0xf]
        %v1916 = vld [vmem:[#allocation16 + $0x5c] sm:$0xf]
        %v1917 = vld [vmem:[#allocation16 + $0x60] sm:$0xf]
        %v1918 = vld [vmem:[#allocation16 + $0x64] sm:$0xf]
        %v1919 = vld [vmem:[#allocation16 + $0x68] sm:$0xf]
        %v1920 = vld [vmem:[#allocation16 + $0x6c] sm:$0xf]
        %v1921 = vld [vmem:[#allocation16 + $0x70] sm:$0xf]
        %v1922 = vld [vmem:[#allocation16 + $0x74] sm:$0xf]
        %v1923 = vld [vmem:[#allocation16 + $0x78] sm:$0xf]
        %v1924 = vld [vmem:[#allocation16 + $0x7c] sm:$0xf]
        %v1925 = vlaneseq
        %v1926 = vshrl.u32 %v1925, 7
        %v1927 = vsub.s32 1, %v1926
        %v1928 = vrot.slane %v436, %v1927
        %v1961 = vunpack.c.l.b16 %v1893
        %v1962 = vunpack.c.l.b16 %v1894
        %v1963 = vunpack.c.l.b16 %v1895
        %v1964 = vunpack.c.l.b16 %v1896
        %v1965 = vunpack.c.l.b16 %v1897
        %v1966 = vunpack.c.l.b16 %v1898
        %v1967 = vunpack.c.l.b16 %v1899
        %v1968 = vunpack.c.l.b16 %v1900
        %v1969 = vunpack.c.l.b16 %v1901
        %v1970 = vunpack.c.l.b16 %v1902
        %v1971 = vunpack.c.l.b16 %v1903
        %v1972 = vunpack.c.l.b16 %v1904
        %v1973 = vunpack.c.l.b16 %v1905
        %v1974 = vunpack.c.l.b16 %v1906
        %v1975 = vunpack.c.l.b16 %v1907
        %v1976 = vunpack.c.l.b16 %v1908
        %v1977 = vunpack.c.l.b16 %v1909
        %v1978 = vunpack.c.l.b16 %v1910
        %v1979 = vunpack.c.l.b16 %v1911
        %v1980 = vunpack.c.l.b16 %v1912
        %v1981 = vunpack.c.l.b16 %v1913
        %v1982 = vunpack.c.l.b16 %v1914
        %v1983 = vunpack.c.l.b16 %v1915
        %v1984 = vunpack.c.l.b16 %v1916
        %v1985 = vunpack.c.l.b16 %v1917
        %v1986 = vunpack.c.l.b16 %v1918
        %v1987 = vunpack.c.l.b16 %v1919
        %v1988 = vunpack.c.l.b16 %v1920
        %v1989 = vunpack.c.l.b16 %v1921
        %v1990 = vunpack.c.l.b16 %v1922
        %v1991 = vunpack.c.l.b16 %v1923
        %v1992 = vunpack.c.l.b16 %v1924
        %v1993 = vpack.c.b16 %v1962, %v1961
        %v1994 = vpack.c.b16 %v1964, %v1963
        %v1995 = vpack.c.b16 %v1966, %v1965
        %v1996 = vpack.c.b16 %v1968, %v1967
        %v1997 = vpack.c.b16 %v1970, %v1969
        %v1998 = vpack.c.b16 %v1972, %v1971
        %v1999 = vpack.c.b16 %v1974, %v1973
        %v2000 = vpack.c.b16 %v1976, %v1975
        %v2001 = vpack.c.b16 %v1978, %v1977
        %v2002 = vpack.c.b16 %v1980, %v1979
        %v2003 = vpack.c.b16 %v1982, %v1981
        %v2004 = vpack.c.b16 %v1984, %v1983
        %v2005 = vpack.c.b16 %v1986, %v1985
        %v2006 = vpack.c.b16 %v1988, %v1987
        %v2007 = vpack.c.b16 %v1990, %v1989
        %v2008 = vpack.c.b16 %v1992, %v1991
        %2025 = vmatprep.subr.bf16.mxu0 0
        %2026 = vmatpush1.bf16.msra.mxu0 %v1993
        %2027 = vmatprep.subr.bf16.mxu0 0
        %2028 = vmatpush1.bf16.msra.mxu0 %v1994
        %2029 = vmatprep.subr.bf16.mxu0 0
        %2030 = vmatpush1.bf16.msra.mxu0 %v1995
        %2031 = vmatprep.subr.bf16.mxu0 0
        %2032 = vmatpush1.bf16.msra.mxu0 %v1996
        %2033 = vmatprep.subr.bf16.mxu0 0
        %2034 = vmatpush1.bf16.msra.mxu0 %v1997
        %2035 = vmatprep.subr.bf16.mxu0 0
        %2036 = vmatpush1.bf16.msra.mxu0 %v1998
        %2037 = vmatprep.subr.bf16.mxu0 0
        %2038 = vmatpush1.bf16.msra.mxu0 %v1999
        %2039 = vmatprep.subr.bf16.mxu0 0
        %2040 = vmatpush1.bf16.msra.mxu0 %v2000
        %2041 = vmatprep.subr.bf16.mxu0 0
        %2042 = vmatpush1.bf16.msra.mxu0 %v2001
        %2043 = vmatprep.subr.bf16.mxu0 0
        %2044 = vmatpush1.bf16.msra.mxu0 %v2002
        %2045 = vmatprep.subr.bf16.mxu0 0
        %2046 = vmatpush1.bf16.msra.mxu0 %v2003
        %2047 = vmatprep.subr.bf16.mxu0 0
        %2048 = vmatpush1.bf16.msra.mxu0 %v2004
        %2049 = vmatprep.subr.bf16.mxu0 0
        %2050 = vmatpush1.bf16.msra.mxu0 %v2005
        %2051 = vmatprep.subr.bf16.mxu0 0
        %2052 = vmatpush1.bf16.msra.mxu0 %v2006
        %2053 = vmatprep.subr.bf16.mxu0 0
        %2054 = vmatpush1.bf16.msra.mxu0 %v2007
        %2055 = vmatprep.subr.bf16.mxu0 0
        %2056 = vmatpush1.bf16.msra.mxu0 %v2008
        %2057 = vmatprep.mubr.bf16.mxu0 %v1892
        %2058 = vmatmul.mubr.bf16.gmra.mrb[0].mxu0 %v1891
        %v2059 = vpop.f32.mrb[0].mxu0
        %v2060 = vadd.f32 %v1928, %v2059
        %v2061 = vpop.f32.mrb[0].mxu0
        %v2062 = vpop.f32.mrb[0].mxu0
        %v2063 = vadd.f32 %v1928, %v2062
        %v2064 = vpop.f32.mrb[0].mxu0
        %2065 = vdwg.mxu0
        %v2066 = vadd.f32 %v1629, %v2060
        %v2067 = vadd.f32 %v1630, %v2063
        %2068 = vadd.xlane.f32.xlu0 %v2066
        %v2069 = vpop.xlane.xlu0 %2068
        %2070 = vadd.xlane.f32.xlu0 %v2067
        %v2071 = vpop.xlane.xlu0 %2070
        %v2072 = vmul.f32 %v2069, %v1600
        %v2073 = vmul.f32 %v2071, %v1600
        %v2074 = vsub.f32 %v2066, %v2072
        %v2075 = vsub.f32 %v2067, %v2073
        %v2076 = vmul.f32 %v2074, %v2074
        %v2077 = vmul.f32 %v2075, %v2075
        %2078 = vadd.xlane.f32.xlu0 %v2076
        %v2079 = vpop.xlane.xlu0 %2078
        %2080 = vadd.xlane.f32.xlu0 %v2077
        %v2081 = vpop.xlane.xlu0 %2080
        %v2082 = vmul.f32 %v2079, %v1600
        %v2083 = vmul.f32 %v2081, %v1600
        %v2084 = vadd.f32 %v2082, 1e-12
        %v2085 = vadd.f32 %v2083, 1e-12
        %v2086 = vrsqrt.pop %v2084
        %v2087 = vrsqrt.pop %v2085
        %v2088 = vmul.f32 %v2074, %v2086
        %v2089 = vmul.f32 %v2075, %v2087
        %v2090 = vlaneseq
        %v2091 = vshrl.u32 %v2090, 7
        %v2092 = vsub.s32 4, %v2091
        %v2093 = vrot.slane %v436, %v2092
        %v2094 = vmul.f32 %v2088, %v2093
        %v2095 = vmul.f32 %v2089, %v2093
        %v2096 = vlaneseq
        %v2097 = vshrl.u32 %v2096, 7
        %v2098 = vsub.s32 5, %v2097
        %v2099 = vrot.slane %v436, %v2098
        %v2100 = vadd.f32 %v2094, %v2099
        %v2101 = vadd.f32 %v2095, %v2099
        %v2102 = vpack.c.bf16 %v2101, %v2100
        %v2104 = vunpack.c.l.b16 %v2102
        %v2105 = vunpack.c.h.b16 %v2102
        %v2106 = vpack.c.b16 %v2104, %v2104
        %v2107 = vpack.c.b16 %v2105, %v2105
        %2110 = vst [vmem:[%s433] sm:$0xf] %v2106
        %2111 = vst [vmem:[%s433 + $0x4] sm:$0xf] %v2107
        %s2112 = sand.u32 %s224, 1
        %s2113 = scalar_lea.sflag [#allocation7], %s2112
        %s2114 = sand.u32 %s224, 1
        %s2115 = smul.addr %s2114, 8
        %s2116 = scalar_lea.vmem [#allocation19], %s2115
        // Predicated region
        $region89: #{distilbert_mlm_forward.6} parent=51 // pred_check
          %p2117 = pneg %p234
        $region90: #{distilbert_mlm_forward.6} parent=51 // pred_check_branch
          %2119 = sbr.rel (%p2117) target = $region92
        $region91: #{distilbert_mlm_forward.6} parent=51 // pred_region
          %s2120 = smul.u32 2, %s34
          %s2122 = ssub.s32 128, 128
          %2123 = vsyncadd %s2113, %s2122
          %s2124 = smul.addr %s33, 4
          %s2125 = sadd.s32 %s2120, %s2124
          %s2126 = smul.addr %s2125, 64
          %s2127 = scalar_lea.hbm %s8, %s2126
          %s2128 = sshll.u32 %s2116, 4
          %s2129 = int_to_ptr.vmem [resolvable:$true] %s2128
          %2134 = dma.vmem_to_hbm [thread:$0]  %s2129, 128, %s2127, %s2113, 64, 64, 4
        $region92: #{distilbert_mlm_forward.6} parent=51 // pred_fallthru
          _
      $region52: #{distilbert_mlm_forward.6} parent=5 // pred_fallthru
        _
      %p2135 = scmp.le.s32.totalorder 2, %s24
      // Predicated region
      $region93: #{distilbert_mlm_forward.6} parent=5 // pred_check
        %p2136 = pneg %p2135
      $region94: #{distilbert_mlm_forward.6} parent=5 // pred_check_branch
        %2138 = sbr.rel (%p2136) target = $region96
      $region95: #{distilbert_mlm_forward.6} parent=5 // pred_region
        %s2139 = ssub.s32 %s24, 2
        // Predicated region
        $region97: #{distilbert_mlm_forward.6} parent=95 // pred_check
          %p2140 = pneg %p240
        $region98: #{distilbert_mlm_forward.6} parent=95 // pred_check_branch
          %2142 = sbr.rel (%p2140) target = $region100
        $region99: #{distilbert_mlm_forward.6} parent=95 // pred_region
          %s2143 = sand.u32 %s225, 1
          %s2144 = scalar_lea.sflag [#allocation7], %s2143
          %s2145 = sand.u32 %s225, 1
          %s2146 = smul.addr %s2145, 8
          %s2147 = scalar_lea.vmem [#allocation19], %s2146
          %2148 = dma.done %s2144, 128
        $region100: #{distilbert_mlm_forward.6} parent=95 // pred_fallthru
          _
      $region96: #{distilbert_mlm_forward.6} parent=5 // pred_fallthru
        _
    $region6: #{distilbert_mlm_forward.6} parent=1 // loop_footer
      %s28 = sadd.s32 1, %s24
    $region7: #{distilbert_mlm_forward.6} parent=1 // loop_footer_branch
      %23 = sbr.rel target = $region3
    $region8: #{distilbert_mlm_forward.6} parent=1 // loop_exit
      _
    %2149 = vsyncpa [#allocation6], 1
    %s2150 = scalar_lea.sflag [#allocation6], 1
    %2151 = vsyncpa %s2150, 1
    %2152 = vsyncpa [#allocation9], 1
    %2153 = vsyncpa [#allocation12], 1
    %2154 = vsyncpa [#allocation15], 1
    %2155 = vsyncpa [#allocation18], 1
    %2156 = vsyncpa [#allocation7], 1
    %s2157 = scalar_lea.sflag [#allocation7], 1
    %2158 = vsyncpa %s2157, 1

</llo_original>
